<compile_context>
chip_gen: v6e
topology: v6e:2x2x1
jax: 0.10.0
libtpu: 0.0.40
codegen_flags: <defaults>
</compile_context>

<pallas_src>
import functools

import jax
import jax.numpy as jnp
from jax.experimental import pallas as pl
from jax.experimental.pallas import tpu as pltpu

_HP = jax.lax.Precision.HIGHEST
_SUBLANE = 8


def rnn_kernel(xs_ref, wih_ref, whh_ref, b_ref, wout_ref, bout_ref, o_ref, *, T, B_pad):
    # xs_ref:  (T*B_pad, I)  batch pre-padded to the sublane width in the wrapper
    # wih_ref: (I, H)   = W_ih^T
    # whh_ref: (H, H)   = W_hh^T  (row k = W_hh[:, k])
    # b_ref:   (1, H)   fused b_ih + b_hh
    # wout_ref:(1, H)   head weight row
    # bout_ref:(1, 1)   head bias
    # o_ref:   (B, 1)   final output
    H = whh_ref.shape[0]
    B_out = o_ref.shape[0]

    # ---- Input projection for ALL time steps: one MXU matmul, off the serial chain.
    u = (
        jnp.dot(xs_ref[...], wih_ref[...],
                preferred_element_type=jnp.float32, precision=_HP)
        + b_ref[...]                                     # (T*B_pad, H)
    )

    whh_t = whh_ref[...]                                 # (H, H)

    # ---- t = 0: h starts at zeros (PyTorch RNNCell with h=None), so the W_hh
    # contraction is skipped entirely.
    h = jnp.tanh(u[0:B_pad, :])

    # ---- t = 1..T-1: recurrence contraction on the VPU in true f32:
    #   new_h = u_t + sum_k h[:, k] (x) W_hh^T[k, :]
    # Grouped partial sums keep both the f32-add dependence chain and the live-vreg
    # count short.  Every slice of u starts at a multiple of 8 sublanes (batch padded),
    # so the add is a plain vreg op.
    GROUP = 8
    for t in range(1, T):
        partials = []
        for g0 in range(0, H, GROUP):
            acc = h[:, g0:g0 + 1] * whh_t[g0:g0 + 1, :]
            for k in range(g0 + 1, g0 + GROUP):
                acc = acc + h[:, k:k + 1] * whh_t[k:k + 1, :]
            partials.append(acc)
        while len(partials) > 1:
            partials = [
                partials[i] + partials[i + 1] if i + 1 < len(partials) else partials[i]
                for i in range(0, len(partials), 2)
            ]
        h = jnp.tanh(u[t * B_pad:(t + 1) * B_pad, :] + partials[0])

    # ---- Linear head folded into the kernel tail (VPU mul + lane reduce, true f32).
    logits = jnp.sum(h * wout_ref[...], axis=-1, keepdims=True) + bout_ref[...]  # (B_pad, 1)
    o_ref[...] = logits[:B_out, :]


def prepare_params(w_ih, w_hh, b_ih, b_hh, w_out, b_out):
    """One-time layout plumbing (kept OUT of the per-call hot path).

    PyTorch layouts: w_ih (H, I), w_hh (H, H), b_ih/b_hh (H,), w_out (1, H), b_out (1,).
    """
    wih_t = jnp.asarray(w_ih, jnp.float32).T                         # (I, H)
    whh_t = jnp.asarray(w_hh, jnp.float32).T                         # (H, H)
    b = (jnp.asarray(b_ih, jnp.float32)
         + jnp.asarray(b_hh, jnp.float32)).reshape(1, -1)            # (1, H)
    wout = jnp.asarray(w_out, jnp.float32).reshape(1, -1)            # (1, H)
    bout = jnp.asarray(b_out, jnp.float32).reshape(1, 1)             # (1, 1)
    return wih_t, whh_t, b, wout, bout


@jax.jit
def rnn_forward_prepared(xs, wih_t, whh_t, b, wout, bout):
    """xs: (T, B, I); prepared params from prepare_params(). Returns (B, 1)."""
    T, B, I = xs.shape
    H = wih_t.shape[1]
    B_pad = ((B + _SUBLANE - 1) // _SUBLANE) * _SUBLANE

    # Pad the batch to the sublane width so per-step slices inside the kernel are
    # tile-aligned; padded rows are dropped at the final store.
    xs_f = jnp.asarray(xs, jnp.float32)
    xs_pad = jnp.zeros((T, B_pad, I), jnp.float32).at[:, :B, :].set(xs_f)
    xs_flat = xs_pad.reshape(T * B_pad, I)

    cost = pl.CostEstimate(
        flops=2 * T * B_pad * I * H + 2 * (T - 1) * B_pad * H * H + 2 * B_pad * H,
        transcendentals=T * B_pad * H,
        bytes_accessed=4 * (T * B_pad * I + I * H + H * H + 2 * H + 1 + B),
    )

    kernel = functools.partial(rnn_kernel, T=T, B_pad=B_pad)
    vmem = pltpu.MemorySpace.VMEM
    return pl.pallas_call(
        kernel,
        out_shape=jax.ShapeDtypeStruct((B, 1), jnp.float32),
        in_specs=[pl.BlockSpec(memory_space=vmem)] * 6,
        out_specs=pl.BlockSpec(memory_space=vmem),
        cost_estimate=cost,
    )(xs_flat, wih_t, whh_t, b, wout, bout)


def rnn_forward(xs, w_ih, w_hh, b_ih, b_hh, w_out, b_out):
    """Convenience wrapper matching the PyTorch Model.forward signature."""
    params = prepare_params(w_ih, w_hh, b_ih, b_hh, w_out, b_out)
    return rnn_forward_prepared(xs, *params)


def rnn_reference(xs, w_ih, w_hh, b_ih, b_hh, w_out, b_out):
    """Pure-JAX reference matching the PyTorch forward."""
    T, B, _ = xs.shape
    H = w_ih.shape[0]
    h = jnp.zeros((B, H), jnp.float32)
    for t in range(T):
        h = jnp.tanh(
            jnp.dot(xs[t], w_ih.T, precision=_HP) + b_ih
            + jnp.dot(h, w_hh.T, precision=_HP) + b_hh
        )
    return jnp.dot(h, w_out.T, precision=_HP) + b_out


if __name__ == "__main__":
    # Small shapes implied by the module: seq=8, batch=2, input=16, hidden=32
    T, B, I, H = 8, 2, 16, 32

    key = jax.random.PRNGKey(0)
    ks = jax.random.split(key, 7)
    bound = 1.0 / jnp.sqrt(H)
    xs = jax.random.normal(ks[0], (T, B, I), jnp.float32)
    w_ih = jax.random.uniform(ks[1], (H, I), jnp.float32, -bound, bound)
    w_hh = jax.random.uniform(ks[2], (H, H), jnp.float32, -bound, bound)
    b_ih = jax.random.uniform(ks[3], (H,), jnp.float32, -bound, bound)
    b_hh = jax.random.uniform(ks[4], (H,), jnp.float32, -bound, bound)
    w_out = jax.random.uniform(ks[5], (1, H), jnp.float32, -bound, bound)
    b_out = jax.random.uniform(ks[6], (1,), jnp.float32, -bound, bound)

    # One-time weight prep (off the hot path), then the jitted kernel call.
    params = prepare_params(w_ih, w_hh, b_ih, b_hh, w_out, b_out)
    out = rnn_forward_prepared(xs, *params)
    out = jax.block_until_ready(out)

    ref = rnn_reference(xs, w_ih, w_hh, b_ih, b_hh, w_out, b_out)
    assert out.shape == (B, 1), out.shape
    assert jnp.allclose(out, ref, atol=1e-5, rtol=1e-5), (out, ref)

    print("KERNEL_OK")
</pallas_src>

<mosaic_0001>
module attributes {stable_mosaic.version = 11 : i64} {
  func.func @rnn_kernel(%arg0: memref<64x16xf32, #tpu.memory_space<vmem>>, %arg1: memref<16x32xf32, #tpu.memory_space<vmem>>, %arg2: memref<32x32xf32, #tpu.memory_space<vmem>>, %arg3: memref<1x32xf32, #tpu.memory_space<vmem>>, %arg4: memref<1x32xf32, #tpu.memory_space<vmem>>, %arg5: memref<1x1xf32, #tpu.memory_space<vmem>>, %arg6: memref<2x1xf32, #tpu.memory_space<vmem>>) attributes {dimension_semantics = [], scalar_prefetch = 0 : i64, scratch_operands = 0 : i64, tpu.core_type = #tpu.core_type<tc>} {
    %c0 = arith.constant 0 : index
    %c0_0 = arith.constant 0 : index
    %0 = vector.load %arg0[%c0, %c0_0] : memref<64x16xf32, #tpu.memory_space<vmem>>, vector<64x16xf32>
    %c0_1 = arith.constant 0 : index
    %c0_2 = arith.constant 0 : index
    %1 = vector.load %arg1[%c0_1, %c0_2] : memref<16x32xf32, #tpu.memory_space<vmem>>, vector<16x32xf32>
    %cst = arith.constant dense<0.000000e+00> : vector<64x32xf32>
    %2 = tpu.matmul %0, %1, %cst {dimension_numbers = #tpu.dot_dimension_numbers<[1], [0], [0], [1], [0, 0, 1, 1], [], []>, precision = #tpu.contract_precision<fp32>} : vector<64x16xf32>, vector<16x32xf32>, vector<64x32xf32> -> vector<64x32xf32>
    %c0_3 = arith.constant 0 : index
    %c0_4 = arith.constant 0 : index
    %3 = vector.load %arg3[%c0_3, %c0_4] : memref<1x32xf32, #tpu.memory_space<vmem>>, vector<1x32xf32>
    %4 = vector.broadcast %3 : vector<1x32xf32> to vector<64x32xf32>
    %5 = arith.addf %2, %4 : vector<64x32xf32>
    %c0_5 = arith.constant 0 : index
    %c0_6 = arith.constant 0 : index
    %6 = vector.load %arg2[%c0_5, %c0_6] : memref<32x32xf32, #tpu.memory_space<vmem>>, vector<32x32xf32>
    %7 = vector.extract_strided_slice %5 {offsets = [0, 0], sizes = [8, 32], strides = [1, 1]} : vector<64x32xf32> to vector<8x32xf32>
    %8 = math.tanh %7 : vector<8x32xf32>
    %9 = vector.extract_strided_slice %8 {offsets = [0, 0], sizes = [8, 1], strides = [1, 1]} : vector<8x32xf32> to vector<8x1xf32>
    %10 = vector.extract_strided_slice %6 {offsets = [0, 0], sizes = [1, 32], strides = [1, 1]} : vector<32x32xf32> to vector<1x32xf32>
    %11 = vector.broadcast %9 : vector<8x1xf32> to vector<8x32xf32>
    %12 = vector.broadcast %10 : vector<1x32xf32> to vector<8x32xf32>
    %13 = arith.mulf %11, %12 : vector<8x32xf32>
    %14 = vector.extract_strided_slice %8 {offsets = [0, 1], sizes = [8, 1], strides = [1, 1]} : vector<8x32xf32> to vector<8x1xf32>
    %15 = vector.extract_strided_slice %6 {offsets = [1, 0], sizes = [1, 32], strides = [1, 1]} : vector<32x32xf32> to vector<1x32xf32>
    %16 = vector.broadcast %14 : vector<8x1xf32> to vector<8x32xf32>
    %17 = vector.broadcast %15 : vector<1x32xf32> to vector<8x32xf32>
    %18 = arith.mulf %16, %17 : vector<8x32xf32>
    %19 = arith.addf %13, %18 : vector<8x32xf32>
    %20 = vector.extract_strided_slice %8 {offsets = [0, 2], sizes = [8, 1], strides = [1, 1]} : vector<8x32xf32> to vector<8x1xf32>
    %21 = vector.extract_strided_slice %6 {offsets = [2, 0], sizes = [1, 32], strides = [1, 1]} : vector<32x32xf32> to vector<1x32xf32>
    %22 = vector.broadcast %20 : vector<8x1xf32> to vector<8x32xf32>
    %23 = vector.broadcast %21 : vector<1x32xf32> to vector<8x32xf32>
    %24 = arith.mulf %22, %23 : vector<8x32xf32>
    %25 = arith.addf %19, %24 : vector<8x32xf32>
    %26 = vector.extract_strided_slice %8 {offsets = [0, 3], sizes = [8, 1], strides = [1, 1]} : vector<8x32xf32> to vector<8x1xf32>
    %27 = vector.extract_strided_slice %6 {offsets = [3, 0], sizes = [1, 32], strides = [1, 1]} : vector<32x32xf32> to vector<1x32xf32>
    %28 = vector.broadcast %26 : vector<8x1xf32> to vector<8x32xf32>
    %29 = vector.broadcast %27 : vector<1x32xf32> to vector<8x32xf32>
    %30 = arith.mulf %28, %29 : vector<8x32xf32>
    %31 = arith.addf %25, %30 : vector<8x32xf32>
    %32 = vector.extract_strided_slice %8 {offsets = [0, 4], sizes = [8, 1], strides = [1, 1]} : vector<8x32xf32> to vector<8x1xf32>
    %33 = vector.extract_strided_slice %6 {offsets = [4, 0], sizes = [1, 32], strides = [1, 1]} : vector<32x32xf32> to vector<1x32xf32>
    %34 = vector.broadcast %32 : vector<8x1xf32> to vector<8x32xf32>
    %35 = vector.broadcast %33 : vector<1x32xf32> to vector<8x32xf32>
    %36 = arith.mulf %34, %35 : vector<8x32xf32>
    %37 = arith.addf %31, %36 : vector<8x32xf32>
    %38 = vector.extract_strided_slice %8 {offsets = [0, 5], sizes = [8, 1], strides = [1, 1]} : vector<8x32xf32> to vector<8x1xf32>
    %39 = vector.extract_strided_slice %6 {offsets = [5, 0], sizes = [1, 32], strides = [1, 1]} : vector<32x32xf32> to vector<1x32xf32>
    %40 = vector.broadcast %38 : vector<8x1xf32> to vector<8x32xf32>
    %41 = vector.broadcast %39 : vector<1x32xf32> to vector<8x32xf32>
    %42 = arith.mulf %40, %41 : vector<8x32xf32>
    %43 = arith.addf %37, %42 : vector<8x32xf32>
    %44 = vector.extract_strided_slice %8 {offsets = [0, 6], sizes = [8, 1], strides = [1, 1]} : vector<8x32xf32> to vector<8x1xf32>
    %45 = vector.extract_strided_slice %6 {offsets = [6, 0], sizes = [1, 32], strides = [1, 1]} : vector<32x32xf32> to vector<1x32xf32>
    %46 = vector.broadcast %44 : vector<8x1xf32> to vector<8x32xf32>
    %47 = vector.broadcast %45 : vector<1x32xf32> to vector<8x32xf32>
    %48 = arith.mulf %46, %47 : vector<8x32xf32>
    %49 = arith.addf %43, %48 : vector<8x32xf32>
    %50 = vector.extract_strided_slice %8 {offsets = [0, 7], sizes = [8, 1], strides = [1, 1]} : vector<8x32xf32> to vector<8x1xf32>
    %51 = vector.extract_strided_slice %6 {offsets = [7, 0], sizes = [1, 32], strides = [1, 1]} : vector<32x32xf32> to vector<1x32xf32>
    %52 = vector.broadcast %50 : vector<8x1xf32> to vector<8x32xf32>
    %53 = vector.broadcast %51 : vector<1x32xf32> to vector<8x32xf32>
    %54 = arith.mulf %52, %53 : vector<8x32xf32>
    %55 = arith.addf %49, %54 : vector<8x32xf32>
    %56 = vector.extract_strided_slice %8 {offsets = [0, 8], sizes = [8, 1], strides = [1, 1]} : vector<8x32xf32> to vector<8x1xf32>
    %57 = vector.extract_strided_slice %6 {offsets = [8, 0], sizes = [1, 32], strides = [1, 1]} : vector<32x32xf32> to vector<1x32xf32>
    %58 = vector.broadcast %56 : vector<8x1xf32> to vector<8x32xf32>
    %59 = vector.broadcast %57 : vector<1x32xf32> to vector<8x32xf32>
    %60 = arith.mulf %58, %59 : vector<8x32xf32>
    %61 = vector.extract_strided_slice %8 {offsets = [0, 9], sizes = [8, 1], strides = [1, 1]} : vector<8x32xf32> to vector<8x1xf32>
    %62 = vector.extract_strided_slice %6 {offsets = [9, 0], sizes = [1, 32], strides = [1, 1]} : vector<32x32xf32> to vector<1x32xf32>
    %63 = vector.broadcast %61 : vector<8x1xf32> to vector<8x32xf32>
    %64 = vector.broadcast %62 : vector<1x32xf32> to vector<8x32xf32>
    %65 = arith.mulf %63, %64 : vector<8x32xf32>
    %66 = arith.addf %60, %65 : vector<8x32xf32>
    %67 = vector.extract_strided_slice %8 {offsets = [0, 10], sizes = [8, 1], strides = [1, 1]} : vector<8x32xf32> to vector<8x1xf32>
    %68 = vector.extract_strided_slice %6 {offsets = [10, 0], sizes = [1, 32], strides = [1, 1]} : vector<32x32xf32> to vector<1x32xf32>
    %69 = vector.broadcast %67 : vector<8x1xf32> to vector<8x32xf32>
    %70 = vector.broadcast %68 : vector<1x32xf32> to vector<8x32xf32>
    %71 = arith.mulf %69, %70 : vector<8x32xf32>
    %72 = arith.addf %66, %71 : vector<8x32xf32>
    %73 = vector.extract_strided_slice %8 {offsets = [0, 11], sizes = [8, 1], strides = [1, 1]} : vector<8x32xf32> to vector<8x1xf32>
    %74 = vector.extract_strided_slice %6 {offsets = [11, 0], sizes = [1, 32], strides = [1, 1]} : vector<32x32xf32> to vector<1x32xf32>
    %75 = vector.broadcast %73 : vector<8x1xf32> to vector<8x32xf32>
    %76 = vector.broadcast %74 : vector<1x32xf32> to vector<8x32xf32>
    %77 = arith.mulf %75, %76 : vector<8x32xf32>
    %78 = arith.addf %72, %77 : vector<8x32xf32>
    %79 = vector.extract_strided_slice %8 {offsets = [0, 12], sizes = [8, 1], strides = [1, 1]} : vector<8x32xf32> to vector<8x1xf32>
    %80 = vector.extract_strided_slice %6 {offsets = [12, 0], sizes = [1, 32], strides = [1, 1]} : vector<32x32xf32> to vector<1x32xf32>
    %81 = vector.broadcast %79 : vector<8x1xf32> to vector<8x32xf32>
    %82 = vector.broadcast %80 : vector<1x32xf32> to vector<8x32xf32>
    %83 = arith.mulf %81, %82 : vector<8x32xf32>
    %84 = arith.addf %78, %83 : vector<8x32xf32>
    %85 = vector.extract_strided_slice %8 {offsets = [0, 13], sizes = [8, 1], strides = [1, 1]} : vector<8x32xf32> to vector<8x1xf32>
    %86 = vector.extract_strided_slice %6 {offsets = [13, 0], sizes = [1, 32], strides = [1, 1]} : vector<32x32xf32> to vector<1x32xf32>
    %87 = vector.broadcast %85 : vector<8x1xf32> to vector<8x32xf32>
    %88 = vector.broadcast %86 : vector<1x32xf32> to vector<8x32xf32>
    %89 = arith.mulf %87, %88 : vector<8x32xf32>
    %90 = arith.addf %84, %89 : vector<8x32xf32>
    %91 = vector.extract_strided_slice %8 {offsets = [0, 14], sizes = [8, 1], strides = [1, 1]} : vector<8x32xf32> to vector<8x1xf32>
    %92 = vector.extract_strided_slice %6 {offsets = [14, 0], sizes = [1, 32], strides = [1, 1]} : vector<32x32xf32> to vector<1x32xf32>
    %93 = vector.broadcast %91 : vector<8x1xf32> to vector<8x32xf32>
    %94 = vector.broadcast %92 : vector<1x32xf32> to vector<8x32xf32>
    %95 = arith.mulf %93, %94 : vector<8x32xf32>
    %96 = arith.addf %90, %95 : vector<8x32xf32>
    %97 = vector.extract_strided_slice %8 {offsets = [0, 15], sizes = [8, 1], strides = [1, 1]} : vector<8x32xf32> to vector<8x1xf32>
    %98 = vector.extract_strided_slice %6 {offsets = [15, 0], sizes = [1, 32], strides = [1, 1]} : vector<32x32xf32> to vector<1x32xf32>
    %99 = vector.broadcast %97 : vector<8x1xf32> to vector<8x32xf32>
    %100 = vector.broadcast %98 : vector<1x32xf32> to vector<8x32xf32>
    %101 = arith.mulf %99, %100 : vector<8x32xf32>
    %102 = arith.addf %96, %101 : vector<8x32xf32>
    %103 = vector.extract_strided_slice %8 {offsets = [0, 16], sizes = [8, 1], strides = [1, 1]} : vector<8x32xf32> to vector<8x1xf32>
    %104 = vector.extract_strided_slice %6 {offsets = [16, 0], sizes = [1, 32], strides = [1, 1]} : vector<32x32xf32> to vector<1x32xf32>
    %105 = vector.broadcast %103 : vector<8x1xf32> to vector<8x32xf32>
    %106 = vector.broadcast %104 : vector<1x32xf32> to vector<8x32xf32>
    %107 = arith.mulf %105, %106 : vector<8x32xf32>
    %108 = vector.extract_strided_slice %8 {offsets = [0, 17], sizes = [8, 1], strides = [1, 1]} : vector<8x32xf32> to vector<8x1xf32>
    %109 = vector.extract_strided_slice %6 {offsets = [17, 0], sizes = [1, 32], strides = [1, 1]} : vector<32x32xf32> to vector<1x32xf32>
    %110 = vector.broadcast %108 : vector<8x1xf32> to vector<8x32xf32>
    %111 = vector.broadcast %109 : vector<1x32xf32> to vector<8x32xf32>
    %112 = arith.mulf %110, %111 : vector<8x32xf32>
    %113 = arith.addf %107, %112 : vector<8x32xf32>
    %114 = vector.extract_strided_slice %8 {offsets = [0, 18], sizes = [8, 1], strides = [1, 1]} : vector<8x32xf32> to vector<8x1xf32>
    %115 = vector.extract_strided_slice %6 {offsets = [18, 0], sizes = [1, 32], strides = [1, 1]} : vector<32x32xf32> to vector<1x32xf32>
    %116 = vector.broadcast %114 : vector<8x1xf32> to vector<8x32xf32>
    %117 = vector.broadcast %115 : vector<1x32xf32> to vector<8x32xf32>
    %118 = arith.mulf %116, %117 : vector<8x32xf32>
    %119 = arith.addf %113, %118 : vector<8x32xf32>
    %120 = vector.extract_strided_slice %8 {offsets = [0, 19], sizes = [8, 1], strides = [1, 1]} : vector<8x32xf32> to vector<8x1xf32>
    %121 = vector.extract_strided_slice %6 {offsets = [19, 0], sizes = [1, 32], strides = [1, 1]} : vector<32x32xf32> to vector<1x32xf32>
    %122 = vector.broadcast %120 : vector<8x1xf32> to vector<8x32xf32>
    %123 = vector.broadcast %121 : vector<1x32xf32> to vector<8x32xf32>
    %124 = arith.mulf %122, %123 : vector<8x32xf32>
    %125 = arith.addf %119, %124 : vector<8x32xf32>
    %126 = vector.extract_strided_slice %8 {offsets = [0, 20], sizes = [8, 1], strides = [1, 1]} : vector<8x32xf32> to vector<8x1xf32>
    %127 = vector.extract_strided_slice %6 {offsets = [20, 0], sizes = [1, 32], strides = [1, 1]} : vector<32x32xf32> to vector<1x32xf32>
    %128 = vector.broadcast %126 : vector<8x1xf32> to vector<8x32xf32>
    %129 = vector.broadcast %127 : vector<1x32xf32> to vector<8x32xf32>
    %130 = arith.mulf %128, %129 : vector<8x32xf32>
    %131 = arith.addf %125, %130 : vector<8x32xf32>
    %132 = vector.extract_strided_slice %8 {offsets = [0, 21], sizes = [8, 1], strides = [1, 1]} : vector<8x32xf32> to vector<8x1xf32>
    %133 = vector.extract_strided_slice %6 {offsets = [21, 0], sizes = [1, 32], strides = [1, 1]} : vector<32x32xf32> to vector<1x32xf32>
    %134 = vector.broadcast %132 : vector<8x1xf32> to vector<8x32xf32>
    %135 = vector.broadcast %133 : vector<1x32xf32> to vector<8x32xf32>
    %136 = arith.mulf %134, %135 : vector<8x32xf32>
    %137 = arith.addf %131, %136 : vector<8x32xf32>
    %138 = vector.extract_strided_slice %8 {offsets = [0, 22], sizes = [8, 1], strides = [1, 1]} : vector<8x32xf32> to vector<8x1xf32>
    %139 = vector.extract_strided_slice %6 {offsets = [22, 0], sizes = [1, 32], strides = [1, 1]} : vector<32x32xf32> to vector<1x32xf32>
    %140 = vector.broadcast %138 : vector<8x1xf32> to vector<8x32xf32>
    %141 = vector.broadcast %139 : vector<1x32xf32> to vector<8x32xf32>
    %142 = arith.mulf %140, %141 : vector<8x32xf32>
    %143 = arith.addf %137, %142 : vector<8x32xf32>
    %144 = vector.extract_strided_slice %8 {offsets = [0, 23], sizes = [8, 1], strides = [1, 1]} : vector<8x32xf32> to vector<8x1xf32>
    %145 = vector.extract_strided_slice %6 {offsets = [23, 0], sizes = [1, 32], strides = [1, 1]} : vector<32x32xf32> to vector<1x32xf32>
    %146 = vector.broadcast %144 : vector<8x1xf32> to vector<8x32xf32>
    %147 = vector.broadcast %145 : vector<1x32xf32> to vector<8x32xf32>
    %148 = arith.mulf %146, %147 : vector<8x32xf32>
    %149 = arith.addf %143, %148 : vector<8x32xf32>
    %150 = vector.extract_strided_slice %8 {offsets = [0, 24], sizes = [8, 1], strides = [1, 1]} : vector<8x32xf32> to vector<8x1xf32>
    %151 = vector.extract_strided_slice %6 {offsets = [24, 0], sizes = [1, 32], strides = [1, 1]} : vector<32x32xf32> to vector<1x32xf32>
    %152 = vector.broadcast %150 : vector<8x1xf32> to vector<8x32xf32>
    %153 = vector.broadcast %151 : vector<1x32xf32> to vector<8x32xf32>
    %154 = arith.mulf %152, %153 : vector<8x32xf32>
    %155 = vector.extract_strided_slice %8 {offsets = [0, 25], sizes = [8, 1], strides = [1, 1]} : vector<8x32xf32> to vector<8x1xf32>
    %156 = vector.extract_strided_slice %6 {offsets = [25, 0], sizes = [1, 32], strides = [1, 1]} : vector<32x32xf32> to vector<1x32xf32>
    %157 = vector.broadcast %155 : vector<8x1xf32> to vector<8x32xf32>
    %158 = vector.broadcast %156 : vector<1x32xf32> to vector<8x32xf32>
    %159 = arith.mulf %157, %158 : vector<8x32xf32>
    %160 = arith.addf %154, %159 : vector<8x32xf32>
    %161 = vector.extract_strided_slice %8 {offsets = [0, 26], sizes = [8, 1], strides = [1, 1]} : vector<8x32xf32> to vector<8x1xf32>
    %162 = vector.extract_strided_slice %6 {offsets = [26, 0], sizes = [1, 32], strides = [1, 1]} : vector<32x32xf32> to vector<1x32xf32>
    %163 = vector.broadcast %161 : vector<8x1xf32> to vector<8x32xf32>
    %164 = vector.broadcast %162 : vector<1x32xf32> to vector<8x32xf32>
    %165 = arith.mulf %163, %164 : vector<8x32xf32>
    %166 = arith.addf %160, %165 : vector<8x32xf32>
    %167 = vector.extract_strided_slice %8 {offsets = [0, 27], sizes = [8, 1], strides = [1, 1]} : vector<8x32xf32> to vector<8x1xf32>
    %168 = vector.extract_strided_slice %6 {offsets = [27, 0], sizes = [1, 32], strides = [1, 1]} : vector<32x32xf32> to vector<1x32xf32>
    %169 = vector.broadcast %167 : vector<8x1xf32> to vector<8x32xf32>
    %170 = vector.broadcast %168 : vector<1x32xf32> to vector<8x32xf32>
    %171 = arith.mulf %169, %170 : vector<8x32xf32>
    %172 = arith.addf %166, %171 : vector<8x32xf32>
    %173 = vector.extract_strided_slice %8 {offsets = [0, 28], sizes = [8, 1], strides = [1, 1]} : vector<8x32xf32> to vector<8x1xf32>
    %174 = vector.extract_strided_slice %6 {offsets = [28, 0], sizes = [1, 32], strides = [1, 1]} : vector<32x32xf32> to vector<1x32xf32>
    %175 = vector.broadcast %173 : vector<8x1xf32> to vector<8x32xf32>
    %176 = vector.broadcast %174 : vector<1x32xf32> to vector<8x32xf32>
    %177 = arith.mulf %175, %176 : vector<8x32xf32>
    %178 = arith.addf %172, %177 : vector<8x32xf32>
    %179 = vector.extract_strided_slice %8 {offsets = [0, 29], sizes = [8, 1], strides = [1, 1]} : vector<8x32xf32> to vector<8x1xf32>
    %180 = vector.extract_strided_slice %6 {offsets = [29, 0], sizes = [1, 32], strides = [1, 1]} : vector<32x32xf32> to vector<1x32xf32>
    %181 = vector.broadcast %179 : vector<8x1xf32> to vector<8x32xf32>
    %182 = vector.broadcast %180 : vector<1x32xf32> to vector<8x32xf32>
    %183 = arith.mulf %181, %182 : vector<8x32xf32>
    %184 = arith.addf %178, %183 : vector<8x32xf32>
    %185 = vector.extract_strided_slice %8 {offsets = [0, 30], sizes = [8, 1], strides = [1, 1]} : vector<8x32xf32> to vector<8x1xf32>
    %186 = vector.extract_strided_slice %6 {offsets = [30, 0], sizes = [1, 32], strides = [1, 1]} : vector<32x32xf32> to vector<1x32xf32>
    %187 = vector.broadcast %185 : vector<8x1xf32> to vector<8x32xf32>
    %188 = vector.broadcast %186 : vector<1x32xf32> to vector<8x32xf32>
    %189 = arith.mulf %187, %188 : vector<8x32xf32>
    %190 = arith.addf %184, %189 : vector<8x32xf32>
    %191 = vector.extract_strided_slice %8 {offsets = [0, 31], sizes = [8, 1], strides = [1, 1]} : vector<8x32xf32> to vector<8x1xf32>
    %192 = vector.extract_strided_slice %6 {offsets = [31, 0], sizes = [1, 32], strides = [1, 1]} : vector<32x32xf32> to vector<1x32xf32>
    %193 = vector.broadcast %191 : vector<8x1xf32> to vector<8x32xf32>
    %194 = vector.broadcast %192 : vector<1x32xf32> to vector<8x32xf32>
    %195 = arith.mulf %193, %194 : vector<8x32xf32>
    %196 = arith.addf %190, %195 : vector<8x32xf32>
    %197 = arith.addf %55, %102 : vector<8x32xf32>
    %198 = arith.addf %149, %196 : vector<8x32xf32>
    %199 = arith.addf %197, %198 : vector<8x32xf32>
    %200 = vector.extract_strided_slice %5 {offsets = [8, 0], sizes = [8, 32], strides = [1, 1]} : vector<64x32xf32> to vector<8x32xf32>
    %201 = arith.addf %200, %199 : vector<8x32xf32>
    %202 = math.tanh %201 : vector<8x32xf32>
    %203 = vector.extract_strided_slice %202 {offsets = [0, 0], sizes = [8, 1], strides = [1, 1]} : vector<8x32xf32> to vector<8x1xf32>
    %204 = vector.extract_strided_slice %6 {offsets = [0, 0], sizes = [1, 32], strides = [1, 1]} : vector<32x32xf32> to vector<1x32xf32>
    %205 = vector.broadcast %203 : vector<8x1xf32> to vector<8x32xf32>
    %206 = vector.broadcast %204 : vector<1x32xf32> to vector<8x32xf32>
    %207 = arith.mulf %205, %206 : vector<8x32xf32>
    %208 = vector.extract_strided_slice %202 {offsets = [0, 1], sizes = [8, 1], strides = [1, 1]} : vector<8x32xf32> to vector<8x1xf32>
    %209 = vector.extract_strided_slice %6 {offsets = [1, 0], sizes = [1, 32], strides = [1, 1]} : vector<32x32xf32> to vector<1x32xf32>
    %210 = vector.broadcast %208 : vector<8x1xf32> to vector<8x32xf32>
    %211 = vector.broadcast %209 : vector<1x32xf32> to vector<8x32xf32>
    %212 = arith.mulf %210, %211 : vector<8x32xf32>
    %213 = arith.addf %207, %212 : vector<8x32xf32>
    %214 = vector.extract_strided_slice %202 {offsets = [0, 2], sizes = [8, 1], strides = [1, 1]} : vector<8x32xf32> to vector<8x1xf32>
    %215 = vector.extract_strided_slice %6 {offsets = [2, 0], sizes = [1, 32], strides = [1, 1]} : vector<32x32xf32> to vector<1x32xf32>
    %216 = vector.broadcast %214 : vector<8x1xf32> to vector<8x32xf32>
    %217 = vector.broadcast %215 : vector<1x32xf32> to vector<8x32xf32>
    %218 = arith.mulf %216, %217 : vector<8x32xf32>
    %219 = arith.addf %213, %218 : vector<8x32xf32>
    %220 = vector.extract_strided_slice %202 {offsets = [0, 3], sizes = [8, 1], strides = [1, 1]} : vector<8x32xf32> to vector<8x1xf32>
    %221 = vector.extract_strided_slice %6 {offsets = [3, 0], sizes = [1, 32], strides = [1, 1]} : vector<32x32xf32> to vector<1x32xf32>
    %222 = vector.broadcast %220 : vector<8x1xf32> to vector<8x32xf32>
    %223 = vector.broadcast %221 : vector<1x32xf32> to vector<8x32xf32>
    %224 = arith.mulf %222, %223 : vector<8x32xf32>
    %225 = arith.addf %219, %224 : vector<8x32xf32>
    %226 = vector.extract_strided_slice %202 {offsets = [0, 4], sizes = [8, 1], strides = [1, 1]} : vector<8x32xf32> to vector<8x1xf32>
    %227 = vector.extract_strided_slice %6 {offsets = [4, 0], sizes = [1, 32], strides = [1, 1]} : vector<32x32xf32> to vector<1x32xf32>
    %228 = vector.broadcast %226 : vector<8x1xf32> to vector<8x32xf32>
    %229 = vector.broadcast %227 : vector<1x32xf32> to vector<8x32xf32>
    %230 = arith.mulf %228, %229 : vector<8x32xf32>
    %231 = arith.addf %225, %230 : vector<8x32xf32>
    %232 = vector.extract_strided_slice %202 {offsets = [0, 5], sizes = [8, 1], strides = [1, 1]} : vector<8x32xf32> to vector<8x1xf32>
    %233 = vector.extract_strided_slice %6 {offsets = [5, 0], sizes = [1, 32], strides = [1, 1]} : vector<32x32xf32> to vector<1x32xf32>
    %234 = vector.broadcast %232 : vector<8x1xf32> to vector<8x32xf32>
    %235 = vector.broadcast %233 : vector<1x32xf32> to vector<8x32xf32>
    %236 = arith.mulf %234, %235 : vector<8x32xf32>
    %237 = arith.addf %231, %236 : vector<8x32xf32>
    %238 = vector.extract_strided_slice %202 {offsets = [0, 6], sizes = [8, 1], strides = [1, 1]} : vector<8x32xf32> to vector<8x1xf32>
    %239 = vector.extract_strided_slice %6 {offsets = [6, 0], sizes = [1, 32], strides = [1, 1]} : vector<32x32xf32> to vector<1x32xf32>
    %240 = vector.broadcast %238 : vector<8x1xf32> to vector<8x32xf32>
    %241 = vector.broadcast %239 : vector<1x32xf32> to vector<8x32xf32>
    %242 = arith.mulf %240, %241 : vector<8x32xf32>
    %243 = arith.addf %237, %242 : vector<8x32xf32>
    %244 = vector.extract_strided_slice %202 {offsets = [0, 7], sizes = [8, 1], strides = [1, 1]} : vector<8x32xf32> to vector<8x1xf32>
    %245 = vector.extract_strided_slice %6 {offsets = [7, 0], sizes = [1, 32], strides = [1, 1]} : vector<32x32xf32> to vector<1x32xf32>
    %246 = vector.broadcast %244 : vector<8x1xf32> to vector<8x32xf32>
    %247 = vector.broadcast %245 : vector<1x32xf32> to vector<8x32xf32>
    %248 = arith.mulf %246, %247 : vector<8x32xf32>
    %249 = arith.addf %243, %248 : vector<8x32xf32>
    %250 = vector.extract_strided_slice %202 {offsets = [0, 8], sizes = [8, 1], strides = [1, 1]} : vector<8x32xf32> to vector<8x1xf32>
    %251 = vector.extract_strided_slice %6 {offsets = [8, 0], sizes = [1, 32], strides = [1, 1]} : vector<32x32xf32> to vector<1x32xf32>
    %252 = vector.broadcast %250 : vector<8x1xf32> to vector<8x32xf32>
    %253 = vector.broadcast %251 : vector<1x32xf32> to vector<8x32xf32>
    %254 = arith.mulf %252, %253 : vector<8x32xf32>
    %255 = vector.extract_strided_slice %202 {offsets = [0, 9], sizes = [8, 1], strides = [1, 1]} : vector<8x32xf32> to vector<8x1xf32>
    %256 = vector.extract_strided_slice %6 {offsets = [9, 0], sizes = [1, 32], strides = [1, 1]} : vector<32x32xf32> to vector<1x32xf32>
    %257 = vector.broadcast %255 : vector<8x1xf32> to vector<8x32xf32>
    %258 = vector.broadcast %256 : vector<1x32xf32> to vector<8x32xf32>
    %259 = arith.mulf %257, %258 : vector<8x32xf32>
    %260 = arith.addf %254, %259 : vector<8x32xf32>
    %261 = vector.extract_strided_slice %202 {offsets = [0, 10], sizes = [8, 1], strides = [1, 1]} : vector<8x32xf32> to vector<8x1xf32>
    %262 = vector.extract_strided_slice %6 {offsets = [10, 0], sizes = [1, 32], strides = [1, 1]} : vector<32x32xf32> to vector<1x32xf32>
    %263 = vector.broadcast %261 : vector<8x1xf32> to vector<8x32xf32>
    %264 = vector.broadcast %262 : vector<1x32xf32> to vector<8x32xf32>
    %265 = arith.mulf %263, %264 : vector<8x32xf32>
    %266 = arith.addf %260, %265 : vector<8x32xf32>
    %267 = vector.extract_strided_slice %202 {offsets = [0, 11], sizes = [8, 1], strides = [1, 1]} : vector<8x32xf32> to vector<8x1xf32>
    %268 = vector.extract_strided_slice %6 {offsets = [11, 0], sizes = [1, 32], strides = [1, 1]} : vector<32x32xf32> to vector<1x32xf32>
    %269 = vector.broadcast %267 : vector<8x1xf32> to vector<8x32xf32>
    %270 = vector.broadcast %268 : vector<1x32xf32> to vector<8x32xf32>
    %271 = arith.mulf %269, %270 : vector<8x32xf32>
    %272 = arith.addf %266, %271 : vector<8x32xf32>
    %273 = vector.extract_strided_slice %202 {offsets = [0, 12], sizes = [8, 1], strides = [1, 1]} : vector<8x32xf32> to vector<8x1xf32>
    %274 = vector.extract_strided_slice %6 {offsets = [12, 0], sizes = [1, 32], strides = [1, 1]} : vector<32x32xf32> to vector<1x32xf32>
    %275 = vector.broadcast %273 : vector<8x1xf32> to vector<8x32xf32>
    %276 = vector.broadcast %274 : vector<1x32xf32> to vector<8x32xf32>
    %277 = arith.mulf %275, %276 : vector<8x32xf32>
    %278 = arith.addf %272, %277 : vector<8x32xf32>
    %279 = vector.extract_strided_slice %202 {offsets = [0, 13], sizes = [8, 1], strides = [1, 1]} : vector<8x32xf32> to vector<8x1xf32>
    %280 = vector.extract_strided_slice %6 {offsets = [13, 0], sizes = [1, 32], strides = [1, 1]} : vector<32x32xf32> to vector<1x32xf32>
    %281 = vector.broadcast %279 : vector<8x1xf32> to vector<8x32xf32>
    %282 = vector.broadcast %280 : vector<1x32xf32> to vector<8x32xf32>
    %283 = arith.mulf %281, %282 : vector<8x32xf32>
    %284 = arith.addf %278, %283 : vector<8x32xf32>
    %285 = vector.extract_strided_slice %202 {offsets = [0, 14], sizes = [8, 1], strides = [1, 1]} : vector<8x32xf32> to vector<8x1xf32>
    %286 = vector.extract_strided_slice %6 {offsets = [14, 0], sizes = [1, 32], strides = [1, 1]} : vector<32x32xf32> to vector<1x32xf32>
    %287 = vector.broadcast %285 : vector<8x1xf32> to vector<8x32xf32>
    %288 = vector.broadcast %286 : vector<1x32xf32> to vector<8x32xf32>
    %289 = arith.mulf %287, %288 : vector<8x32xf32>
    %290 = arith.addf %284, %289 : vector<8x32xf32>
    %291 = vector.extract_strided_slice %202 {offsets = [0, 15], sizes = [8, 1], strides = [1, 1]} : vector<8x32xf32> to vector<8x1xf32>
    %292 = vector.extract_strided_slice %6 {offsets = [15, 0], sizes = [1, 32], strides = [1, 1]} : vector<32x32xf32> to vector<1x32xf32>
    %293 = vector.broadcast %291 : vector<8x1xf32> to vector<8x32xf32>
    %294 = vector.broadcast %292 : vector<1x32xf32> to vector<8x32xf32>
    %295 = arith.mulf %293, %294 : vector<8x32xf32>
    %296 = arith.addf %290, %295 : vector<8x32xf32>
    %297 = vector.extract_strided_slice %202 {offsets = [0, 16], sizes = [8, 1], strides = [1, 1]} : vector<8x32xf32> to vector<8x1xf32>
    %298 = vector.extract_strided_slice %6 {offsets = [16, 0], sizes = [1, 32], strides = [1, 1]} : vector<32x32xf32> to vector<1x32xf32>
    %299 = vector.broadcast %297 : vector<8x1xf32> to vector<8x32xf32>
    %300 = vector.broadcast %298 : vector<1x32xf32> to vector<8x32xf32>
    %301 = arith.mulf %299, %300 : vector<8x32xf32>
    %302 = vector.extract_strided_slice %202 {offsets = [0, 17], sizes = [8, 1], strides = [1, 1]} : vector<8x32xf32> to vector<8x1xf32>
    %303 = vector.extract_strided_slice %6 {offsets = [17, 0], sizes = [1, 32], strides = [1, 1]} : vector<32x32xf32> to vector<1x32xf32>
    %304 = vector.broadcast %302 : vector<8x1xf32> to vector<8x32xf32>
    %305 = vector.broadcast %303 : vector<1x32xf32> to vector<8x32xf32>
    %306 = arith.mulf %304, %305 : vector<8x32xf32>
    %307 = arith.addf %301, %306 : vector<8x32xf32>
    %308 = vector.extract_strided_slice %202 {offsets = [0, 18], sizes = [8, 1], strides = [1, 1]} : vector<8x32xf32> to vector<8x1xf32>
    %309 = vector.extract_strided_slice %6 {offsets = [18, 0], sizes = [1, 32], strides = [1, 1]} : vector<32x32xf32> to vector<1x32xf32>
    %310 = vector.broadcast %308 : vector<8x1xf32> to vector<8x32xf32>
    %311 = vector.broadcast %309 : vector<1x32xf32> to vector<8x32xf32>
    %312 = arith.mulf %310, %311 : vector<8x32xf32>
    %313 = arith.addf %307, %312 : vector<8x32xf32>
    %314 = vector.extract_strided_slice %202 {offsets = [0, 19], sizes = [8, 1], strides = [1, 1]} : vector<8x32xf32> to vector<8x1xf32>
    %315 = vector.extract_strided_slice %6 {offsets = [19, 0], sizes = [1, 32], strides = [1, 1]} : vector<32x32xf32> to vector<1x32xf32>
    %316 = vector.broadcast %314 : vector<8x1xf32> to vector<8x32xf32>
    %317 = vector.broadcast %315 : vector<1x32xf32> to vector<8x32xf32>
    %318 = arith.mulf %316, %317 : vector<8x32xf32>
    %319 = arith.addf %313, %318 : vector<8x32xf32>
    %320 = vector.extract_strided_slice %202 {offsets = [0, 20], sizes = [8, 1], strides = [1, 1]} : vector<8x32xf32> to vector<8x1xf32>
    %321 = vector.extract_strided_slice %6 {offsets = [20, 0], sizes = [1, 32], strides = [1, 1]} : vector<32x32xf32> to vector<1x32xf32>
    %322 = vector.broadcast %320 : vector<8x1xf32> to vector<8x32xf32>
    %323 = vector.broadcast %321 : vector<1x32xf32> to vector<8x32xf32>
    %324 = arith.mulf %322, %323 : vector<8x32xf32>
    %325 = arith.addf %319, %324 : vector<8x32xf32>
    %326 = vector.extract_strided_slice %202 {offsets = [0, 21], sizes = [8, 1], strides = [1, 1]} : vector<8x32xf32> to vector<8x1xf32>
    %327 = vector.extract_strided_slice %6 {offsets = [21, 0], sizes = [1, 32], strides = [1, 1]} : vector<32x32xf32> to vector<1x32xf32>
    %328 = vector.broadcast %326 : vector<8x1xf32> to vector<8x32xf32>
    %329 = vector.broadcast %327 : vector<1x32xf32> to vector<8x32xf32>
    %330 = arith.mulf %328, %329 : vector<8x32xf32>
    %331 = arith.addf %325, %330 : vector<8x32xf32>
    %332 = vector.extract_strided_slice %202 {offsets = [0, 22], sizes = [8, 1], strides = [1, 1]} : vector<8x32xf32> to vector<8x1xf32>
    %333 = vector.extract_strided_slice %6 {offsets = [22, 0], sizes = [1, 32], strides = [1, 1]} : vector<32x32xf32> to vector<1x32xf32>
    %334 = vector.broadcast %332 : vector<8x1xf32> to vector<8x32xf32>
    %335 = vector.broadcast %333 : vector<1x32xf32> to vector<8x32xf32>
    %336 = arith.mulf %334, %335 : vector<8x32xf32>
    %337 = arith.addf %331, %336 : vector<8x32xf32>
    %338 = vector.extract_strided_slice %202 {offsets = [0, 23], sizes = [8, 1], strides = [1, 1]} : vector<8x32xf32> to vector<8x1xf32>
    %339 = vector.extract_strided_slice %6 {offsets = [23, 0], sizes = [1, 32], strides = [1, 1]} : vector<32x32xf32> to vector<1x32xf32>
    %340 = vector.broadcast %338 : vector<8x1xf32> to vector<8x32xf32>
    %341 = vector.broadcast %339 : vector<1x32xf32> to vector<8x32xf32>
    %342 = arith.mulf %340, %341 : vector<8x32xf32>
    %343 = arith.addf %337, %342 : vector<8x32xf32>
    %344 = vector.extract_strided_slice %202 {offsets = [0, 24], sizes = [8, 1], strides = [1, 1]} : vector<8x32xf32> to vector<8x1xf32>
    %345 = vector.extract_strided_slice %6 {offsets = [24, 0], sizes = [1, 32], strides = [1, 1]} : vector<32x32xf32> to vector<1x32xf32>
    %346 = vector.broadcast %344 : vector<8x1xf32> to vector<8x32xf32>
    %347 = vector.broadcast %345 : vector<1x32xf32> to vector<8x32xf32>
    %348 = arith.mulf %346, %347 : vector<8x32xf32>
    %349 = vector.extract_strided_slice %202 {offsets = [0, 25], sizes = [8, 1], strides = [1, 1]} : vector<8x32xf32> to vector<8x1xf32>
    %350 = vector.extract_strided_slice %6 {offsets = [25, 0], sizes = [1, 32], strides = [1, 1]} : vector<32x32xf32> to vector<1x32xf32>
    %351 = vector.broadcast %349 : vector<8x1xf32> to vector<8x32xf32>
    %352 = vector.broadcast %350 : vector<1x32xf32> to vector<8x32xf32>
    %353 = arith.mulf %351, %352 : vector<8x32xf32>
    %354 = arith.addf %348, %353 : vector<8x32xf32>
    %355 = vector.extract_strided_slice %202 {offsets = [0, 26], sizes = [8, 1], strides = [1, 1]} : vector<8x32xf32> to vector<8x1xf32>
    %356 = vector.extract_strided_slice %6 {offsets = [26, 0], sizes = [1, 32], strides = [1, 1]} : vector<32x32xf32> to vector<1x32xf32>
    %357 = vector.broadcast %355 : vector<8x1xf32> to vector<8x32xf32>
    %358 = vector.broadcast %356 : vector<1x32xf32> to vector<8x32xf32>
    %359 = arith.mulf %357, %358 : vector<8x32xf32>
    %360 = arith.addf %354, %359 : vector<8x32xf32>
    %361 = vector.extract_strided_slice %202 {offsets = [0, 27], sizes = [8, 1], strides = [1, 1]} : vector<8x32xf32> to vector<8x1xf32>
    %362 = vector.extract_strided_slice %6 {offsets = [27, 0], sizes = [1, 32], strides = [1, 1]} : vector<32x32xf32> to vector<1x32xf32>
    %363 = vector.broadcast %361 : vector<8x1xf32> to vector<8x32xf32>
    %364 = vector.broadcast %362 : vector<1x32xf32> to vector<8x32xf32>
    %365 = arith.mulf %363, %364 : vector<8x32xf32>
    %366 = arith.addf %360, %365 : vector<8x32xf32>
    %367 = vector.extract_strided_slice %202 {offsets = [0, 28], sizes = [8, 1], strides = [1, 1]} : vector<8x32xf32> to vector<8x1xf32>
    %368 = vector.extract_strided_slice %6 {offsets = [28, 0], sizes = [1, 32], strides = [1, 1]} : vector<32x32xf32> to vector<1x32xf32>
    %369 = vector.broadcast %367 : vector<8x1xf32> to vector<8x32xf32>
    %370 = vector.broadcast %368 : vector<1x32xf32> to vector<8x32xf32>
    %371 = arith.mulf %369, %370 : vector<8x32xf32>
    %372 = arith.addf %366, %371 : vector<8x32xf32>
    %373 = vector.extract_strided_slice %202 {offsets = [0, 29], sizes = [8, 1], strides = [1, 1]} : vector<8x32xf32> to vector<8x1xf32>
    %374 = vector.extract_strided_slice %6 {offsets = [29, 0], sizes = [1, 32], strides = [1, 1]} : vector<32x32xf32> to vector<1x32xf32>
    %375 = vector.broadcast %373 : vector<8x1xf32> to vector<8x32xf32>
    %376 = vector.broadcast %374 : vector<1x32xf32> to vector<8x32xf32>
    %377 = arith.mulf %375, %376 : vector<8x32xf32>
    %378 = arith.addf %372, %377 : vector<8x32xf32>
    %379 = vector.extract_strided_slice %202 {offsets = [0, 30], sizes = [8, 1], strides = [1, 1]} : vector<8x32xf32> to vector<8x1xf32>
    %380 = vector.extract_strided_slice %6 {offsets = [30, 0], sizes = [1, 32], strides = [1, 1]} : vector<32x32xf32> to vector<1x32xf32>
    %381 = vector.broadcast %379 : vector<8x1xf32> to vector<8x32xf32>
    %382 = vector.broadcast %380 : vector<1x32xf32> to vector<8x32xf32>
    %383 = arith.mulf %381, %382 : vector<8x32xf32>
    %384 = arith.addf %378, %383 : vector<8x32xf32>
    %385 = vector.extract_strided_slice %202 {offsets = [0, 31], sizes = [8, 1], strides = [1, 1]} : vector<8x32xf32> to vector<8x1xf32>
    %386 = vector.extract_strided_slice %6 {offsets = [31, 0], sizes = [1, 32], strides = [1, 1]} : vector<32x32xf32> to vector<1x32xf32>
    %387 = vector.broadcast %385 : vector<8x1xf32> to vector<8x32xf32>
    %388 = vector.broadcast %386 : vector<1x32xf32> to vector<8x32xf32>
    %389 = arith.mulf %387, %388 : vector<8x32xf32>
    %390 = arith.addf %384, %389 : vector<8x32xf32>
    %391 = arith.addf %249, %296 : vector<8x32xf32>
    %392 = arith.addf %343, %390 : vector<8x32xf32>
    %393 = arith.addf %391, %392 : vector<8x32xf32>
    %394 = vector.extract_strided_slice %5 {offsets = [16, 0], sizes = [8, 32], strides = [1, 1]} : vector<64x32xf32> to vector<8x32xf32>
    %395 = arith.addf %394, %393 : vector<8x32xf32>
    %396 = math.tanh %395 : vector<8x32xf32>
    %397 = vector.extract_strided_slice %396 {offsets = [0, 0], sizes = [8, 1], strides = [1, 1]} : vector<8x32xf32> to vector<8x1xf32>
    %398 = vector.extract_strided_slice %6 {offsets = [0, 0], sizes = [1, 32], strides = [1, 1]} : vector<32x32xf32> to vector<1x32xf32>
    %399 = vector.broadcast %397 : vector<8x1xf32> to vector<8x32xf32>
    %400 = vector.broadcast %398 : vector<1x32xf32> to vector<8x32xf32>
    %401 = arith.mulf %399, %400 : vector<8x32xf32>
    %402 = vector.extract_strided_slice %396 {offsets = [0, 1], sizes = [8, 1], strides = [1, 1]} : vector<8x32xf32> to vector<8x1xf32>
    %403 = vector.extract_strided_slice %6 {offsets = [1, 0], sizes = [1, 32], strides = [1, 1]} : vector<32x32xf32> to vector<1x32xf32>
    %404 = vector.broadcast %402 : vector<8x1xf32> to vector<8x32xf32>
    %405 = vector.broadcast %403 : vector<1x32xf32> to vector<8x32xf32>
    %406 = arith.mulf %404, %405 : vector<8x32xf32>
    %407 = arith.addf %401, %406 : vector<8x32xf32>
    %408 = vector.extract_strided_slice %396 {offsets = [0, 2], sizes = [8, 1], strides = [1, 1]} : vector<8x32xf32> to vector<8x1xf32>
    %409 = vector.extract_strided_slice %6 {offsets = [2, 0], sizes = [1, 32], strides = [1, 1]} : vector<32x32xf32> to vector<1x32xf32>
    %410 = vector.broadcast %408 : vector<8x1xf32> to vector<8x32xf32>
    %411 = vector.broadcast %409 : vector<1x32xf32> to vector<8x32xf32>
    %412 = arith.mulf %410, %411 : vector<8x32xf32>
    %413 = arith.addf %407, %412 : vector<8x32xf32>
    %414 = vector.extract_strided_slice %396 {offsets = [0, 3], sizes = [8, 1], strides = [1, 1]} : vector<8x32xf32> to vector<8x1xf32>
    %415 = vector.extract_strided_slice %6 {offsets = [3, 0], sizes = [1, 32], strides = [1, 1]} : vector<32x32xf32> to vector<1x32xf32>
    %416 = vector.broadcast %414 : vector<8x1xf32> to vector<8x32xf32>
    %417 = vector.broadcast %415 : vector<1x32xf32> to vector<8x32xf32>
    %418 = arith.mulf %416, %417 : vector<8x32xf32>
    %419 = arith.addf %413, %418 : vector<8x32xf32>
    %420 = vector.extract_strided_slice %396 {offsets = [0, 4], sizes = [8, 1], strides = [1, 1]} : vector<8x32xf32> to vector<8x1xf32>
    %421 = vector.extract_strided_slice %6 {offsets = [4, 0], sizes = [1, 32], strides = [1, 1]} : vector<32x32xf32> to vector<1x32xf32>
    %422 = vector.broadcast %420 : vector<8x1xf32> to vector<8x32xf32>
    %423 = vector.broadcast %421 : vector<1x32xf32> to vector<8x32xf32>
    %424 = arith.mulf %422, %423 : vector<8x32xf32>
    %425 = arith.addf %419, %424 : vector<8x32xf32>
    %426 = vector.extract_strided_slice %396 {offsets = [0, 5], sizes = [8, 1], strides = [1, 1]} : vector<8x32xf32> to vector<8x1xf32>
    %427 = vector.extract_strided_slice %6 {offsets = [5, 0], sizes = [1, 32], strides = [1, 1]} : vector<32x32xf32> to vector<1x32xf32>
    %428 = vector.broadcast %426 : vector<8x1xf32> to vector<8x32xf32>
    %429 = vector.broadcast %427 : vector<1x32xf32> to vector<8x32xf32>
    %430 = arith.mulf %428, %429 : vector<8x32xf32>
    %431 = arith.addf %425, %430 : vector<8x32xf32>
    %432 = vector.extract_strided_slice %396 {offsets = [0, 6], sizes = [8, 1], strides = [1, 1]} : vector<8x32xf32> to vector<8x1xf32>
    %433 = vector.extract_strided_slice %6 {offsets = [6, 0], sizes = [1, 32], strides = [1, 1]} : vector<32x32xf32> to vector<1x32xf32>
    %434 = vector.broadcast %432 : vector<8x1xf32> to vector<8x32xf32>
    %435 = vector.broadcast %433 : vector<1x32xf32> to vector<8x32xf32>
    %436 = arith.mulf %434, %435 : vector<8x32xf32>
    %437 = arith.addf %431, %436 : vector<8x32xf32>
    %438 = vector.extract_strided_slice %396 {offsets = [0, 7], sizes = [8, 1], strides = [1, 1]} : vector<8x32xf32> to vector<8x1xf32>
    %439 = vector.extract_strided_slice %6 {offsets = [7, 0], sizes = [1, 32], strides = [1, 1]} : vector<32x32xf32> to vector<1x32xf32>
    %440 = vector.broadcast %438 : vector<8x1xf32> to vector<8x32xf32>
    %441 = vector.broadcast %439 : vector<1x32xf32> to vector<8x32xf32>
    %442 = arith.mulf %440, %441 : vector<8x32xf32>
    %443 = arith.addf %437, %442 : vector<8x32xf32>
    %444 = vector.extract_strided_slice %396 {offsets = [0, 8], sizes = [8, 1], strides = [1, 1]} : vector<8x32xf32> to vector<8x1xf32>
    %445 = vector.extract_strided_slice %6 {offsets = [8, 0], sizes = [1, 32], strides = [1, 1]} : vector<32x32xf32> to vector<1x32xf32>
    %446 = vector.broadcast %444 : vector<8x1xf32> to vector<8x32xf32>
    %447 = vector.broadcast %445 : vector<1x32xf32> to vector<8x32xf32>
    %448 = arith.mulf %446, %447 : vector<8x32xf32>
    %449 = vector.extract_strided_slice %396 {offsets = [0, 9], sizes = [8, 1], strides = [1, 1]} : vector<8x32xf32> to vector<8x1xf32>
    %450 = vector.extract_strided_slice %6 {offsets = [9, 0], sizes = [1, 32], strides = [1, 1]} : vector<32x32xf32> to vector<1x32xf32>
    %451 = vector.broadcast %449 : vector<8x1xf32> to vector<8x32xf32>
    %452 = vector.broadcast %450 : vector<1x32xf32> to vector<8x32xf32>
    %453 = arith.mulf %451, %452 : vector<8x32xf32>
    %454 = arith.addf %448, %453 : vector<8x32xf32>
    %455 = vector.extract_strided_slice %396 {offsets = [0, 10], sizes = [8, 1], strides = [1, 1]} : vector<8x32xf32> to vector<8x1xf32>
    %456 = vector.extract_strided_slice %6 {offsets = [10, 0], sizes = [1, 32], strides = [1, 1]} : vector<32x32xf32> to vector<1x32xf32>
    %457 = vector.broadcast %455 : vector<8x1xf32> to vector<8x32xf32>
    %458 = vector.broadcast %456 : vector<1x32xf32> to vector<8x32xf32>
    %459 = arith.mulf %457, %458 : vector<8x32xf32>
    %460 = arith.addf %454, %459 : vector<8x32xf32>
    %461 = vector.extract_strided_slice %396 {offsets = [0, 11], sizes = [8, 1], strides = [1, 1]} : vector<8x32xf32> to vector<8x1xf32>
    %462 = vector.extract_strided_slice %6 {offsets = [11, 0], sizes = [1, 32], strides = [1, 1]} : vector<32x32xf32> to vector<1x32xf32>
    %463 = vector.broadcast %461 : vector<8x1xf32> to vector<8x32xf32>
    %464 = vector.broadcast %462 : vector<1x32xf32> to vector<8x32xf32>
    %465 = arith.mulf %463, %464 : vector<8x32xf32>
    %466 = arith.addf %460, %465 : vector<8x32xf32>
    %467 = vector.extract_strided_slice %396 {offsets = [0, 12], sizes = [8, 1], strides = [1, 1]} : vector<8x32xf32> to vector<8x1xf32>
    %468 = vector.extract_strided_slice %6 {offsets = [12, 0], sizes = [1, 32], strides = [1, 1]} : vector<32x32xf32> to vector<1x32xf32>
    %469 = vector.broadcast %467 : vector<8x1xf32> to vector<8x32xf32>
    %470 = vector.broadcast %468 : vector<1x32xf32> to vector<8x32xf32>
    %471 = arith.mulf %469, %470 : vector<8x32xf32>
    %472 = arith.addf %466, %471 : vector<8x32xf32>
    %473 = vector.extract_strided_slice %396 {offsets = [0, 13], sizes = [8, 1], strides = [1, 1]} : vector<8x32xf32> to vector<8x1xf32>
    %474 = vector.extract_strided_slice %6 {offsets = [13, 0], sizes = [1, 32], strides = [1, 1]} : vector<32x32xf32> to vector<1x32xf32>
    %475 = vector.broadcast %473 : vector<8x1xf32> to vector<8x32xf32>
    %476 = vector.broadcast %474 : vector<1x32xf32> to vector<8x32xf32>
    %477 = arith.mulf %475, %476 : vector<8x32xf32>
    %478 = arith.addf %472, %477 : vector<8x32xf32>
    %479 = vector.extract_strided_slice %396 {offsets = [0, 14], sizes = [8, 1], strides = [1, 1]} : vector<8x32xf32> to vector<8x1xf32>
    %480 = vector.extract_strided_slice %6 {offsets = [14, 0], sizes = [1, 32], strides = [1, 1]} : vector<32x32xf32> to vector<1x32xf32>
    %481 = vector.broadcast %479 : vector<8x1xf32> to vector<8x32xf32>
    %482 = vector.broadcast %480 : vector<1x32xf32> to vector<8x32xf32>
    %483 = arith.mulf %481, %482 : vector<8x32xf32>
    %484 = arith.addf %478, %483 : vector<8x32xf32>
    %485 = vector.extract_strided_slice %396 {offsets = [0, 15], sizes = [8, 1], strides = [1, 1]} : vector<8x32xf32> to vector<8x1xf32>
    %486 = vector.extract_strided_slice %6 {offsets = [15, 0], sizes = [1, 32], strides = [1, 1]} : vector<32x32xf32> to vector<1x32xf32>
    %487 = vector.broadcast %485 : vector<8x1xf32> to vector<8x32xf32>
    %488 = vector.broadcast %486 : vector<1x32xf32> to vector<8x32xf32>
    %489 = arith.mulf %487, %488 : vector<8x32xf32>
    %490 = arith.addf %484, %489 : vector<8x32xf32>
    %491 = vector.extract_strided_slice %396 {offsets = [0, 16], sizes = [8, 1], strides = [1, 1]} : vector<8x32xf32> to vector<8x1xf32>
    %492 = vector.extract_strided_slice %6 {offsets = [16, 0], sizes = [1, 32], strides = [1, 1]} : vector<32x32xf32> to vector<1x32xf32>
    %493 = vector.broadcast %491 : vector<8x1xf32> to vector<8x32xf32>
    %494 = vector.broadcast %492 : vector<1x32xf32> to vector<8x32xf32>
    %495 = arith.mulf %493, %494 : vector<8x32xf32>
    %496 = vector.extract_strided_slice %396 {offsets = [0, 17], sizes = [8, 1], strides = [1, 1]} : vector<8x32xf32> to vector<8x1xf32>
    %497 = vector.extract_strided_slice %6 {offsets = [17, 0], sizes = [1, 32], strides = [1, 1]} : vector<32x32xf32> to vector<1x32xf32>
    %498 = vector.broadcast %496 : vector<8x1xf32> to vector<8x32xf32>
    %499 = vector.broadcast %497 : vector<1x32xf32> to vector<8x32xf32>
    %500 = arith.mulf %498, %499 : vector<8x32xf32>
    %501 = arith.addf %495, %500 : vector<8x32xf32>
    %502 = vector.extract_strided_slice %396 {offsets = [0, 18], sizes = [8, 1], strides = [1, 1]} : vector<8x32xf32> to vector<8x1xf32>
    %503 = vector.extract_strided_slice %6 {offsets = [18, 0], sizes = [1, 32], strides = [1, 1]} : vector<32x32xf32> to vector<1x32xf32>
    %504 = vector.broadcast %502 : vector<8x1xf32> to vector<8x32xf32>
    %505 = vector.broadcast %503 : vector<1x32xf32> to vector<8x32xf32>
    %506 = arith.mulf %504, %505 : vector<8x32xf32>
    %507 = arith.addf %501, %506 : vector<8x32xf32>
    %508 = vector.extract_strided_slice %396 {offsets = [0, 19], sizes = [8, 1], strides = [1, 1]} : vector<8x32xf32> to vector<8x1xf32>
    %509 = vector.extract_strided_slice %6 {offsets = [19, 0], sizes = [1, 32], strides = [1, 1]} : vector<32x32xf32> to vector<1x32xf32>
    %510 = vector.broadcast %508 : vector<8x1xf32> to vector<8x32xf32>
    %511 = vector.broadcast %509 : vector<1x32xf32> to vector<8x32xf32>
    %512 = arith.mulf %510, %511 : vector<8x32xf32>
    %513 = arith.addf %507, %512 : vector<8x32xf32>
    %514 = vector.extract_strided_slice %396 {offsets = [0, 20], sizes = [8, 1], strides = [1, 1]} : vector<8x32xf32> to vector<8x1xf32>
    %515 = vector.extract_strided_slice %6 {offsets = [20, 0], sizes = [1, 32], strides = [1, 1]} : vector<32x32xf32> to vector<1x32xf32>
    %516 = vector.broadcast %514 : vector<8x1xf32> to vector<8x32xf32>
    %517 = vector.broadcast %515 : vector<1x32xf32> to vector<8x32xf32>
    %518 = arith.mulf %516, %517 : vector<8x32xf32>
    %519 = arith.addf %513, %518 : vector<8x32xf32>
    %520 = vector.extract_strided_slice %396 {offsets = [0, 21], sizes = [8, 1], strides = [1, 1]} : vector<8x32xf32> to vector<8x1xf32>
    %521 = vector.extract_strided_slice %6 {offsets = [21, 0], sizes = [1, 32], strides = [1, 1]} : vector<32x32xf32> to vector<1x32xf32>
    %522 = vector.broadcast %520 : vector<8x1xf32> to vector<8x32xf32>
    %523 = vector.broadcast %521 : vector<1x32xf32> to vector<8x32xf32>
    %524 = arith.mulf %522, %523 : vector<8x32xf32>
    %525 = arith.addf %519, %524 : vector<8x32xf32>
    %526 = vector.extract_strided_slice %396 {offsets = [0, 22], sizes = [8, 1], strides = [1, 1]} : vector<8x32xf32> to vector<8x1xf32>
    %527 = vector.extract_strided_slice %6 {offsets = [22, 0], sizes = [1, 32], strides = [1, 1]} : vector<32x32xf32> to vector<1x32xf32>
    %528 = vector.broadcast %526 : vector<8x1xf32> to vector<8x32xf32>
    %529 = vector.broadcast %527 : vector<1x32xf32> to vector<8x32xf32>
    %530 = arith.mulf %528, %529 : vector<8x32xf32>
    %531 = arith.addf %525, %530 : vector<8x32xf32>
    %532 = vector.extract_strided_slice %396 {offsets = [0, 23], sizes = [8, 1], strides = [1, 1]} : vector<8x32xf32> to vector<8x1xf32>
    %533 = vector.extract_strided_slice %6 {offsets = [23, 0], sizes = [1, 32], strides = [1, 1]} : vector<32x32xf32> to vector<1x32xf32>
    %534 = vector.broadcast %532 : vector<8x1xf32> to vector<8x32xf32>
    %535 = vector.broadcast %533 : vector<1x32xf32> to vector<8x32xf32>
    %536 = arith.mulf %534, %535 : vector<8x32xf32>
    %537 = arith.addf %531, %536 : vector<8x32xf32>
    %538 = vector.extract_strided_slice %396 {offsets = [0, 24], sizes = [8, 1], strides = [1, 1]} : vector<8x32xf32> to vector<8x1xf32>
    %539 = vector.extract_strided_slice %6 {offsets = [24, 0], sizes = [1, 32], strides = [1, 1]} : vector<32x32xf32> to vector<1x32xf32>
    %540 = vector.broadcast %538 : vector<8x1xf32> to vector<8x32xf32>
    %541 = vector.broadcast %539 : vector<1x32xf32> to vector<8x32xf32>
    %542 = arith.mulf %540, %541 : vector<8x32xf32>
    %543 = vector.extract_strided_slice %396 {offsets = [0, 25], sizes = [8, 1], strides = [1, 1]} : vector<8x32xf32> to vector<8x1xf32>
    %544 = vector.extract_strided_slice %6 {offsets = [25, 0], sizes = [1, 32], strides = [1, 1]} : vector<32x32xf32> to vector<1x32xf32>
    %545 = vector.broadcast %543 : vector<8x1xf32> to vector<8x32xf32>
    %546 = vector.broadcast %544 : vector<1x32xf32> to vector<8x32xf32>
    %547 = arith.mulf %545, %546 : vector<8x32xf32>
    %548 = arith.addf %542, %547 : vector<8x32xf32>
    %549 = vector.extract_strided_slice %396 {offsets = [0, 26], sizes = [8, 1], strides = [1, 1]} : vector<8x32xf32> to vector<8x1xf32>
    %550 = vector.extract_strided_slice %6 {offsets = [26, 0], sizes = [1, 32], strides = [1, 1]} : vector<32x32xf32> to vector<1x32xf32>
    %551 = vector.broadcast %549 : vector<8x1xf32> to vector<8x32xf32>
    %552 = vector.broadcast %550 : vector<1x32xf32> to vector<8x32xf32>
    %553 = arith.mulf %551, %552 : vector<8x32xf32>
    %554 = arith.addf %548, %553 : vector<8x32xf32>
    %555 = vector.extract_strided_slice %396 {offsets = [0, 27], sizes = [8, 1], strides = [1, 1]} : vector<8x32xf32> to vector<8x1xf32>
    %556 = vector.extract_strided_slice %6 {offsets = [27, 0], sizes = [1, 32], strides = [1, 1]} : vector<32x32xf32> to vector<1x32xf32>
    %557 = vector.broadcast %555 : vector<8x1xf32> to vector<8x32xf32>
    %558 = vector.broadcast %556 : vector<1x32xf32> to vector<8x32xf32>
    %559 = arith.mulf %557, %558 : vector<8x32xf32>
    %560 = arith.addf %554, %559 : vector<8x32xf32>
    %561 = vector.extract_strided_slice %396 {offsets = [0, 28], sizes = [8, 1], strides = [1, 1]} : vector<8x32xf32> to vector<8x1xf32>
    %562 = vector.extract_strided_slice %6 {offsets = [28, 0], sizes = [1, 32], strides = [1, 1]} : vector<32x32xf32> to vector<1x32xf32>
    %563 = vector.broadcast %561 : vector<8x1xf32> to vector<8x32xf32>
    %564 = vector.broadcast %562 : vector<1x32xf32> to vector<8x32xf32>
    %565 = arith.mulf %563, %564 : vector<8x32xf32>
    %566 = arith.addf %560, %565 : vector<8x32xf32>
    %567 = vector.extract_strided_slice %396 {offsets = [0, 29], sizes = [8, 1], strides = [1, 1]} : vector<8x32xf32> to vector<8x1xf32>
    %568 = vector.extract_strided_slice %6 {offsets = [29, 0], sizes = [1, 32], strides = [1, 1]} : vector<32x32xf32> to vector<1x32xf32>
    %569 = vector.broadcast %567 : vector<8x1xf32> to vector<8x32xf32>
    %570 = vector.broadcast %568 : vector<1x32xf32> to vector<8x32xf32>
    %571 = arith.mulf %569, %570 : vector<8x32xf32>
    %572 = arith.addf %566, %571 : vector<8x32xf32>
    %573 = vector.extract_strided_slice %396 {offsets = [0, 30], sizes = [8, 1], strides = [1, 1]} : vector<8x32xf32> to vector<8x1xf32>
    %574 = vector.extract_strided_slice %6 {offsets = [30, 0], sizes = [1, 32], strides = [1, 1]} : vector<32x32xf32> to vector<1x32xf32>
    %575 = vector.broadcast %573 : vector<8x1xf32> to vector<8x32xf32>
    %576 = vector.broadcast %574 : vector<1x32xf32> to vector<8x32xf32>
    %577 = arith.mulf %575, %576 : vector<8x32xf32>
    %578 = arith.addf %572, %577 : vector<8x32xf32>
    %579 = vector.extract_strided_slice %396 {offsets = [0, 31], sizes = [8, 1], strides = [1, 1]} : vector<8x32xf32> to vector<8x1xf32>
    %580 = vector.extract_strided_slice %6 {offsets = [31, 0], sizes = [1, 32], strides = [1, 1]} : vector<32x32xf32> to vector<1x32xf32>
    %581 = vector.broadcast %579 : vector<8x1xf32> to vector<8x32xf32>
    %582 = vector.broadcast %580 : vector<1x32xf32> to vector<8x32xf32>
    %583 = arith.mulf %581, %582 : vector<8x32xf32>
    %584 = arith.addf %578, %583 : vector<8x32xf32>
    %585 = arith.addf %443, %490 : vector<8x32xf32>
    %586 = arith.addf %537, %584 : vector<8x32xf32>
    %587 = arith.addf %585, %586 : vector<8x32xf32>
    %588 = vector.extract_strided_slice %5 {offsets = [24, 0], sizes = [8, 32], strides = [1, 1]} : vector<64x32xf32> to vector<8x32xf32>
    %589 = arith.addf %588, %587 : vector<8x32xf32>
    %590 = math.tanh %589 : vector<8x32xf32>
    %591 = vector.extract_strided_slice %590 {offsets = [0, 0], sizes = [8, 1], strides = [1, 1]} : vector<8x32xf32> to vector<8x1xf32>
    %592 = vector.extract_strided_slice %6 {offsets = [0, 0], sizes = [1, 32], strides = [1, 1]} : vector<32x32xf32> to vector<1x32xf32>
    %593 = vector.broadcast %591 : vector<8x1xf32> to vector<8x32xf32>
    %594 = vector.broadcast %592 : vector<1x32xf32> to vector<8x32xf32>
    %595 = arith.mulf %593, %594 : vector<8x32xf32>
    %596 = vector.extract_strided_slice %590 {offsets = [0, 1], sizes = [8, 1], strides = [1, 1]} : vector<8x32xf32> to vector<8x1xf32>
    %597 = vector.extract_strided_slice %6 {offsets = [1, 0], sizes = [1, 32], strides = [1, 1]} : vector<32x32xf32> to vector<1x32xf32>
    %598 = vector.broadcast %596 : vector<8x1xf32> to vector<8x32xf32>
    %599 = vector.broadcast %597 : vector<1x32xf32> to vector<8x32xf32>
    %600 = arith.mulf %598, %599 : vector<8x32xf32>
    %601 = arith.addf %595, %600 : vector<8x32xf32>
    %602 = vector.extract_strided_slice %590 {offsets = [0, 2], sizes = [8, 1], strides = [1, 1]} : vector<8x32xf32> to vector<8x1xf32>
    %603 = vector.extract_strided_slice %6 {offsets = [2, 0], sizes = [1, 32], strides = [1, 1]} : vector<32x32xf32> to vector<1x32xf32>
    %604 = vector.broadcast %602 : vector<8x1xf32> to vector<8x32xf32>
    %605 = vector.broadcast %603 : vector<1x32xf32> to vector<8x32xf32>
    %606 = arith.mulf %604, %605 : vector<8x32xf32>
    %607 = arith.addf %601, %606 : vector<8x32xf32>
    %608 = vector.extract_strided_slice %590 {offsets = [0, 3], sizes = [8, 1], strides = [1, 1]} : vector<8x32xf32> to vector<8x1xf32>
    %609 = vector.extract_strided_slice %6 {offsets = [3, 0], sizes = [1, 32], strides = [1, 1]} : vector<32x32xf32> to vector<1x32xf32>
    %610 = vector.broadcast %608 : vector<8x1xf32> to vector<8x32xf32>
    %611 = vector.broadcast %609 : vector<1x32xf32> to vector<8x32xf32>
    %612 = arith.mulf %610, %611 : vector<8x32xf32>
    %613 = arith.addf %607, %612 : vector<8x32xf32>
    %614 = vector.extract_strided_slice %590 {offsets = [0, 4], sizes = [8, 1], strides = [1, 1]} : vector<8x32xf32> to vector<8x1xf32>
    %615 = vector.extract_strided_slice %6 {offsets = [4, 0], sizes = [1, 32], strides = [1, 1]} : vector<32x32xf32> to vector<1x32xf32>
    %616 = vector.broadcast %614 : vector<8x1xf32> to vector<8x32xf32>
    %617 = vector.broadcast %615 : vector<1x32xf32> to vector<8x32xf32>
    %618 = arith.mulf %616, %617 : vector<8x32xf32>
    %619 = arith.addf %613, %618 : vector<8x32xf32>
    %620 = vector.extract_strided_slice %590 {offsets = [0, 5], sizes = [8, 1], strides = [1, 1]} : vector<8x32xf32> to vector<8x1xf32>
    %621 = vector.extract_strided_slice %6 {offsets = [5, 0], sizes = [1, 32], strides = [1, 1]} : vector<32x32xf32> to vector<1x32xf32>
    %622 = vector.broadcast %620 : vector<8x1xf32> to vector<8x32xf32>
    %623 = vector.broadcast %621 : vector<1x32xf32> to vector<8x32xf32>
    %624 = arith.mulf %622, %623 : vector<8x32xf32>
    %625 = arith.addf %619, %624 : vector<8x32xf32>
    %626 = vector.extract_strided_slice %590 {offsets = [0, 6], sizes = [8, 1], strides = [1, 1]} : vector<8x32xf32> to vector<8x1xf32>
    %627 = vector.extract_strided_slice %6 {offsets = [6, 0], sizes = [1, 32], strides = [1, 1]} : vector<32x32xf32> to vector<1x32xf32>
    %628 = vector.broadcast %626 : vector<8x1xf32> to vector<8x32xf32>
    %629 = vector.broadcast %627 : vector<1x32xf32> to vector<8x32xf32>
    %630 = arith.mulf %628, %629 : vector<8x32xf32>
    %631 = arith.addf %625, %630 : vector<8x32xf32>
    %632 = vector.extract_strided_slice %590 {offsets = [0, 7], sizes = [8, 1], strides = [1, 1]} : vector<8x32xf32> to vector<8x1xf32>
    %633 = vector.extract_strided_slice %6 {offsets = [7, 0], sizes = [1, 32], strides = [1, 1]} : vector<32x32xf32> to vector<1x32xf32>
    %634 = vector.broadcast %632 : vector<8x1xf32> to vector<8x32xf32>
    %635 = vector.broadcast %633 : vector<1x32xf32> to vector<8x32xf32>
    %636 = arith.mulf %634, %635 : vector<8x32xf32>
    %637 = arith.addf %631, %636 : vector<8x32xf32>
    %638 = vector.extract_strided_slice %590 {offsets = [0, 8], sizes = [8, 1], strides = [1, 1]} : vector<8x32xf32> to vector<8x1xf32>
    %639 = vector.extract_strided_slice %6 {offsets = [8, 0], sizes = [1, 32], strides = [1, 1]} : vector<32x32xf32> to vector<1x32xf32>
    %640 = vector.broadcast %638 : vector<8x1xf32> to vector<8x32xf32>
    %641 = vector.broadcast %639 : vector<1x32xf32> to vector<8x32xf32>
    %642 = arith.mulf %640, %641 : vector<8x32xf32>
    %643 = vector.extract_strided_slice %590 {offsets = [0, 9], sizes = [8, 1], strides = [1, 1]} : vector<8x32xf32> to vector<8x1xf32>
    %644 = vector.extract_strided_slice %6 {offsets = [9, 0], sizes = [1, 32], strides = [1, 1]} : vector<32x32xf32> to vector<1x32xf32>
    %645 = vector.broadcast %643 : vector<8x1xf32> to vector<8x32xf32>
    %646 = vector.broadcast %644 : vector<1x32xf32> to vector<8x32xf32>
    %647 = arith.mulf %645, %646 : vector<8x32xf32>
    %648 = arith.addf %642, %647 : vector<8x32xf32>
    %649 = vector.extract_strided_slice %590 {offsets = [0, 10], sizes = [8, 1], strides = [1, 1]} : vector<8x32xf32> to vector<8x1xf32>
    %650 = vector.extract_strided_slice %6 {offsets = [10, 0], sizes = [1, 32], strides = [1, 1]} : vector<32x32xf32> to vector<1x32xf32>
    %651 = vector.broadcast %649 : vector<8x1xf32> to vector<8x32xf32>
    %652 = vector.broadcast %650 : vector<1x32xf32> to vector<8x32xf32>
    %653 = arith.mulf %651, %652 : vector<8x32xf32>
    %654 = arith.addf %648, %653 : vector<8x32xf32>
    %655 = vector.extract_strided_slice %590 {offsets = [0, 11], sizes = [8, 1], strides = [1, 1]} : vector<8x32xf32> to vector<8x1xf32>
    %656 = vector.extract_strided_slice %6 {offsets = [11, 0], sizes = [1, 32], strides = [1, 1]} : vector<32x32xf32> to vector<1x32xf32>
    %657 = vector.broadcast %655 : vector<8x1xf32> to vector<8x32xf32>
    %658 = vector.broadcast %656 : vector<1x32xf32> to vector<8x32xf32>
    %659 = arith.mulf %657, %658 : vector<8x32xf32>
    %660 = arith.addf %654, %659 : vector<8x32xf32>
    %661 = vector.extract_strided_slice %590 {offsets = [0, 12], sizes = [8, 1], strides = [1, 1]} : vector<8x32xf32> to vector<8x1xf32>
    %662 = vector.extract_strided_slice %6 {offsets = [12, 0], sizes = [1, 32], strides = [1, 1]} : vector<32x32xf32> to vector<1x32xf32>
    %663 = vector.broadcast %661 : vector<8x1xf32> to vector<8x32xf32>
    %664 = vector.broadcast %662 : vector<1x32xf32> to vector<8x32xf32>
    %665 = arith.mulf %663, %664 : vector<8x32xf32>
    %666 = arith.addf %660, %665 : vector<8x32xf32>
    %667 = vector.extract_strided_slice %590 {offsets = [0, 13], sizes = [8, 1], strides = [1, 1]} : vector<8x32xf32> to vector<8x1xf32>
    %668 = vector.extract_strided_slice %6 {offsets = [13, 0], sizes = [1, 32], strides = [1, 1]} : vector<32x32xf32> to vector<1x32xf32>
    %669 = vector.broadcast %667 : vector<8x1xf32> to vector<8x32xf32>
    %670 = vector.broadcast %668 : vector<1x32xf32> to vector<8x32xf32>
    %671 = arith.mulf %669, %670 : vector<8x32xf32>
    %672 = arith.addf %666, %671 : vector<8x32xf32>
    %673 = vector.extract_strided_slice %590 {offsets = [0, 14], sizes = [8, 1], strides = [1, 1]} : vector<8x32xf32> to vector<8x1xf32>
    %674 = vector.extract_strided_slice %6 {offsets = [14, 0], sizes = [1, 32], strides = [1, 1]} : vector<32x32xf32> to vector<1x32xf32>
    %675 = vector.broadcast %673 : vector<8x1xf32> to vector<8x32xf32>
    %676 = vector.broadcast %674 : vector<1x32xf32> to vector<8x32xf32>
    %677 = arith.mulf %675, %676 : vector<8x32xf32>
    %678 = arith.addf %672, %677 : vector<8x32xf32>
    %679 = vector.extract_strided_slice %590 {offsets = [0, 15], sizes = [8, 1], strides = [1, 1]} : vector<8x32xf32> to vector<8x1xf32>
    %680 = vector.extract_strided_slice %6 {offsets = [15, 0], sizes = [1, 32], strides = [1, 1]} : vector<32x32xf32> to vector<1x32xf32>
    %681 = vector.broadcast %679 : vector<8x1xf32> to vector<8x32xf32>
    %682 = vector.broadcast %680 : vector<1x32xf32> to vector<8x32xf32>
    %683 = arith.mulf %681, %682 : vector<8x32xf32>
    %684 = arith.addf %678, %683 : vector<8x32xf32>
    %685 = vector.extract_strided_slice %590 {offsets = [0, 16], sizes = [8, 1], strides = [1, 1]} : vector<8x32xf32> to vector<8x1xf32>
    %686 = vector.extract_strided_slice %6 {offsets = [16, 0], sizes = [1, 32], strides = [1, 1]} : vector<32x32xf32> to vector<1x32xf32>
    %687 = vector.broadcast %685 : vector<8x1xf32> to vector<8x32xf32>
    %688 = vector.broadcast %686 : vector<1x32xf32> to vector<8x32xf32>
    %689 = arith.mulf %687, %688 : vector<8x32xf32>
    %690 = vector.extract_strided_slice %590 {offsets = [0, 17], sizes = [8, 1], strides = [1, 1]} : vector<8x32xf32> to vector<8x1xf32>
    %691 = vector.extract_strided_slice %6 {offsets = [17, 0], sizes = [1, 32], strides = [1, 1]} : vector<32x32xf32> to vector<1x32xf32>
    %692 = vector.broadcast %690 : vector<8x1xf32> to vector<8x32xf32>
    %693 = vector.broadcast %691 : vector<1x32xf32> to vector<8x32xf32>
    %694 = arith.mulf %692, %693 : vector<8x32xf32>
    %695 = arith.addf %689, %694 : vector<8x32xf32>
    %696 = vector.extract_strided_slice %590 {offsets = [0, 18], sizes = [8, 1], strides = [1, 1]} : vector<8x32xf32> to vector<8x1xf32>
    %697 = vector.extract_strided_slice %6 {offsets = [18, 0], sizes = [1, 32], strides = [1, 1]} : vector<32x32xf32> to vector<1x32xf32>
    %698 = vector.broadcast %696 : vector<8x1xf32> to vector<8x32xf32>
    %699 = vector.broadcast %697 : vector<1x32xf32> to vector<8x32xf32>
    %700 = arith.mulf %698, %699 : vector<8x32xf32>
    %701 = arith.addf %695, %700 : vector<8x32xf32>
    %702 = vector.extract_strided_slice %590 {offsets = [0, 19], sizes = [8, 1], strides = [1, 1]} : vector<8x32xf32> to vector<8x1xf32>
    %703 = vector.extract_strided_slice %6 {offsets = [19, 0], sizes = [1, 32], strides = [1, 1]} : vector<32x32xf32> to vector<1x32xf32>
    %704 = vector.broadcast %702 : vector<8x1xf32> to vector<8x32xf32>
    %705 = vector.broadcast %703 : vector<1x32xf32> to vector<8x32xf32>
    %706 = arith.mulf %704, %705 : vector<8x32xf32>
    %707 = arith.addf %701, %706 : vector<8x32xf32>
    %708 = vector.extract_strided_slice %590 {offsets = [0, 20], sizes = [8, 1], strides = [1, 1]} : vector<8x32xf32> to vector<8x1xf32>
    %709 = vector.extract_strided_slice %6 {offsets = [20, 0], sizes = [1, 32], strides = [1, 1]} : vector<32x32xf32> to vector<1x32xf32>
    %710 = vector.broadcast %708 : vector<8x1xf32> to vector<8x32xf32>
    %711 = vector.broadcast %709 : vector<1x32xf32> to vector<8x32xf32>
    %712 = arith.mulf %710, %711 : vector<8x32xf32>
    %713 = arith.addf %707, %712 : vector<8x32xf32>
    %714 = vector.extract_strided_slice %590 {offsets = [0, 21], sizes = [8, 1], strides = [1, 1]} : vector<8x32xf32> to vector<8x1xf32>
    %715 = vector.extract_strided_slice %6 {offsets = [21, 0], sizes = [1, 32], strides = [1, 1]} : vector<32x32xf32> to vector<1x32xf32>
    %716 = vector.broadcast %714 : vector<8x1xf32> to vector<8x32xf32>
    %717 = vector.broadcast %715 : vector<1x32xf32> to vector<8x32xf32>
    %718 = arith.mulf %716, %717 : vector<8x32xf32>
    %719 = arith.addf %713, %718 : vector<8x32xf32>
    %720 = vector.extract_strided_slice %590 {offsets = [0, 22], sizes = [8, 1], strides = [1, 1]} : vector<8x32xf32> to vector<8x1xf32>
    %721 = vector.extract_strided_slice %6 {offsets = [22, 0], sizes = [1, 32], strides = [1, 1]} : vector<32x32xf32> to vector<1x32xf32>
    %722 = vector.broadcast %720 : vector<8x1xf32> to vector<8x32xf32>
    %723 = vector.broadcast %721 : vector<1x32xf32> to vector<8x32xf32>
    %724 = arith.mulf %722, %723 : vector<8x32xf32>
    %725 = arith.addf %719, %724 : vector<8x32xf32>
    %726 = vector.extract_strided_slice %590 {offsets = [0, 23], sizes = [8, 1], strides = [1, 1]} : vector<8x32xf32> to vector<8x1xf32>
    %727 = vector.extract_strided_slice %6 {offsets = [23, 0], sizes = [1, 32], strides = [1, 1]} : vector<32x32xf32> to vector<1x32xf32>
    %728 = vector.broadcast %726 : vector<8x1xf32> to vector<8x32xf32>
    %729 = vector.broadcast %727 : vector<1x32xf32> to vector<8x32xf32>
    %730 = arith.mulf %728, %729 : vector<8x32xf32>
    %731 = arith.addf %725, %730 : vector<8x32xf32>
    %732 = vector.extract_strided_slice %590 {offsets = [0, 24], sizes = [8, 1], strides = [1, 1]} : vector<8x32xf32> to vector<8x1xf32>
    %733 = vector.extract_strided_slice %6 {offsets = [24, 0], sizes = [1, 32], strides = [1, 1]} : vector<32x32xf32> to vector<1x32xf32>
    %734 = vector.broadcast %732 : vector<8x1xf32> to vector<8x32xf32>
    %735 = vector.broadcast %733 : vector<1x32xf32> to vector<8x32xf32>
    %736 = arith.mulf %734, %735 : vector<8x32xf32>
    %737 = vector.extract_strided_slice %590 {offsets = [0, 25], sizes = [8, 1], strides = [1, 1]} : vector<8x32xf32> to vector<8x1xf32>
    %738 = vector.extract_strided_slice %6 {offsets = [25, 0], sizes = [1, 32], strides = [1, 1]} : vector<32x32xf32> to vector<1x32xf32>
    %739 = vector.broadcast %737 : vector<8x1xf32> to vector<8x32xf32>
    %740 = vector.broadcast %738 : vector<1x32xf32> to vector<8x32xf32>
    %741 = arith.mulf %739, %740 : vector<8x32xf32>
    %742 = arith.addf %736, %741 : vector<8x32xf32>
    %743 = vector.extract_strided_slice %590 {offsets = [0, 26], sizes = [8, 1], strides = [1, 1]} : vector<8x32xf32> to vector<8x1xf32>
    %744 = vector.extract_strided_slice %6 {offsets = [26, 0], sizes = [1, 32], strides = [1, 1]} : vector<32x32xf32> to vector<1x32xf32>
    %745 = vector.broadcast %743 : vector<8x1xf32> to vector<8x32xf32>
    %746 = vector.broadcast %744 : vector<1x32xf32> to vector<8x32xf32>
    %747 = arith.mulf %745, %746 : vector<8x32xf32>
    %748 = arith.addf %742, %747 : vector<8x32xf32>
    %749 = vector.extract_strided_slice %590 {offsets = [0, 27], sizes = [8, 1], strides = [1, 1]} : vector<8x32xf32> to vector<8x1xf32>
    %750 = vector.extract_strided_slice %6 {offsets = [27, 0], sizes = [1, 32], strides = [1, 1]} : vector<32x32xf32> to vector<1x32xf32>
    %751 = vector.broadcast %749 : vector<8x1xf32> to vector<8x32xf32>
    %752 = vector.broadcast %750 : vector<1x32xf32> to vector<8x32xf32>
    %753 = arith.mulf %751, %752 : vector<8x32xf32>
    %754 = arith.addf %748, %753 : vector<8x32xf32>
    %755 = vector.extract_strided_slice %590 {offsets = [0, 28], sizes = [8, 1], strides = [1, 1]} : vector<8x32xf32> to vector<8x1xf32>
    %756 = vector.extract_strided_slice %6 {offsets = [28, 0], sizes = [1, 32], strides = [1, 1]} : vector<32x32xf32> to vector<1x32xf32>
    %757 = vector.broadcast %755 : vector<8x1xf32> to vector<8x32xf32>
    %758 = vector.broadcast %756 : vector<1x32xf32> to vector<8x32xf32>
    %759 = arith.mulf %757, %758 : vector<8x32xf32>
    %760 = arith.addf %754, %759 : vector<8x32xf32>
    %761 = vector.extract_strided_slice %590 {offsets = [0, 29], sizes = [8, 1], strides = [1, 1]} : vector<8x32xf32> to vector<8x1xf32>
    %762 = vector.extract_strided_slice %6 {offsets = [29, 0], sizes = [1, 32], strides = [1, 1]} : vector<32x32xf32> to vector<1x32xf32>
    %763 = vector.broadcast %761 : vector<8x1xf32> to vector<8x32xf32>
    %764 = vector.broadcast %762 : vector<1x32xf32> to vector<8x32xf32>
    %765 = arith.mulf %763, %764 : vector<8x32xf32>
    %766 = arith.addf %760, %765 : vector<8x32xf32>
    %767 = vector.extract_strided_slice %590 {offsets = [0, 30], sizes = [8, 1], strides = [1, 1]} : vector<8x32xf32> to vector<8x1xf32>
    %768 = vector.extract_strided_slice %6 {offsets = [30, 0], sizes = [1, 32], strides = [1, 1]} : vector<32x32xf32> to vector<1x32xf32>
    %769 = vector.broadcast %767 : vector<8x1xf32> to vector<8x32xf32>
    %770 = vector.broadcast %768 : vector<1x32xf32> to vector<8x32xf32>
    %771 = arith.mulf %769, %770 : vector<8x32xf32>
    %772 = arith.addf %766, %771 : vector<8x32xf32>
    %773 = vector.extract_strided_slice %590 {offsets = [0, 31], sizes = [8, 1], strides = [1, 1]} : vector<8x32xf32> to vector<8x1xf32>
    %774 = vector.extract_strided_slice %6 {offsets = [31, 0], sizes = [1, 32], strides = [1, 1]} : vector<32x32xf32> to vector<1x32xf32>
    %775 = vector.broadcast %773 : vector<8x1xf32> to vector<8x32xf32>
    %776 = vector.broadcast %774 : vector<1x32xf32> to vector<8x32xf32>
    %777 = arith.mulf %775, %776 : vector<8x32xf32>
    %778 = arith.addf %772, %777 : vector<8x32xf32>
    %779 = arith.addf %637, %684 : vector<8x32xf32>
    %780 = arith.addf %731, %778 : vector<8x32xf32>
    %781 = arith.addf %779, %780 : vector<8x32xf32>
    %782 = vector.extract_strided_slice %5 {offsets = [32, 0], sizes = [8, 32], strides = [1, 1]} : vector<64x32xf32> to vector<8x32xf32>
    %783 = arith.addf %782, %781 : vector<8x32xf32>
    %784 = math.tanh %783 : vector<8x32xf32>
    %785 = vector.extract_strided_slice %784 {offsets = [0, 0], sizes = [8, 1], strides = [1, 1]} : vector<8x32xf32> to vector<8x1xf32>
    %786 = vector.extract_strided_slice %6 {offsets = [0, 0], sizes = [1, 32], strides = [1, 1]} : vector<32x32xf32> to vector<1x32xf32>
    %787 = vector.broadcast %785 : vector<8x1xf32> to vector<8x32xf32>
    %788 = vector.broadcast %786 : vector<1x32xf32> to vector<8x32xf32>
    %789 = arith.mulf %787, %788 : vector<8x32xf32>
    %790 = vector.extract_strided_slice %784 {offsets = [0, 1], sizes = [8, 1], strides = [1, 1]} : vector<8x32xf32> to vector<8x1xf32>
    %791 = vector.extract_strided_slice %6 {offsets = [1, 0], sizes = [1, 32], strides = [1, 1]} : vector<32x32xf32> to vector<1x32xf32>
    %792 = vector.broadcast %790 : vector<8x1xf32> to vector<8x32xf32>
    %793 = vector.broadcast %791 : vector<1x32xf32> to vector<8x32xf32>
    %794 = arith.mulf %792, %793 : vector<8x32xf32>
    %795 = arith.addf %789, %794 : vector<8x32xf32>
    %796 = vector.extract_strided_slice %784 {offsets = [0, 2], sizes = [8, 1], strides = [1, 1]} : vector<8x32xf32> to vector<8x1xf32>
    %797 = vector.extract_strided_slice %6 {offsets = [2, 0], sizes = [1, 32], strides = [1, 1]} : vector<32x32xf32> to vector<1x32xf32>
    %798 = vector.broadcast %796 : vector<8x1xf32> to vector<8x32xf32>
    %799 = vector.broadcast %797 : vector<1x32xf32> to vector<8x32xf32>
    %800 = arith.mulf %798, %799 : vector<8x32xf32>
    %801 = arith.addf %795, %800 : vector<8x32xf32>
    %802 = vector.extract_strided_slice %784 {offsets = [0, 3], sizes = [8, 1], strides = [1, 1]} : vector<8x32xf32> to vector<8x1xf32>
    %803 = vector.extract_strided_slice %6 {offsets = [3, 0], sizes = [1, 32], strides = [1, 1]} : vector<32x32xf32> to vector<1x32xf32>
    %804 = vector.broadcast %802 : vector<8x1xf32> to vector<8x32xf32>
    %805 = vector.broadcast %803 : vector<1x32xf32> to vector<8x32xf32>
    %806 = arith.mulf %804, %805 : vector<8x32xf32>
    %807 = arith.addf %801, %806 : vector<8x32xf32>
    %808 = vector.extract_strided_slice %784 {offsets = [0, 4], sizes = [8, 1], strides = [1, 1]} : vector<8x32xf32> to vector<8x1xf32>
    %809 = vector.extract_strided_slice %6 {offsets = [4, 0], sizes = [1, 32], strides = [1, 1]} : vector<32x32xf32> to vector<1x32xf32>
    %810 = vector.broadcast %808 : vector<8x1xf32> to vector<8x32xf32>
    %811 = vector.broadcast %809 : vector<1x32xf32> to vector<8x32xf32>
    %812 = arith.mulf %810, %811 : vector<8x32xf32>
    %813 = arith.addf %807, %812 : vector<8x32xf32>
    %814 = vector.extract_strided_slice %784 {offsets = [0, 5], sizes = [8, 1], strides = [1, 1]} : vector<8x32xf32> to vector<8x1xf32>
    %815 = vector.extract_strided_slice %6 {offsets = [5, 0], sizes = [1, 32], strides = [1, 1]} : vector<32x32xf32> to vector<1x32xf32>
    %816 = vector.broadcast %814 : vector<8x1xf32> to vector<8x32xf32>
    %817 = vector.broadcast %815 : vector<1x32xf32> to vector<8x32xf32>
    %818 = arith.mulf %816, %817 : vector<8x32xf32>
    %819 = arith.addf %813, %818 : vector<8x32xf32>
    %820 = vector.extract_strided_slice %784 {offsets = [0, 6], sizes = [8, 1], strides = [1, 1]} : vector<8x32xf32> to vector<8x1xf32>
    %821 = vector.extract_strided_slice %6 {offsets = [6, 0], sizes = [1, 32], strides = [1, 1]} : vector<32x32xf32> to vector<1x32xf32>
    %822 = vector.broadcast %820 : vector<8x1xf32> to vector<8x32xf32>
    %823 = vector.broadcast %821 : vector<1x32xf32> to vector<8x32xf32>
    %824 = arith.mulf %822, %823 : vector<8x32xf32>
    %825 = arith.addf %819, %824 : vector<8x32xf32>
    %826 = vector.extract_strided_slice %784 {offsets = [0, 7], sizes = [8, 1], strides = [1, 1]} : vector<8x32xf32> to vector<8x1xf32>
    %827 = vector.extract_strided_slice %6 {offsets = [7, 0], sizes = [1, 32], strides = [1, 1]} : vector<32x32xf32> to vector<1x32xf32>
    %828 = vector.broadcast %826 : vector<8x1xf32> to vector<8x32xf32>
    %829 = vector.broadcast %827 : vector<1x32xf32> to vector<8x32xf32>
    %830 = arith.mulf %828, %829 : vector<8x32xf32>
    %831 = arith.addf %825, %830 : vector<8x32xf32>
    %832 = vector.extract_strided_slice %784 {offsets = [0, 8], sizes = [8, 1], strides = [1, 1]} : vector<8x32xf32> to vector<8x1xf32>
    %833 = vector.extract_strided_slice %6 {offsets = [8, 0], sizes = [1, 32], strides = [1, 1]} : vector<32x32xf32> to vector<1x32xf32>
    %834 = vector.broadcast %832 : vector<8x1xf32> to vector<8x32xf32>
    %835 = vector.broadcast %833 : vector<1x32xf32> to vector<8x32xf32>
    %836 = arith.mulf %834, %835 : vector<8x32xf32>
    %837 = vector.extract_strided_slice %784 {offsets = [0, 9], sizes = [8, 1], strides = [1, 1]} : vector<8x32xf32> to vector<8x1xf32>
    %838 = vector.extract_strided_slice %6 {offsets = [9, 0], sizes = [1, 32], strides = [1, 1]} : vector<32x32xf32> to vector<1x32xf32>
    %839 = vector.broadcast %837 : vector<8x1xf32> to vector<8x32xf32>
    %840 = vector.broadcast %838 : vector<1x32xf32> to vector<8x32xf32>
    %841 = arith.mulf %839, %840 : vector<8x32xf32>
    %842 = arith.addf %836, %841 : vector<8x32xf32>
    %843 = vector.extract_strided_slice %784 {offsets = [0, 10], sizes = [8, 1], strides = [1, 1]} : vector<8x32xf32> to vector<8x1xf32>
    %844 = vector.extract_strided_slice %6 {offsets = [10, 0], sizes = [1, 32], strides = [1, 1]} : vector<32x32xf32> to vector<1x32xf32>
    %845 = vector.broadcast %843 : vector<8x1xf32> to vector<8x32xf32>
    %846 = vector.broadcast %844 : vector<1x32xf32> to vector<8x32xf32>
    %847 = arith.mulf %845, %846 : vector<8x32xf32>
    %848 = arith.addf %842, %847 : vector<8x32xf32>
    %849 = vector.extract_strided_slice %784 {offsets = [0, 11], sizes = [8, 1], strides = [1, 1]} : vector<8x32xf32> to vector<8x1xf32>
    %850 = vector.extract_strided_slice %6 {offsets = [11, 0], sizes = [1, 32], strides = [1, 1]} : vector<32x32xf32> to vector<1x32xf32>
    %851 = vector.broadcast %849 : vector<8x1xf32> to vector<8x32xf32>
    %852 = vector.broadcast %850 : vector<1x32xf32> to vector<8x32xf32>
    %853 = arith.mulf %851, %852 : vector<8x32xf32>
    %854 = arith.addf %848, %853 : vector<8x32xf32>
    %855 = vector.extract_strided_slice %784 {offsets = [0, 12], sizes = [8, 1], strides = [1, 1]} : vector<8x32xf32> to vector<8x1xf32>
    %856 = vector.extract_strided_slice %6 {offsets = [12, 0], sizes = [1, 32], strides = [1, 1]} : vector<32x32xf32> to vector<1x32xf32>
    %857 = vector.broadcast %855 : vector<8x1xf32> to vector<8x32xf32>
    %858 = vector.broadcast %856 : vector<1x32xf32> to vector<8x32xf32>
    %859 = arith.mulf %857, %858 : vector<8x32xf32>
    %860 = arith.addf %854, %859 : vector<8x32xf32>
    %861 = vector.extract_strided_slice %784 {offsets = [0, 13], sizes = [8, 1], strides = [1, 1]} : vector<8x32xf32> to vector<8x1xf32>
    %862 = vector.extract_strided_slice %6 {offsets = [13, 0], sizes = [1, 32], strides = [1, 1]} : vector<32x32xf32> to vector<1x32xf32>
    %863 = vector.broadcast %861 : vector<8x1xf32> to vector<8x32xf32>
    %864 = vector.broadcast %862 : vector<1x32xf32> to vector<8x32xf32>
    %865 = arith.mulf %863, %864 : vector<8x32xf32>
    %866 = arith.addf %860, %865 : vector<8x32xf32>
    %867 = vector.extract_strided_slice %784 {offsets = [0, 14], sizes = [8, 1], strides = [1, 1]} : vector<8x32xf32> to vector<8x1xf32>
    %868 = vector.extract_strided_slice %6 {offsets = [14, 0], sizes = [1, 32], strides = [1, 1]} : vector<32x32xf32> to vector<1x32xf32>
    %869 = vector.broadcast %867 : vector<8x1xf32> to vector<8x32xf32>
    %870 = vector.broadcast %868 : vector<1x32xf32> to vector<8x32xf32>
    %871 = arith.mulf %869, %870 : vector<8x32xf32>
    %872 = arith.addf %866, %871 : vector<8x32xf32>
    %873 = vector.extract_strided_slice %784 {offsets = [0, 15], sizes = [8, 1], strides = [1, 1]} : vector<8x32xf32> to vector<8x1xf32>
    %874 = vector.extract_strided_slice %6 {offsets = [15, 0], sizes = [1, 32], strides = [1, 1]} : vector<32x32xf32> to vector<1x32xf32>
    %875 = vector.broadcast %873 : vector<8x1xf32> to vector<8x32xf32>
    %876 = vector.broadcast %874 : vector<1x32xf32> to vector<8x32xf32>
    %877 = arith.mulf %875, %876 : vector<8x32xf32>
    %878 = arith.addf %872, %877 : vector<8x32xf32>
    %879 = vector.extract_strided_slice %784 {offsets = [0, 16], sizes = [8, 1], strides = [1, 1]} : vector<8x32xf32> to vector<8x1xf32>
    %880 = vector.extract_strided_slice %6 {offsets = [16, 0], sizes = [1, 32], strides = [1, 1]} : vector<32x32xf32> to vector<1x32xf32>
    %881 = vector.broadcast %879 : vector<8x1xf32> to vector<8x32xf32>
    %882 = vector.broadcast %880 : vector<1x32xf32> to vector<8x32xf32>
    %883 = arith.mulf %881, %882 : vector<8x32xf32>
    %884 = vector.extract_strided_slice %784 {offsets = [0, 17], sizes = [8, 1], strides = [1, 1]} : vector<8x32xf32> to vector<8x1xf32>
    %885 = vector.extract_strided_slice %6 {offsets = [17, 0], sizes = [1, 32], strides = [1, 1]} : vector<32x32xf32> to vector<1x32xf32>
    %886 = vector.broadcast %884 : vector<8x1xf32> to vector<8x32xf32>
    %887 = vector.broadcast %885 : vector<1x32xf32> to vector<8x32xf32>
    %888 = arith.mulf %886, %887 : vector<8x32xf32>
    %889 = arith.addf %883, %888 : vector<8x32xf32>
    %890 = vector.extract_strided_slice %784 {offsets = [0, 18], sizes = [8, 1], strides = [1, 1]} : vector<8x32xf32> to vector<8x1xf32>
    %891 = vector.extract_strided_slice %6 {offsets = [18, 0], sizes = [1, 32], strides = [1, 1]} : vector<32x32xf32> to vector<1x32xf32>
    %892 = vector.broadcast %890 : vector<8x1xf32> to vector<8x32xf32>
    %893 = vector.broadcast %891 : vector<1x32xf32> to vector<8x32xf32>
    %894 = arith.mulf %892, %893 : vector<8x32xf32>
    %895 = arith.addf %889, %894 : vector<8x32xf32>
    %896 = vector.extract_strided_slice %784 {offsets = [0, 19], sizes = [8, 1], strides = [1, 1]} : vector<8x32xf32> to vector<8x1xf32>
    %897 = vector.extract_strided_slice %6 {offsets = [19, 0], sizes = [1, 32], strides = [1, 1]} : vector<32x32xf32> to vector<1x32xf32>
    %898 = vector.broadcast %896 : vector<8x1xf32> to vector<8x32xf32>
    %899 = vector.broadcast %897 : vector<1x32xf32> to vector<8x32xf32>
    %900 = arith.mulf %898, %899 : vector<8x32xf32>
    %901 = arith.addf %895, %900 : vector<8x32xf32>
    %902 = vector.extract_strided_slice %784 {offsets = [0, 20], sizes = [8, 1], strides = [1, 1]} : vector<8x32xf32> to vector<8x1xf32>
    %903 = vector.extract_strided_slice %6 {offsets = [20, 0], sizes = [1, 32], strides = [1, 1]} : vector<32x32xf32> to vector<1x32xf32>
    %904 = vector.broadcast %902 : vector<8x1xf32> to vector<8x32xf32>
    %905 = vector.broadcast %903 : vector<1x32xf32> to vector<8x32xf32>
    %906 = arith.mulf %904, %905 : vector<8x32xf32>
    %907 = arith.addf %901, %906 : vector<8x32xf32>
    %908 = vector.extract_strided_slice %784 {offsets = [0, 21], sizes = [8, 1], strides = [1, 1]} : vector<8x32xf32> to vector<8x1xf32>
    %909 = vector.extract_strided_slice %6 {offsets = [21, 0], sizes = [1, 32], strides = [1, 1]} : vector<32x32xf32> to vector<1x32xf32>
    %910 = vector.broadcast %908 : vector<8x1xf32> to vector<8x32xf32>
    %911 = vector.broadcast %909 : vector<1x32xf32> to vector<8x32xf32>
    %912 = arith.mulf %910, %911 : vector<8x32xf32>
    %913 = arith.addf %907, %912 : vector<8x32xf32>
    %914 = vector.extract_strided_slice %784 {offsets = [0, 22], sizes = [8, 1], strides = [1, 1]} : vector<8x32xf32> to vector<8x1xf32>
    %915 = vector.extract_strided_slice %6 {offsets = [22, 0], sizes = [1, 32], strides = [1, 1]} : vector<32x32xf32> to vector<1x32xf32>
    %916 = vector.broadcast %914 : vector<8x1xf32> to vector<8x32xf32>
    %917 = vector.broadcast %915 : vector<1x32xf32> to vector<8x32xf32>
    %918 = arith.mulf %916, %917 : vector<8x32xf32>
    %919 = arith.addf %913, %918 : vector<8x32xf32>
    %920 = vector.extract_strided_slice %784 {offsets = [0, 23], sizes = [8, 1], strides = [1, 1]} : vector<8x32xf32> to vector<8x1xf32>
    %921 = vector.extract_strided_slice %6 {offsets = [23, 0], sizes = [1, 32], strides = [1, 1]} : vector<32x32xf32> to vector<1x32xf32>
    %922 = vector.broadcast %920 : vector<8x1xf32> to vector<8x32xf32>
    %923 = vector.broadcast %921 : vector<1x32xf32> to vector<8x32xf32>
    %924 = arith.mulf %922, %923 : vector<8x32xf32>
    %925 = arith.addf %919, %924 : vector<8x32xf32>
    %926 = vector.extract_strided_slice %784 {offsets = [0, 24], sizes = [8, 1], strides = [1, 1]} : vector<8x32xf32> to vector<8x1xf32>
    %927 = vector.extract_strided_slice %6 {offsets = [24, 0], sizes = [1, 32], strides = [1, 1]} : vector<32x32xf32> to vector<1x32xf32>
    %928 = vector.broadcast %926 : vector<8x1xf32> to vector<8x32xf32>
    %929 = vector.broadcast %927 : vector<1x32xf32> to vector<8x32xf32>
    %930 = arith.mulf %928, %929 : vector<8x32xf32>
    %931 = vector.extract_strided_slice %784 {offsets = [0, 25], sizes = [8, 1], strides = [1, 1]} : vector<8x32xf32> to vector<8x1xf32>
    %932 = vector.extract_strided_slice %6 {offsets = [25, 0], sizes = [1, 32], strides = [1, 1]} : vector<32x32xf32> to vector<1x32xf32>
    %933 = vector.broadcast %931 : vector<8x1xf32> to vector<8x32xf32>
    %934 = vector.broadcast %932 : vector<1x32xf32> to vector<8x32xf32>
    %935 = arith.mulf %933, %934 : vector<8x32xf32>
    %936 = arith.addf %930, %935 : vector<8x32xf32>
    %937 = vector.extract_strided_slice %784 {offsets = [0, 26], sizes = [8, 1], strides = [1, 1]} : vector<8x32xf32> to vector<8x1xf32>
    %938 = vector.extract_strided_slice %6 {offsets = [26, 0], sizes = [1, 32], strides = [1, 1]} : vector<32x32xf32> to vector<1x32xf32>
    %939 = vector.broadcast %937 : vector<8x1xf32> to vector<8x32xf32>
    %940 = vector.broadcast %938 : vector<1x32xf32> to vector<8x32xf32>
    %941 = arith.mulf %939, %940 : vector<8x32xf32>
    %942 = arith.addf %936, %941 : vector<8x32xf32>
    %943 = vector.extract_strided_slice %784 {offsets = [0, 27], sizes = [8, 1], strides = [1, 1]} : vector<8x32xf32> to vector<8x1xf32>
    %944 = vector.extract_strided_slice %6 {offsets = [27, 0], sizes = [1, 32], strides = [1, 1]} : vector<32x32xf32> to vector<1x32xf32>
    %945 = vector.broadcast %943 : vector<8x1xf32> to vector<8x32xf32>
    %946 = vector.broadcast %944 : vector<1x32xf32> to vector<8x32xf32>
    %947 = arith.mulf %945, %946 : vector<8x32xf32>
    %948 = arith.addf %942, %947 : vector<8x32xf32>
    %949 = vector.extract_strided_slice %784 {offsets = [0, 28], sizes = [8, 1], strides = [1, 1]} : vector<8x32xf32> to vector<8x1xf32>
    %950 = vector.extract_strided_slice %6 {offsets = [28, 0], sizes = [1, 32], strides = [1, 1]} : vector<32x32xf32> to vector<1x32xf32>
    %951 = vector.broadcast %949 : vector<8x1xf32> to vector<8x32xf32>
    %952 = vector.broadcast %950 : vector<1x32xf32> to vector<8x32xf32>
    %953 = arith.mulf %951, %952 : vector<8x32xf32>
    %954 = arith.addf %948, %953 : vector<8x32xf32>
    %955 = vector.extract_strided_slice %784 {offsets = [0, 29], sizes = [8, 1], strides = [1, 1]} : vector<8x32xf32> to vector<8x1xf32>
    %956 = vector.extract_strided_slice %6 {offsets = [29, 0], sizes = [1, 32], strides = [1, 1]} : vector<32x32xf32> to vector<1x32xf32>
    %957 = vector.broadcast %955 : vector<8x1xf32> to vector<8x32xf32>
    %958 = vector.broadcast %956 : vector<1x32xf32> to vector<8x32xf32>
    %959 = arith.mulf %957, %958 : vector<8x32xf32>
    %960 = arith.addf %954, %959 : vector<8x32xf32>
    %961 = vector.extract_strided_slice %784 {offsets = [0, 30], sizes = [8, 1], strides = [1, 1]} : vector<8x32xf32> to vector<8x1xf32>
    %962 = vector.extract_strided_slice %6 {offsets = [30, 0], sizes = [1, 32], strides = [1, 1]} : vector<32x32xf32> to vector<1x32xf32>
    %963 = vector.broadcast %961 : vector<8x1xf32> to vector<8x32xf32>
    %964 = vector.broadcast %962 : vector<1x32xf32> to vector<8x32xf32>
    %965 = arith.mulf %963, %964 : vector<8x32xf32>
    %966 = arith.addf %960, %965 : vector<8x32xf32>
    %967 = vector.extract_strided_slice %784 {offsets = [0, 31], sizes = [8, 1], strides = [1, 1]} : vector<8x32xf32> to vector<8x1xf32>
    %968 = vector.extract_strided_slice %6 {offsets = [31, 0], sizes = [1, 32], strides = [1, 1]} : vector<32x32xf32> to vector<1x32xf32>
    %969 = vector.broadcast %967 : vector<8x1xf32> to vector<8x32xf32>
    %970 = vector.broadcast %968 : vector<1x32xf32> to vector<8x32xf32>
    %971 = arith.mulf %969, %970 : vector<8x32xf32>
    %972 = arith.addf %966, %971 : vector<8x32xf32>
    %973 = arith.addf %831, %878 : vector<8x32xf32>
    %974 = arith.addf %925, %972 : vector<8x32xf32>
    %975 = arith.addf %973, %974 : vector<8x32xf32>
    %976 = vector.extract_strided_slice %5 {offsets = [40, 0], sizes = [8, 32], strides = [1, 1]} : vector<64x32xf32> to vector<8x32xf32>
    %977 = arith.addf %976, %975 : vector<8x32xf32>
    %978 = math.tanh %977 : vector<8x32xf32>
    %979 = vector.extract_strided_slice %978 {offsets = [0, 0], sizes = [8, 1], strides = [1, 1]} : vector<8x32xf32> to vector<8x1xf32>
    %980 = vector.extract_strided_slice %6 {offsets = [0, 0], sizes = [1, 32], strides = [1, 1]} : vector<32x32xf32> to vector<1x32xf32>
    %981 = vector.broadcast %979 : vector<8x1xf32> to vector<8x32xf32>
    %982 = vector.broadcast %980 : vector<1x32xf32> to vector<8x32xf32>
    %983 = arith.mulf %981, %982 : vector<8x32xf32>
    %984 = vector.extract_strided_slice %978 {offsets = [0, 1], sizes = [8, 1], strides = [1, 1]} : vector<8x32xf32> to vector<8x1xf32>
    %985 = vector.extract_strided_slice %6 {offsets = [1, 0], sizes = [1, 32], strides = [1, 1]} : vector<32x32xf32> to vector<1x32xf32>
    %986 = vector.broadcast %984 : vector<8x1xf32> to vector<8x32xf32>
    %987 = vector.broadcast %985 : vector<1x32xf32> to vector<8x32xf32>
    %988 = arith.mulf %986, %987 : vector<8x32xf32>
    %989 = arith.addf %983, %988 : vector<8x32xf32>
    %990 = vector.extract_strided_slice %978 {offsets = [0, 2], sizes = [8, 1], strides = [1, 1]} : vector<8x32xf32> to vector<8x1xf32>
    %991 = vector.extract_strided_slice %6 {offsets = [2, 0], sizes = [1, 32], strides = [1, 1]} : vector<32x32xf32> to vector<1x32xf32>
    %992 = vector.broadcast %990 : vector<8x1xf32> to vector<8x32xf32>
    %993 = vector.broadcast %991 : vector<1x32xf32> to vector<8x32xf32>
    %994 = arith.mulf %992, %993 : vector<8x32xf32>
    %995 = arith.addf %989, %994 : vector<8x32xf32>
    %996 = vector.extract_strided_slice %978 {offsets = [0, 3], sizes = [8, 1], strides = [1, 1]} : vector<8x32xf32> to vector<8x1xf32>
    %997 = vector.extract_strided_slice %6 {offsets = [3, 0], sizes = [1, 32], strides = [1, 1]} : vector<32x32xf32> to vector<1x32xf32>
    %998 = vector.broadcast %996 : vector<8x1xf32> to vector<8x32xf32>
    %999 = vector.broadcast %997 : vector<1x32xf32> to vector<8x32xf32>
    %1000 = arith.mulf %998, %999 : vector<8x32xf32>
    %1001 = arith.addf %995, %1000 : vector<8x32xf32>
    %1002 = vector.extract_strided_slice %978 {offsets = [0, 4], sizes = [8, 1], strides = [1, 1]} : vector<8x32xf32> to vector<8x1xf32>
    %1003 = vector.extract_strided_slice %6 {offsets = [4, 0], sizes = [1, 32], strides = [1, 1]} : vector<32x32xf32> to vector<1x32xf32>
    %1004 = vector.broadcast %1002 : vector<8x1xf32> to vector<8x32xf32>
    %1005 = vector.broadcast %1003 : vector<1x32xf32> to vector<8x32xf32>
    %1006 = arith.mulf %1004, %1005 : vector<8x32xf32>
    %1007 = arith.addf %1001, %1006 : vector<8x32xf32>
    %1008 = vector.extract_strided_slice %978 {offsets = [0, 5], sizes = [8, 1], strides = [1, 1]} : vector<8x32xf32> to vector<8x1xf32>
    %1009 = vector.extract_strided_slice %6 {offsets = [5, 0], sizes = [1, 32], strides = [1, 1]} : vector<32x32xf32> to vector<1x32xf32>
    %1010 = vector.broadcast %1008 : vector<8x1xf32> to vector<8x32xf32>
    %1011 = vector.broadcast %1009 : vector<1x32xf32> to vector<8x32xf32>
    %1012 = arith.mulf %1010, %1011 : vector<8x32xf32>
    %1013 = arith.addf %1007, %1012 : vector<8x32xf32>
    %1014 = vector.extract_strided_slice %978 {offsets = [0, 6], sizes = [8, 1], strides = [1, 1]} : vector<8x32xf32> to vector<8x1xf32>
    %1015 = vector.extract_strided_slice %6 {offsets = [6, 0], sizes = [1, 32], strides = [1, 1]} : vector<32x32xf32> to vector<1x32xf32>
    %1016 = vector.broadcast %1014 : vector<8x1xf32> to vector<8x32xf32>
    %1017 = vector.broadcast %1015 : vector<1x32xf32> to vector<8x32xf32>
    %1018 = arith.mulf %1016, %1017 : vector<8x32xf32>
    %1019 = arith.addf %1013, %1018 : vector<8x32xf32>
    %1020 = vector.extract_strided_slice %978 {offsets = [0, 7], sizes = [8, 1], strides = [1, 1]} : vector<8x32xf32> to vector<8x1xf32>
    %1021 = vector.extract_strided_slice %6 {offsets = [7, 0], sizes = [1, 32], strides = [1, 1]} : vector<32x32xf32> to vector<1x32xf32>
    %1022 = vector.broadcast %1020 : vector<8x1xf32> to vector<8x32xf32>
    %1023 = vector.broadcast %1021 : vector<1x32xf32> to vector<8x32xf32>
    %1024 = arith.mulf %1022, %1023 : vector<8x32xf32>
    %1025 = arith.addf %1019, %1024 : vector<8x32xf32>
    %1026 = vector.extract_strided_slice %978 {offsets = [0, 8], sizes = [8, 1], strides = [1, 1]} : vector<8x32xf32> to vector<8x1xf32>
    %1027 = vector.extract_strided_slice %6 {offsets = [8, 0], sizes = [1, 32], strides = [1, 1]} : vector<32x32xf32> to vector<1x32xf32>
    %1028 = vector.broadcast %1026 : vector<8x1xf32> to vector<8x32xf32>
    %1029 = vector.broadcast %1027 : vector<1x32xf32> to vector<8x32xf32>
    %1030 = arith.mulf %1028, %1029 : vector<8x32xf32>
    %1031 = vector.extract_strided_slice %978 {offsets = [0, 9], sizes = [8, 1], strides = [1, 1]} : vector<8x32xf32> to vector<8x1xf32>
    %1032 = vector.extract_strided_slice %6 {offsets = [9, 0], sizes = [1, 32], strides = [1, 1]} : vector<32x32xf32> to vector<1x32xf32>
    %1033 = vector.broadcast %1031 : vector<8x1xf32> to vector<8x32xf32>
    %1034 = vector.broadcast %1032 : vector<1x32xf32> to vector<8x32xf32>
    %1035 = arith.mulf %1033, %1034 : vector<8x32xf32>
    %1036 = arith.addf %1030, %1035 : vector<8x32xf32>
    %1037 = vector.extract_strided_slice %978 {offsets = [0, 10], sizes = [8, 1], strides = [1, 1]} : vector<8x32xf32> to vector<8x1xf32>
    %1038 = vector.extract_strided_slice %6 {offsets = [10, 0], sizes = [1, 32], strides = [1, 1]} : vector<32x32xf32> to vector<1x32xf32>
    %1039 = vector.broadcast %1037 : vector<8x1xf32> to vector<8x32xf32>
    %1040 = vector.broadcast %1038 : vector<1x32xf32> to vector<8x32xf32>
    %1041 = arith.mulf %1039, %1040 : vector<8x32xf32>
    %1042 = arith.addf %1036, %1041 : vector<8x32xf32>
    %1043 = vector.extract_strided_slice %978 {offsets = [0, 11], sizes = [8, 1], strides = [1, 1]} : vector<8x32xf32> to vector<8x1xf32>
    %1044 = vector.extract_strided_slice %6 {offsets = [11, 0], sizes = [1, 32], strides = [1, 1]} : vector<32x32xf32> to vector<1x32xf32>
    %1045 = vector.broadcast %1043 : vector<8x1xf32> to vector<8x32xf32>
    %1046 = vector.broadcast %1044 : vector<1x32xf32> to vector<8x32xf32>
    %1047 = arith.mulf %1045, %1046 : vector<8x32xf32>
    %1048 = arith.addf %1042, %1047 : vector<8x32xf32>
    %1049 = vector.extract_strided_slice %978 {offsets = [0, 12], sizes = [8, 1], strides = [1, 1]} : vector<8x32xf32> to vector<8x1xf32>
    %1050 = vector.extract_strided_slice %6 {offsets = [12, 0], sizes = [1, 32], strides = [1, 1]} : vector<32x32xf32> to vector<1x32xf32>
    %1051 = vector.broadcast %1049 : vector<8x1xf32> to vector<8x32xf32>
    %1052 = vector.broadcast %1050 : vector<1x32xf32> to vector<8x32xf32>
    %1053 = arith.mulf %1051, %1052 : vector<8x32xf32>
    %1054 = arith.addf %1048, %1053 : vector<8x32xf32>
    %1055 = vector.extract_strided_slice %978 {offsets = [0, 13], sizes = [8, 1], strides = [1, 1]} : vector<8x32xf32> to vector<8x1xf32>
    %1056 = vector.extract_strided_slice %6 {offsets = [13, 0], sizes = [1, 32], strides = [1, 1]} : vector<32x32xf32> to vector<1x32xf32>
    %1057 = vector.broadcast %1055 : vector<8x1xf32> to vector<8x32xf32>
    %1058 = vector.broadcast %1056 : vector<1x32xf32> to vector<8x32xf32>
    %1059 = arith.mulf %1057, %1058 : vector<8x32xf32>
    %1060 = arith.addf %1054, %1059 : vector<8x32xf32>
    %1061 = vector.extract_strided_slice %978 {offsets = [0, 14], sizes = [8, 1], strides = [1, 1]} : vector<8x32xf32> to vector<8x1xf32>
    %1062 = vector.extract_strided_slice %6 {offsets = [14, 0], sizes = [1, 32], strides = [1, 1]} : vector<32x32xf32> to vector<1x32xf32>
    %1063 = vector.broadcast %1061 : vector<8x1xf32> to vector<8x32xf32>
    %1064 = vector.broadcast %1062 : vector<1x32xf32> to vector<8x32xf32>
    %1065 = arith.mulf %1063, %1064 : vector<8x32xf32>
    %1066 = arith.addf %1060, %1065 : vector<8x32xf32>
    %1067 = vector.extract_strided_slice %978 {offsets = [0, 15], sizes = [8, 1], strides = [1, 1]} : vector<8x32xf32> to vector<8x1xf32>
    %1068 = vector.extract_strided_slice %6 {offsets = [15, 0], sizes = [1, 32], strides = [1, 1]} : vector<32x32xf32> to vector<1x32xf32>
    %1069 = vector.broadcast %1067 : vector<8x1xf32> to vector<8x32xf32>
    %1070 = vector.broadcast %1068 : vector<1x32xf32> to vector<8x32xf32>
    %1071 = arith.mulf %1069, %1070 : vector<8x32xf32>
    %1072 = arith.addf %1066, %1071 : vector<8x32xf32>
    %1073 = vector.extract_strided_slice %978 {offsets = [0, 16], sizes = [8, 1], strides = [1, 1]} : vector<8x32xf32> to vector<8x1xf32>
    %1074 = vector.extract_strided_slice %6 {offsets = [16, 0], sizes = [1, 32], strides = [1, 1]} : vector<32x32xf32> to vector<1x32xf32>
    %1075 = vector.broadcast %1073 : vector<8x1xf32> to vector<8x32xf32>
    %1076 = vector.broadcast %1074 : vector<1x32xf32> to vector<8x32xf32>
    %1077 = arith.mulf %1075, %1076 : vector<8x32xf32>
    %1078 = vector.extract_strided_slice %978 {offsets = [0, 17], sizes = [8, 1], strides = [1, 1]} : vector<8x32xf32> to vector<8x1xf32>
    %1079 = vector.extract_strided_slice %6 {offsets = [17, 0], sizes = [1, 32], strides = [1, 1]} : vector<32x32xf32> to vector<1x32xf32>
    %1080 = vector.broadcast %1078 : vector<8x1xf32> to vector<8x32xf32>
    %1081 = vector.broadcast %1079 : vector<1x32xf32> to vector<8x32xf32>
    %1082 = arith.mulf %1080, %1081 : vector<8x32xf32>
    %1083 = arith.addf %1077, %1082 : vector<8x32xf32>
    %1084 = vector.extract_strided_slice %978 {offsets = [0, 18], sizes = [8, 1], strides = [1, 1]} : vector<8x32xf32> to vector<8x1xf32>
    %1085 = vector.extract_strided_slice %6 {offsets = [18, 0], sizes = [1, 32], strides = [1, 1]} : vector<32x32xf32> to vector<1x32xf32>
    %1086 = vector.broadcast %1084 : vector<8x1xf32> to vector<8x32xf32>
    %1087 = vector.broadcast %1085 : vector<1x32xf32> to vector<8x32xf32>
    %1088 = arith.mulf %1086, %1087 : vector<8x32xf32>
    %1089 = arith.addf %1083, %1088 : vector<8x32xf32>
    %1090 = vector.extract_strided_slice %978 {offsets = [0, 19], sizes = [8, 1], strides = [1, 1]} : vector<8x32xf32> to vector<8x1xf32>
    %1091 = vector.extract_strided_slice %6 {offsets = [19, 0], sizes = [1, 32], strides = [1, 1]} : vector<32x32xf32> to vector<1x32xf32>
    %1092 = vector.broadcast %1090 : vector<8x1xf32> to vector<8x32xf32>
    %1093 = vector.broadcast %1091 : vector<1x32xf32> to vector<8x32xf32>
    %1094 = arith.mulf %1092, %1093 : vector<8x32xf32>
    %1095 = arith.addf %1089, %1094 : vector<8x32xf32>
    %1096 = vector.extract_strided_slice %978 {offsets = [0, 20], sizes = [8, 1], strides = [1, 1]} : vector<8x32xf32> to vector<8x1xf32>
    %1097 = vector.extract_strided_slice %6 {offsets = [20, 0], sizes = [1, 32], strides = [1, 1]} : vector<32x32xf32> to vector<1x32xf32>
    %1098 = vector.broadcast %1096 : vector<8x1xf32> to vector<8x32xf32>
    %1099 = vector.broadcast %1097 : vector<1x32xf32> to vector<8x32xf32>
    %1100 = arith.mulf %1098, %1099 : vector<8x32xf32>
    %1101 = arith.addf %1095, %1100 : vector<8x32xf32>
    %1102 = vector.extract_strided_slice %978 {offsets = [0, 21], sizes = [8, 1], strides = [1, 1]} : vector<8x32xf32> to vector<8x1xf32>
    %1103 = vector.extract_strided_slice %6 {offsets = [21, 0], sizes = [1, 32], strides = [1, 1]} : vector<32x32xf32> to vector<1x32xf32>
    %1104 = vector.broadcast %1102 : vector<8x1xf32> to vector<8x32xf32>
    %1105 = vector.broadcast %1103 : vector<1x32xf32> to vector<8x32xf32>
    %1106 = arith.mulf %1104, %1105 : vector<8x32xf32>
    %1107 = arith.addf %1101, %1106 : vector<8x32xf32>
    %1108 = vector.extract_strided_slice %978 {offsets = [0, 22], sizes = [8, 1], strides = [1, 1]} : vector<8x32xf32> to vector<8x1xf32>
    %1109 = vector.extract_strided_slice %6 {offsets = [22, 0], sizes = [1, 32], strides = [1, 1]} : vector<32x32xf32> to vector<1x32xf32>
    %1110 = vector.broadcast %1108 : vector<8x1xf32> to vector<8x32xf32>
    %1111 = vector.broadcast %1109 : vector<1x32xf32> to vector<8x32xf32>
    %1112 = arith.mulf %1110, %1111 : vector<8x32xf32>
    %1113 = arith.addf %1107, %1112 : vector<8x32xf32>
    %1114 = vector.extract_strided_slice %978 {offsets = [0, 23], sizes = [8, 1], strides = [1, 1]} : vector<8x32xf32> to vector<8x1xf32>
    %1115 = vector.extract_strided_slice %6 {offsets = [23, 0], sizes = [1, 32], strides = [1, 1]} : vector<32x32xf32> to vector<1x32xf32>
    %1116 = vector.broadcast %1114 : vector<8x1xf32> to vector<8x32xf32>
    %1117 = vector.broadcast %1115 : vector<1x32xf32> to vector<8x32xf32>
    %1118 = arith.mulf %1116, %1117 : vector<8x32xf32>
    %1119 = arith.addf %1113, %1118 : vector<8x32xf32>
    %1120 = vector.extract_strided_slice %978 {offsets = [0, 24], sizes = [8, 1], strides = [1, 1]} : vector<8x32xf32> to vector<8x1xf32>
    %1121 = vector.extract_strided_slice %6 {offsets = [24, 0], sizes = [1, 32], strides = [1, 1]} : vector<32x32xf32> to vector<1x32xf32>
    %1122 = vector.broadcast %1120 : vector<8x1xf32> to vector<8x32xf32>
    %1123 = vector.broadcast %1121 : vector<1x32xf32> to vector<8x32xf32>
    %1124 = arith.mulf %1122, %1123 : vector<8x32xf32>
    %1125 = vector.extract_strided_slice %978 {offsets = [0, 25], sizes = [8, 1], strides = [1, 1]} : vector<8x32xf32> to vector<8x1xf32>
    %1126 = vector.extract_strided_slice %6 {offsets = [25, 0], sizes = [1, 32], strides = [1, 1]} : vector<32x32xf32> to vector<1x32xf32>
    %1127 = vector.broadcast %1125 : vector<8x1xf32> to vector<8x32xf32>
    %1128 = vector.broadcast %1126 : vector<1x32xf32> to vector<8x32xf32>
    %1129 = arith.mulf %1127, %1128 : vector<8x32xf32>
    %1130 = arith.addf %1124, %1129 : vector<8x32xf32>
    %1131 = vector.extract_strided_slice %978 {offsets = [0, 26], sizes = [8, 1], strides = [1, 1]} : vector<8x32xf32> to vector<8x1xf32>
    %1132 = vector.extract_strided_slice %6 {offsets = [26, 0], sizes = [1, 32], strides = [1, 1]} : vector<32x32xf32> to vector<1x32xf32>
    %1133 = vector.broadcast %1131 : vector<8x1xf32> to vector<8x32xf32>
    %1134 = vector.broadcast %1132 : vector<1x32xf32> to vector<8x32xf32>
    %1135 = arith.mulf %1133, %1134 : vector<8x32xf32>
    %1136 = arith.addf %1130, %1135 : vector<8x32xf32>
    %1137 = vector.extract_strided_slice %978 {offsets = [0, 27], sizes = [8, 1], strides = [1, 1]} : vector<8x32xf32> to vector<8x1xf32>
    %1138 = vector.extract_strided_slice %6 {offsets = [27, 0], sizes = [1, 32], strides = [1, 1]} : vector<32x32xf32> to vector<1x32xf32>
    %1139 = vector.broadcast %1137 : vector<8x1xf32> to vector<8x32xf32>
    %1140 = vector.broadcast %1138 : vector<1x32xf32> to vector<8x32xf32>
    %1141 = arith.mulf %1139, %1140 : vector<8x32xf32>
    %1142 = arith.addf %1136, %1141 : vector<8x32xf32>
    %1143 = vector.extract_strided_slice %978 {offsets = [0, 28], sizes = [8, 1], strides = [1, 1]} : vector<8x32xf32> to vector<8x1xf32>
    %1144 = vector.extract_strided_slice %6 {offsets = [28, 0], sizes = [1, 32], strides = [1, 1]} : vector<32x32xf32> to vector<1x32xf32>
    %1145 = vector.broadcast %1143 : vector<8x1xf32> to vector<8x32xf32>
    %1146 = vector.broadcast %1144 : vector<1x32xf32> to vector<8x32xf32>
    %1147 = arith.mulf %1145, %1146 : vector<8x32xf32>
    %1148 = arith.addf %1142, %1147 : vector<8x32xf32>
    %1149 = vector.extract_strided_slice %978 {offsets = [0, 29], sizes = [8, 1], strides = [1, 1]} : vector<8x32xf32> to vector<8x1xf32>
    %1150 = vector.extract_strided_slice %6 {offsets = [29, 0], sizes = [1, 32], strides = [1, 1]} : vector<32x32xf32> to vector<1x32xf32>
    %1151 = vector.broadcast %1149 : vector<8x1xf32> to vector<8x32xf32>
    %1152 = vector.broadcast %1150 : vector<1x32xf32> to vector<8x32xf32>
    %1153 = arith.mulf %1151, %1152 : vector<8x32xf32>
    %1154 = arith.addf %1148, %1153 : vector<8x32xf32>
    %1155 = vector.extract_strided_slice %978 {offsets = [0, 30], sizes = [8, 1], strides = [1, 1]} : vector<8x32xf32> to vector<8x1xf32>
    %1156 = vector.extract_strided_slice %6 {offsets = [30, 0], sizes = [1, 32], strides = [1, 1]} : vector<32x32xf32> to vector<1x32xf32>
    %1157 = vector.broadcast %1155 : vector<8x1xf32> to vector<8x32xf32>
    %1158 = vector.broadcast %1156 : vector<1x32xf32> to vector<8x32xf32>
    %1159 = arith.mulf %1157, %1158 : vector<8x32xf32>
    %1160 = arith.addf %1154, %1159 : vector<8x32xf32>
    %1161 = vector.extract_strided_slice %978 {offsets = [0, 31], sizes = [8, 1], strides = [1, 1]} : vector<8x32xf32> to vector<8x1xf32>
    %1162 = vector.extract_strided_slice %6 {offsets = [31, 0], sizes = [1, 32], strides = [1, 1]} : vector<32x32xf32> to vector<1x32xf32>
    %1163 = vector.broadcast %1161 : vector<8x1xf32> to vector<8x32xf32>
    %1164 = vector.broadcast %1162 : vector<1x32xf32> to vector<8x32xf32>
    %1165 = arith.mulf %1163, %1164 : vector<8x32xf32>
    %1166 = arith.addf %1160, %1165 : vector<8x32xf32>
    %1167 = arith.addf %1025, %1072 : vector<8x32xf32>
    %1168 = arith.addf %1119, %1166 : vector<8x32xf32>
    %1169 = arith.addf %1167, %1168 : vector<8x32xf32>
    %1170 = vector.extract_strided_slice %5 {offsets = [48, 0], sizes = [8, 32], strides = [1, 1]} : vector<64x32xf32> to vector<8x32xf32>
    %1171 = arith.addf %1170, %1169 : vector<8x32xf32>
    %1172 = math.tanh %1171 : vector<8x32xf32>
    %1173 = vector.extract_strided_slice %1172 {offsets = [0, 0], sizes = [8, 1], strides = [1, 1]} : vector<8x32xf32> to vector<8x1xf32>
    %1174 = vector.extract_strided_slice %6 {offsets = [0, 0], sizes = [1, 32], strides = [1, 1]} : vector<32x32xf32> to vector<1x32xf32>
    %1175 = vector.broadcast %1173 : vector<8x1xf32> to vector<8x32xf32>
    %1176 = vector.broadcast %1174 : vector<1x32xf32> to vector<8x32xf32>
    %1177 = arith.mulf %1175, %1176 : vector<8x32xf32>
    %1178 = vector.extract_strided_slice %1172 {offsets = [0, 1], sizes = [8, 1], strides = [1, 1]} : vector<8x32xf32> to vector<8x1xf32>
    %1179 = vector.extract_strided_slice %6 {offsets = [1, 0], sizes = [1, 32], strides = [1, 1]} : vector<32x32xf32> to vector<1x32xf32>
    %1180 = vector.broadcast %1178 : vector<8x1xf32> to vector<8x32xf32>
    %1181 = vector.broadcast %1179 : vector<1x32xf32> to vector<8x32xf32>
    %1182 = arith.mulf %1180, %1181 : vector<8x32xf32>
    %1183 = arith.addf %1177, %1182 : vector<8x32xf32>
    %1184 = vector.extract_strided_slice %1172 {offsets = [0, 2], sizes = [8, 1], strides = [1, 1]} : vector<8x32xf32> to vector<8x1xf32>
    %1185 = vector.extract_strided_slice %6 {offsets = [2, 0], sizes = [1, 32], strides = [1, 1]} : vector<32x32xf32> to vector<1x32xf32>
    %1186 = vector.broadcast %1184 : vector<8x1xf32> to vector<8x32xf32>
    %1187 = vector.broadcast %1185 : vector<1x32xf32> to vector<8x32xf32>
    %1188 = arith.mulf %1186, %1187 : vector<8x32xf32>
    %1189 = arith.addf %1183, %1188 : vector<8x32xf32>
    %1190 = vector.extract_strided_slice %1172 {offsets = [0, 3], sizes = [8, 1], strides = [1, 1]} : vector<8x32xf32> to vector<8x1xf32>
    %1191 = vector.extract_strided_slice %6 {offsets = [3, 0], sizes = [1, 32], strides = [1, 1]} : vector<32x32xf32> to vector<1x32xf32>
    %1192 = vector.broadcast %1190 : vector<8x1xf32> to vector<8x32xf32>
    %1193 = vector.broadcast %1191 : vector<1x32xf32> to vector<8x32xf32>
    %1194 = arith.mulf %1192, %1193 : vector<8x32xf32>
    %1195 = arith.addf %1189, %1194 : vector<8x32xf32>
    %1196 = vector.extract_strided_slice %1172 {offsets = [0, 4], sizes = [8, 1], strides = [1, 1]} : vector<8x32xf32> to vector<8x1xf32>
    %1197 = vector.extract_strided_slice %6 {offsets = [4, 0], sizes = [1, 32], strides = [1, 1]} : vector<32x32xf32> to vector<1x32xf32>
    %1198 = vector.broadcast %1196 : vector<8x1xf32> to vector<8x32xf32>
    %1199 = vector.broadcast %1197 : vector<1x32xf32> to vector<8x32xf32>
    %1200 = arith.mulf %1198, %1199 : vector<8x32xf32>
    %1201 = arith.addf %1195, %1200 : vector<8x32xf32>
    %1202 = vector.extract_strided_slice %1172 {offsets = [0, 5], sizes = [8, 1], strides = [1, 1]} : vector<8x32xf32> to vector<8x1xf32>
    %1203 = vector.extract_strided_slice %6 {offsets = [5, 0], sizes = [1, 32], strides = [1, 1]} : vector<32x32xf32> to vector<1x32xf32>
    %1204 = vector.broadcast %1202 : vector<8x1xf32> to vector<8x32xf32>
    %1205 = vector.broadcast %1203 : vector<1x32xf32> to vector<8x32xf32>
    %1206 = arith.mulf %1204, %1205 : vector<8x32xf32>
    %1207 = arith.addf %1201, %1206 : vector<8x32xf32>
    %1208 = vector.extract_strided_slice %1172 {offsets = [0, 6], sizes = [8, 1], strides = [1, 1]} : vector<8x32xf32> to vector<8x1xf32>
    %1209 = vector.extract_strided_slice %6 {offsets = [6, 0], sizes = [1, 32], strides = [1, 1]} : vector<32x32xf32> to vector<1x32xf32>
    %1210 = vector.broadcast %1208 : vector<8x1xf32> to vector<8x32xf32>
    %1211 = vector.broadcast %1209 : vector<1x32xf32> to vector<8x32xf32>
    %1212 = arith.mulf %1210, %1211 : vector<8x32xf32>
    %1213 = arith.addf %1207, %1212 : vector<8x32xf32>
    %1214 = vector.extract_strided_slice %1172 {offsets = [0, 7], sizes = [8, 1], strides = [1, 1]} : vector<8x32xf32> to vector<8x1xf32>
    %1215 = vector.extract_strided_slice %6 {offsets = [7, 0], sizes = [1, 32], strides = [1, 1]} : vector<32x32xf32> to vector<1x32xf32>
    %1216 = vector.broadcast %1214 : vector<8x1xf32> to vector<8x32xf32>
    %1217 = vector.broadcast %1215 : vector<1x32xf32> to vector<8x32xf32>
    %1218 = arith.mulf %1216, %1217 : vector<8x32xf32>
    %1219 = arith.addf %1213, %1218 : vector<8x32xf32>
    %1220 = vector.extract_strided_slice %1172 {offsets = [0, 8], sizes = [8, 1], strides = [1, 1]} : vector<8x32xf32> to vector<8x1xf32>
    %1221 = vector.extract_strided_slice %6 {offsets = [8, 0], sizes = [1, 32], strides = [1, 1]} : vector<32x32xf32> to vector<1x32xf32>
    %1222 = vector.broadcast %1220 : vector<8x1xf32> to vector<8x32xf32>
    %1223 = vector.broadcast %1221 : vector<1x32xf32> to vector<8x32xf32>
    %1224 = arith.mulf %1222, %1223 : vector<8x32xf32>
    %1225 = vector.extract_strided_slice %1172 {offsets = [0, 9], sizes = [8, 1], strides = [1, 1]} : vector<8x32xf32> to vector<8x1xf32>
    %1226 = vector.extract_strided_slice %6 {offsets = [9, 0], sizes = [1, 32], strides = [1, 1]} : vector<32x32xf32> to vector<1x32xf32>
    %1227 = vector.broadcast %1225 : vector<8x1xf32> to vector<8x32xf32>
    %1228 = vector.broadcast %1226 : vector<1x32xf32> to vector<8x32xf32>
    %1229 = arith.mulf %1227, %1228 : vector<8x32xf32>
    %1230 = arith.addf %1224, %1229 : vector<8x32xf32>
    %1231 = vector.extract_strided_slice %1172 {offsets = [0, 10], sizes = [8, 1], strides = [1, 1]} : vector<8x32xf32> to vector<8x1xf32>
    %1232 = vector.extract_strided_slice %6 {offsets = [10, 0], sizes = [1, 32], strides = [1, 1]} : vector<32x32xf32> to vector<1x32xf32>
    %1233 = vector.broadcast %1231 : vector<8x1xf32> to vector<8x32xf32>
    %1234 = vector.broadcast %1232 : vector<1x32xf32> to vector<8x32xf32>
    %1235 = arith.mulf %1233, %1234 : vector<8x32xf32>
    %1236 = arith.addf %1230, %1235 : vector<8x32xf32>
    %1237 = vector.extract_strided_slice %1172 {offsets = [0, 11], sizes = [8, 1], strides = [1, 1]} : vector<8x32xf32> to vector<8x1xf32>
    %1238 = vector.extract_strided_slice %6 {offsets = [11, 0], sizes = [1, 32], strides = [1, 1]} : vector<32x32xf32> to vector<1x32xf32>
    %1239 = vector.broadcast %1237 : vector<8x1xf32> to vector<8x32xf32>
    %1240 = vector.broadcast %1238 : vector<1x32xf32> to vector<8x32xf32>
    %1241 = arith.mulf %1239, %1240 : vector<8x32xf32>
    %1242 = arith.addf %1236, %1241 : vector<8x32xf32>
    %1243 = vector.extract_strided_slice %1172 {offsets = [0, 12], sizes = [8, 1], strides = [1, 1]} : vector<8x32xf32> to vector<8x1xf32>
    %1244 = vector.extract_strided_slice %6 {offsets = [12, 0], sizes = [1, 32], strides = [1, 1]} : vector<32x32xf32> to vector<1x32xf32>
    %1245 = vector.broadcast %1243 : vector<8x1xf32> to vector<8x32xf32>
    %1246 = vector.broadcast %1244 : vector<1x32xf32> to vector<8x32xf32>
    %1247 = arith.mulf %1245, %1246 : vector<8x32xf32>
    %1248 = arith.addf %1242, %1247 : vector<8x32xf32>
    %1249 = vector.extract_strided_slice %1172 {offsets = [0, 13], sizes = [8, 1], strides = [1, 1]} : vector<8x32xf32> to vector<8x1xf32>
    %1250 = vector.extract_strided_slice %6 {offsets = [13, 0], sizes = [1, 32], strides = [1, 1]} : vector<32x32xf32> to vector<1x32xf32>
    %1251 = vector.broadcast %1249 : vector<8x1xf32> to vector<8x32xf32>
    %1252 = vector.broadcast %1250 : vector<1x32xf32> to vector<8x32xf32>
    %1253 = arith.mulf %1251, %1252 : vector<8x32xf32>
    %1254 = arith.addf %1248, %1253 : vector<8x32xf32>
    %1255 = vector.extract_strided_slice %1172 {offsets = [0, 14], sizes = [8, 1], strides = [1, 1]} : vector<8x32xf32> to vector<8x1xf32>
    %1256 = vector.extract_strided_slice %6 {offsets = [14, 0], sizes = [1, 32], strides = [1, 1]} : vector<32x32xf32> to vector<1x32xf32>
    %1257 = vector.broadcast %1255 : vector<8x1xf32> to vector<8x32xf32>
    %1258 = vector.broadcast %1256 : vector<1x32xf32> to vector<8x32xf32>
    %1259 = arith.mulf %1257, %1258 : vector<8x32xf32>
    %1260 = arith.addf %1254, %1259 : vector<8x32xf32>
    %1261 = vector.extract_strided_slice %1172 {offsets = [0, 15], sizes = [8, 1], strides = [1, 1]} : vector<8x32xf32> to vector<8x1xf32>
    %1262 = vector.extract_strided_slice %6 {offsets = [15, 0], sizes = [1, 32], strides = [1, 1]} : vector<32x32xf32> to vector<1x32xf32>
    %1263 = vector.broadcast %1261 : vector<8x1xf32> to vector<8x32xf32>
    %1264 = vector.broadcast %1262 : vector<1x32xf32> to vector<8x32xf32>
    %1265 = arith.mulf %1263, %1264 : vector<8x32xf32>
    %1266 = arith.addf %1260, %1265 : vector<8x32xf32>
    %1267 = vector.extract_strided_slice %1172 {offsets = [0, 16], sizes = [8, 1], strides = [1, 1]} : vector<8x32xf32> to vector<8x1xf32>
    %1268 = vector.extract_strided_slice %6 {offsets = [16, 0], sizes = [1, 32], strides = [1, 1]} : vector<32x32xf32> to vector<1x32xf32>
    %1269 = vector.broadcast %1267 : vector<8x1xf32> to vector<8x32xf32>
    %1270 = vector.broadcast %1268 : vector<1x32xf32> to vector<8x32xf32>
    %1271 = arith.mulf %1269, %1270 : vector<8x32xf32>
    %1272 = vector.extract_strided_slice %1172 {offsets = [0, 17], sizes = [8, 1], strides = [1, 1]} : vector<8x32xf32> to vector<8x1xf32>
    %1273 = vector.extract_strided_slice %6 {offsets = [17, 0], sizes = [1, 32], strides = [1, 1]} : vector<32x32xf32> to vector<1x32xf32>
    %1274 = vector.broadcast %1272 : vector<8x1xf32> to vector<8x32xf32>
    %1275 = vector.broadcast %1273 : vector<1x32xf32> to vector<8x32xf32>
    %1276 = arith.mulf %1274, %1275 : vector<8x32xf32>
    %1277 = arith.addf %1271, %1276 : vector<8x32xf32>
    %1278 = vector.extract_strided_slice %1172 {offsets = [0, 18], sizes = [8, 1], strides = [1, 1]} : vector<8x32xf32> to vector<8x1xf32>
    %1279 = vector.extract_strided_slice %6 {offsets = [18, 0], sizes = [1, 32], strides = [1, 1]} : vector<32x32xf32> to vector<1x32xf32>
    %1280 = vector.broadcast %1278 : vector<8x1xf32> to vector<8x32xf32>
    %1281 = vector.broadcast %1279 : vector<1x32xf32> to vector<8x32xf32>
    %1282 = arith.mulf %1280, %1281 : vector<8x32xf32>
    %1283 = arith.addf %1277, %1282 : vector<8x32xf32>
    %1284 = vector.extract_strided_slice %1172 {offsets = [0, 19], sizes = [8, 1], strides = [1, 1]} : vector<8x32xf32> to vector<8x1xf32>
    %1285 = vector.extract_strided_slice %6 {offsets = [19, 0], sizes = [1, 32], strides = [1, 1]} : vector<32x32xf32> to vector<1x32xf32>
    %1286 = vector.broadcast %1284 : vector<8x1xf32> to vector<8x32xf32>
    %1287 = vector.broadcast %1285 : vector<1x32xf32> to vector<8x32xf32>
    %1288 = arith.mulf %1286, %1287 : vector<8x32xf32>
    %1289 = arith.addf %1283, %1288 : vector<8x32xf32>
    %1290 = vector.extract_strided_slice %1172 {offsets = [0, 20], sizes = [8, 1], strides = [1, 1]} : vector<8x32xf32> to vector<8x1xf32>
    %1291 = vector.extract_strided_slice %6 {offsets = [20, 0], sizes = [1, 32], strides = [1, 1]} : vector<32x32xf32> to vector<1x32xf32>
    %1292 = vector.broadcast %1290 : vector<8x1xf32> to vector<8x32xf32>
    %1293 = vector.broadcast %1291 : vector<1x32xf32> to vector<8x32xf32>
    %1294 = arith.mulf %1292, %1293 : vector<8x32xf32>
    %1295 = arith.addf %1289, %1294 : vector<8x32xf32>
    %1296 = vector.extract_strided_slice %1172 {offsets = [0, 21], sizes = [8, 1], strides = [1, 1]} : vector<8x32xf32> to vector<8x1xf32>
    %1297 = vector.extract_strided_slice %6 {offsets = [21, 0], sizes = [1, 32], strides = [1, 1]} : vector<32x32xf32> to vector<1x32xf32>
    %1298 = vector.broadcast %1296 : vector<8x1xf32> to vector<8x32xf32>
    %1299 = vector.broadcast %1297 : vector<1x32xf32> to vector<8x32xf32>
    %1300 = arith.mulf %1298, %1299 : vector<8x32xf32>
    %1301 = arith.addf %1295, %1300 : vector<8x32xf32>
    %1302 = vector.extract_strided_slice %1172 {offsets = [0, 22], sizes = [8, 1], strides = [1, 1]} : vector<8x32xf32> to vector<8x1xf32>
    %1303 = vector.extract_strided_slice %6 {offsets = [22, 0], sizes = [1, 32], strides = [1, 1]} : vector<32x32xf32> to vector<1x32xf32>
    %1304 = vector.broadcast %1302 : vector<8x1xf32> to vector<8x32xf32>
    %1305 = vector.broadcast %1303 : vector<1x32xf32> to vector<8x32xf32>
    %1306 = arith.mulf %1304, %1305 : vector<8x32xf32>
    %1307 = arith.addf %1301, %1306 : vector<8x32xf32>
    %1308 = vector.extract_strided_slice %1172 {offsets = [0, 23], sizes = [8, 1], strides = [1, 1]} : vector<8x32xf32> to vector<8x1xf32>
    %1309 = vector.extract_strided_slice %6 {offsets = [23, 0], sizes = [1, 32], strides = [1, 1]} : vector<32x32xf32> to vector<1x32xf32>
    %1310 = vector.broadcast %1308 : vector<8x1xf32> to vector<8x32xf32>
    %1311 = vector.broadcast %1309 : vector<1x32xf32> to vector<8x32xf32>
    %1312 = arith.mulf %1310, %1311 : vector<8x32xf32>
    %1313 = arith.addf %1307, %1312 : vector<8x32xf32>
    %1314 = vector.extract_strided_slice %1172 {offsets = [0, 24], sizes = [8, 1], strides = [1, 1]} : vector<8x32xf32> to vector<8x1xf32>
    %1315 = vector.extract_strided_slice %6 {offsets = [24, 0], sizes = [1, 32], strides = [1, 1]} : vector<32x32xf32> to vector<1x32xf32>
    %1316 = vector.broadcast %1314 : vector<8x1xf32> to vector<8x32xf32>
    %1317 = vector.broadcast %1315 : vector<1x32xf32> to vector<8x32xf32>
    %1318 = arith.mulf %1316, %1317 : vector<8x32xf32>
    %1319 = vector.extract_strided_slice %1172 {offsets = [0, 25], sizes = [8, 1], strides = [1, 1]} : vector<8x32xf32> to vector<8x1xf32>
    %1320 = vector.extract_strided_slice %6 {offsets = [25, 0], sizes = [1, 32], strides = [1, 1]} : vector<32x32xf32> to vector<1x32xf32>
    %1321 = vector.broadcast %1319 : vector<8x1xf32> to vector<8x32xf32>
    %1322 = vector.broadcast %1320 : vector<1x32xf32> to vector<8x32xf32>
    %1323 = arith.mulf %1321, %1322 : vector<8x32xf32>
    %1324 = arith.addf %1318, %1323 : vector<8x32xf32>
    %1325 = vector.extract_strided_slice %1172 {offsets = [0, 26], sizes = [8, 1], strides = [1, 1]} : vector<8x32xf32> to vector<8x1xf32>
    %1326 = vector.extract_strided_slice %6 {offsets = [26, 0], sizes = [1, 32], strides = [1, 1]} : vector<32x32xf32> to vector<1x32xf32>
    %1327 = vector.broadcast %1325 : vector<8x1xf32> to vector<8x32xf32>
    %1328 = vector.broadcast %1326 : vector<1x32xf32> to vector<8x32xf32>
    %1329 = arith.mulf %1327, %1328 : vector<8x32xf32>
    %1330 = arith.addf %1324, %1329 : vector<8x32xf32>
    %1331 = vector.extract_strided_slice %1172 {offsets = [0, 27], sizes = [8, 1], strides = [1, 1]} : vector<8x32xf32> to vector<8x1xf32>
    %1332 = vector.extract_strided_slice %6 {offsets = [27, 0], sizes = [1, 32], strides = [1, 1]} : vector<32x32xf32> to vector<1x32xf32>
    %1333 = vector.broadcast %1331 : vector<8x1xf32> to vector<8x32xf32>
    %1334 = vector.broadcast %1332 : vector<1x32xf32> to vector<8x32xf32>
    %1335 = arith.mulf %1333, %1334 : vector<8x32xf32>
    %1336 = arith.addf %1330, %1335 : vector<8x32xf32>
    %1337 = vector.extract_strided_slice %1172 {offsets = [0, 28], sizes = [8, 1], strides = [1, 1]} : vector<8x32xf32> to vector<8x1xf32>
    %1338 = vector.extract_strided_slice %6 {offsets = [28, 0], sizes = [1, 32], strides = [1, 1]} : vector<32x32xf32> to vector<1x32xf32>
    %1339 = vector.broadcast %1337 : vector<8x1xf32> to vector<8x32xf32>
    %1340 = vector.broadcast %1338 : vector<1x32xf32> to vector<8x32xf32>
    %1341 = arith.mulf %1339, %1340 : vector<8x32xf32>
    %1342 = arith.addf %1336, %1341 : vector<8x32xf32>
    %1343 = vector.extract_strided_slice %1172 {offsets = [0, 29], sizes = [8, 1], strides = [1, 1]} : vector<8x32xf32> to vector<8x1xf32>
    %1344 = vector.extract_strided_slice %6 {offsets = [29, 0], sizes = [1, 32], strides = [1, 1]} : vector<32x32xf32> to vector<1x32xf32>
    %1345 = vector.broadcast %1343 : vector<8x1xf32> to vector<8x32xf32>
    %1346 = vector.broadcast %1344 : vector<1x32xf32> to vector<8x32xf32>
    %1347 = arith.mulf %1345, %1346 : vector<8x32xf32>
    %1348 = arith.addf %1342, %1347 : vector<8x32xf32>
    %1349 = vector.extract_strided_slice %1172 {offsets = [0, 30], sizes = [8, 1], strides = [1, 1]} : vector<8x32xf32> to vector<8x1xf32>
    %1350 = vector.extract_strided_slice %6 {offsets = [30, 0], sizes = [1, 32], strides = [1, 1]} : vector<32x32xf32> to vector<1x32xf32>
    %1351 = vector.broadcast %1349 : vector<8x1xf32> to vector<8x32xf32>
    %1352 = vector.broadcast %1350 : vector<1x32xf32> to vector<8x32xf32>
    %1353 = arith.mulf %1351, %1352 : vector<8x32xf32>
    %1354 = arith.addf %1348, %1353 : vector<8x32xf32>
    %1355 = vector.extract_strided_slice %1172 {offsets = [0, 31], sizes = [8, 1], strides = [1, 1]} : vector<8x32xf32> to vector<8x1xf32>
    %1356 = vector.extract_strided_slice %6 {offsets = [31, 0], sizes = [1, 32], strides = [1, 1]} : vector<32x32xf32> to vector<1x32xf32>
    %1357 = vector.broadcast %1355 : vector<8x1xf32> to vector<8x32xf32>
    %1358 = vector.broadcast %1356 : vector<1x32xf32> to vector<8x32xf32>
    %1359 = arith.mulf %1357, %1358 : vector<8x32xf32>
    %1360 = arith.addf %1354, %1359 : vector<8x32xf32>
    %1361 = arith.addf %1219, %1266 : vector<8x32xf32>
    %1362 = arith.addf %1313, %1360 : vector<8x32xf32>
    %1363 = arith.addf %1361, %1362 : vector<8x32xf32>
    %1364 = vector.extract_strided_slice %5 {offsets = [56, 0], sizes = [8, 32], strides = [1, 1]} : vector<64x32xf32> to vector<8x32xf32>
    %1365 = arith.addf %1364, %1363 : vector<8x32xf32>
    %1366 = math.tanh %1365 : vector<8x32xf32>
    %c0_7 = arith.constant 0 : index
    %c0_8 = arith.constant 0 : index
    %1367 = vector.load %arg4[%c0_7, %c0_8] : memref<1x32xf32, #tpu.memory_space<vmem>>, vector<1x32xf32>
    %1368 = vector.broadcast %1367 : vector<1x32xf32> to vector<8x32xf32>
    %1369 = arith.mulf %1366, %1368 : vector<8x32xf32>
    %cst_9 = arith.constant dense<0.000000e+00> : vector<8xf32>
    %1370 = vector.multi_reduction <add>, %1369, %cst_9 [1] : vector<8x32xf32> to vector<8xf32>
    %1371 = vector.shape_cast %1370 : vector<8xf32> to vector<8x1xf32>
    %c0_10 = arith.constant 0 : index
    %c0_11 = arith.constant 0 : index
    %1372 = vector.load %arg5[%c0_10, %c0_11] : memref<1x1xf32, #tpu.memory_space<vmem>>, vector<1x1xf32>
    %1373 = vector.broadcast %1372 : vector<1x1xf32> to vector<8x1xf32>
    %1374 = arith.addf %1371, %1373 : vector<8x1xf32>
    %1375 = vector.extract_strided_slice %1374 {offsets = [0, 0], sizes = [2, 1], strides = [1, 1]} : vector<8x1xf32> to vector<2x1xf32>
    %c0_12 = arith.constant 0 : index
    %c0_13 = arith.constant 0 : index
    %1376 = vector.load %arg6[%c0_12, %c0_13] : memref<2x1xf32, #tpu.memory_space<vmem>>, vector<2x1xf32>
    tpu.vector_store %arg6[%c0_12, %c0_13], %1375 {strides = array<i32>} : memref<2x1xf32, #tpu.memory_space<vmem>>, vector<2x1xf32>,
    return
  }
}

</mosaic_0001>

<llo_original>
// kernel: rnn_forward_prepared.1
$region0: #{rnn_forward_prepared.1}
  #allocation0 [shape = 'u32[]', space=smem, size = 0x4, offset = 0x4, fixed_abs, tag = 'smem constant byte address 0x4 - core index']
  #allocation1 [shape = 'u32[144,128]{1,0:T(1,128)}', space=vmem, size = 0x12000, scoped, tag = 'internal scratch']
  #allocation2 [shape = 'f32[1,1]{1,0:T(1,128)S(1)}', space=vmem, size = 0x200, scoped, tag = 'scoped memory for rnn_forward_prepared.1']
  %s0 = inlined_call_operand.vmem [shape: f32[64,16], index: 0, kind: input, shape index: {}]
  %s1 = inlined_call_operand.vmem [shape: f32[16,32], index: 1, kind: input, shape index: {}]
  %s2 = inlined_call_operand.vmem [shape: f32[32,32], index: 2, kind: input, shape index: {}]
  %s3 = inlined_call_operand.vmem [shape: f32[1,32], index: 3, kind: input, shape index: {}]
  %s4 = inlined_call_operand.vmem [shape: f32[1,32], index: 4, kind: input, shape index: {}]
  %s5 = inlined_call_operand.<no memory space> [shape: f32[1,1], index: 5, kind: input, shape index: {}]
  %s6 = inlined_call_operand.vmem [shape: f32[2,1], index: 6, kind: output, shape index: {}]
  %s7 = sld [smem:[#allocation0]]
  $region34: #{rnn_forward_prepared.1} parent=0
    _
  %s9 = ssub.s32 1, %s7
  %s10 = scalar_select 0, %s9, %s7
  %v11 = vstv %s5
  %12 = vst [vmem:[#allocation2] sm:$0x1] %v11
  // Predicated region
  $region2: #{rnn_forward_prepared.1} parent=0 // pred_check
    _
  $region3: #{rnn_forward_prepared.1} parent=0 // pred_check_branch
    %14 = sbr.rel (0) target = $region5
  $region4: #{rnn_forward_prepared.1} parent=0 // pred_region
    _
  $region5: #{rnn_forward_prepared.1} parent=0 // pred_fallthru
    _
  // Predicated region
  $region6: #{rnn_forward_prepared.1} parent=0 // pred_check
    _
  $region7: #{rnn_forward_prepared.1} parent=0 // pred_check_branch
    %16 = sbr.rel (0) target = $region9
  $region8: #{rnn_forward_prepared.1} parent=0 // pred_region
    _
  $region9: #{rnn_forward_prepared.1} parent=0 // pred_fallthru
    _
  // Predicated region
  $region10: #{rnn_forward_prepared.1} parent=0 // pred_check
    _
  $region11: #{rnn_forward_prepared.1} parent=0 // pred_check_branch
    %18 = sbr.rel (0) target = $region13
  $region12: #{rnn_forward_prepared.1} parent=0 // pred_region
    _
  $region13: #{rnn_forward_prepared.1} parent=0 // pred_fallthru
    _
  // Predicated region
  $region14: #{rnn_forward_prepared.1} parent=0 // pred_check
    _
  $region15: #{rnn_forward_prepared.1} parent=0 // pred_check_branch
    %20 = sbr.rel (0) target = $region17
  $region16: #{rnn_forward_prepared.1} parent=0 // pred_region
    _
  $region17: #{rnn_forward_prepared.1} parent=0 // pred_fallthru
    _
  // Predicated region
  $region18: #{rnn_forward_prepared.1} parent=0 // pred_check
    _
  $region19: #{rnn_forward_prepared.1} parent=0 // pred_check_branch
    %22 = sbr.rel (0) target = $region21
  $region20: #{rnn_forward_prepared.1} parent=0 // pred_region
    _
  $region21: #{rnn_forward_prepared.1} parent=0 // pred_fallthru
    _
  // Predicated region
  $region22: #{rnn_forward_prepared.1} parent=0 // pred_check
    _
  $region23: #{rnn_forward_prepared.1} parent=0 // pred_check_branch
    %24 = sbr.rel (0) target = $region25
  $region24: #{rnn_forward_prepared.1} parent=0 // pred_region
    _
  $region25: #{rnn_forward_prepared.1} parent=0 // pred_fallthru
    _
  %v25 = vld [vmem:[%s0] sm:$0xff]
  %v26 = vld [vmem:[%s0 + $0x8] sm:$0xff]
  %v27 = vld [vmem:[%s0 + $0x10] sm:$0xff]
  %v28 = vld [vmem:[%s0 + $0x18] sm:$0xff]
  %v29 = vld [vmem:[%s0 + $0x20] sm:$0xff]
  %v30 = vld [vmem:[%s0 + $0x28] sm:$0xff]
  %v31 = vld [vmem:[%s0 + $0x30] sm:$0xff]
  %v32 = vld [vmem:[%s0 + $0x38] sm:$0xff]
  %v33 = vld [vmem:[%s1] sm:$0xff]
  %v34 = vld [vmem:[%s1 + $0x8] sm:$0xff]
  %v35 = vld [vmem:[%s3] sm:$0x1]
  %v37 = vlaneseq
  %v38 = vshrl.u32 %v37, 7
  %v39 = vsub.s32 0, %v38
  %v40 = vrot.slane %v35, %v39
  %vm42 = vcmask 130048
  %v44 = vsel %vm42, %v25, 0
  %v47 = vsel %vm42, %v26, 0
  %v50 = vsel %vm42, %v27, 0
  %v53 = vsel %vm42, %v28, 0
  %v56 = vsel %vm42, %v29, 0
  %v59 = vsel %vm42, %v30, 0
  %v62 = vsel %vm42, %v31, 0
  %v65 = vsel %vm42, %v32, 0
  %67 = vmatprep.subr.mxu0 0.0
  %68 = vmatpush1.msra.mxu0 0.0
  %69 = vmatprep.subr.mxu0 0.0
  %70 = vmatpush1.msra.mxu0 0.0
  %71 = vmatprep.subr.mxu0 0.0
  %72 = vmatpush1.msra.mxu0 0.0
  %73 = vmatprep.subr.mxu0 0.0
  %74 = vmatpush1.msra.mxu0 0.0
  %75 = vmatprep.subr.mxu0 0.0
  %76 = vmatpush1.msra.mxu0 0.0
  %77 = vmatprep.subr.mxu0 0.0
  %78 = vmatpush1.msra.mxu0 0.0
  %79 = vmatprep.subr.mxu0 0.0
  %80 = vmatpush1.msra.mxu0 0.0
  %81 = vmatprep.subr.mxu0 0.0
  %82 = vmatpush1.msra.mxu0 0.0
  %83 = vmatprep.subr.mxu0 0.0
  %84 = vmatpush1.msra.mxu0 0.0
  %85 = vmatprep.subr.mxu0 0.0
  %86 = vmatpush1.msra.mxu0 0.0
  %87 = vmatprep.subr.mxu0 0.0
  %88 = vmatpush1.msra.mxu0 0.0
  %89 = vmatprep.subr.mxu0 0.0
  %90 = vmatpush1.msra.mxu0 0.0
  %91 = vmatprep.subr.mxu0 0.0
  %92 = vmatpush1.msra.mxu0 0.0
  %93 = vmatprep.subr.mxu0 0.0
  %94 = vmatpush1.msra.mxu0 0.0
  %95 = vmatprep.subr.mxu0 0.0
  %v96 = vand.u32 %v34, 4294901760
  %97 = vmatpush1.msra.mxu0 %v96
  %98 = vmatprep.subr.mxu0 0.0
  %v99 = vand.u32 %v33, 4294901760
  %100 = vmatpush1.msra.mxu0 %v99
  %101 = vmatprep.subr.mxu0 0.0
  %102 = vmatpush2.msra.mxu0 0.0
  %103 = vmatprep.subr.mxu0 0.0
  %104 = vmatpush2.msra.mxu0 0.0
  %105 = vmatprep.subr.mxu0 0.0
  %106 = vmatpush2.msra.mxu0 0.0
  %107 = vmatprep.subr.mxu0 0.0
  %108 = vmatpush2.msra.mxu0 0.0
  %109 = vmatprep.subr.mxu0 0.0
  %110 = vmatpush2.msra.mxu0 0.0
  %111 = vmatprep.subr.mxu0 0.0
  %112 = vmatpush2.msra.mxu0 0.0
  %113 = vmatprep.subr.mxu0 0.0
  %114 = vmatpush2.msra.mxu0 0.0
  %115 = vmatprep.subr.mxu0 0.0
  %116 = vmatpush2.msra.mxu0 0.0
  %117 = vmatprep.subr.mxu0 0.0
  %118 = vmatpush2.msra.mxu0 0.0
  %119 = vmatprep.subr.mxu0 0.0
  %120 = vmatpush2.msra.mxu0 0.0
  %121 = vmatprep.subr.mxu0 0.0
  %122 = vmatpush2.msra.mxu0 0.0
  %123 = vmatprep.subr.mxu0 0.0
  %124 = vmatpush2.msra.mxu0 0.0
  %125 = vmatprep.subr.mxu0 0.0
  %126 = vmatpush2.msra.mxu0 0.0
  %127 = vmatprep.subr.mxu0 0.0
  %128 = vmatpush2.msra.mxu0 0.0
  %129 = vmatprep.subr.mxu0 0.0
  %130 = vmatpush2.msra.mxu0 0.0
  %131 = vmatprep.subr.mxu0 0.0
  %132 = vmatpush2.msra.mxu0 0.0
  %133 = vmatprep.mubr.f32.mxu0 0.0
  %v134 = vand.u32 %v44, 4294901760
  %v135 = vsub.f32 %v44, %v134
  %v136 = vand.u32 %v135, 4294901760
  %v137 = vsub.f32 %v135, %v136
  %v138 = vand.u32 %v137, 4294901760
  %139 = vmatmul.mubr.f32.gmra.mxu0 %v138
  %v140 = vpop.f32.mrf.mxu0
  %v141 = vadd.f32 %v40, %v140
  %v142 = vpop.f32.mrf.mxu0
  %143 = vmatprep.mubr.f32.mxu0 0.0
  %v144 = vand.u32 %v47, 4294901760
  %v145 = vsub.f32 %v47, %v144
  %v146 = vand.u32 %v145, 4294901760
  %v147 = vsub.f32 %v145, %v146
  %v148 = vand.u32 %v147, 4294901760
  %149 = vmatmul.mubr.f32.gmra.mxu0 %v148
  %v150 = vpop.f32.mrf.mxu0
  %v151 = vadd.f32 %v40, %v150
  %v152 = vpop.f32.mrf.mxu0
  %153 = vmatprep.mubr.f32.mxu0 0.0
  %v154 = vand.u32 %v50, 4294901760
  %v155 = vsub.f32 %v50, %v154
  %v156 = vand.u32 %v155, 4294901760
  %v157 = vsub.f32 %v155, %v156
  %v158 = vand.u32 %v157, 4294901760
  %159 = vmatmul.mubr.f32.gmra.mxu0 %v158
  %v160 = vpop.f32.mrf.mxu0
  %v161 = vadd.f32 %v40, %v160
  %v162 = vpop.f32.mrf.mxu0
  %163 = vmatprep.mubr.f32.mxu0 0.0
  %v164 = vand.u32 %v53, 4294901760
  %v165 = vsub.f32 %v53, %v164
  %v166 = vand.u32 %v165, 4294901760
  %v167 = vsub.f32 %v165, %v166
  %v168 = vand.u32 %v167, 4294901760
  %169 = vmatmul.mubr.f32.gmra.mxu0 %v168
  %v170 = vpop.f32.mrf.mxu0
  %v171 = vadd.f32 %v40, %v170
  %v172 = vpop.f32.mrf.mxu0
  %173 = vmatprep.mubr.f32.mxu0 0.0
  %v174 = vand.u32 %v56, 4294901760
  %v175 = vsub.f32 %v56, %v174
  %v176 = vand.u32 %v175, 4294901760
  %v177 = vsub.f32 %v175, %v176
  %v178 = vand.u32 %v177, 4294901760
  %179 = vmatmul.mubr.f32.gmra.mxu0 %v178
  %v180 = vpop.f32.mrf.mxu0
  %v181 = vadd.f32 %v40, %v180
  %v182 = vpop.f32.mrf.mxu0
  %183 = vmatprep.mubr.f32.mxu0 0.0
  %v184 = vand.u32 %v59, 4294901760
  %v185 = vsub.f32 %v59, %v184
  %v186 = vand.u32 %v185, 4294901760
  %v187 = vsub.f32 %v185, %v186
  %v188 = vand.u32 %v187, 4294901760
  %189 = vmatmul.mubr.f32.gmra.mxu0 %v188
  %v190 = vpop.f32.mrf.mxu0
  %v191 = vadd.f32 %v40, %v190
  %v192 = vpop.f32.mrf.mxu0
  %193 = vmatprep.mubr.f32.mxu0 0.0
  %v194 = vand.u32 %v62, 4294901760
  %v195 = vsub.f32 %v62, %v194
  %v196 = vand.u32 %v195, 4294901760
  %v197 = vsub.f32 %v195, %v196
  %v198 = vand.u32 %v197, 4294901760
  %199 = vmatmul.mubr.f32.gmra.mxu0 %v198
  %v200 = vpop.f32.mrf.mxu0
  %v201 = vadd.f32 %v40, %v200
  %v202 = vpop.f32.mrf.mxu0
  %203 = vmatprep.mubr.f32.mxu0 0.0
  %v204 = vand.u32 %v65, 4294901760
  %v205 = vsub.f32 %v65, %v204
  %v206 = vand.u32 %v205, 4294901760
  %v207 = vsub.f32 %v205, %v206
  %v208 = vand.u32 %v207, 4294901760
  %209 = vmatmul.mubr.f32.gmra.mxu0 %v208
  %v210 = vpop.f32.mrf.mxu0
  %v211 = vadd.f32 %v40, %v210
  %v212 = vpop.f32.mrf.mxu0
  %213 = vdwg.mxu0
  %214 = vmatprep.subr.mxu0 0.0
  %215 = vmatpush1.msra.mxu0 0.0
  %216 = vmatprep.subr.mxu0 0.0
  %217 = vmatpush1.msra.mxu0 0.0
  %218 = vmatprep.subr.mxu0 0.0
  %219 = vmatpush1.msra.mxu0 0.0
  %220 = vmatprep.subr.mxu0 0.0
  %221 = vmatpush1.msra.mxu0 0.0
  %222 = vmatprep.subr.mxu0 0.0
  %223 = vmatpush1.msra.mxu0 0.0
  %224 = vmatprep.subr.mxu0 0.0
  %225 = vmatpush1.msra.mxu0 0.0
  %226 = vmatprep.subr.mxu0 0.0
  %227 = vmatpush1.msra.mxu0 0.0
  %228 = vmatprep.subr.mxu0 0.0
  %229 = vmatpush1.msra.mxu0 0.0
  %230 = vmatprep.subr.mxu0 0.0
  %231 = vmatpush1.msra.mxu0 0.0
  %232 = vmatprep.subr.mxu0 0.0
  %233 = vmatpush1.msra.mxu0 0.0
  %234 = vmatprep.subr.mxu0 0.0
  %235 = vmatpush1.msra.mxu0 0.0
  %236 = vmatprep.subr.mxu0 0.0
  %237 = vmatpush1.msra.mxu0 0.0
  %238 = vmatprep.subr.mxu0 0.0
  %239 = vmatpush1.msra.mxu0 0.0
  %240 = vmatprep.subr.mxu0 0.0
  %241 = vmatpush1.msra.mxu0 0.0
  %242 = vmatprep.subr.mxu0 0.0
  %v243 = vand.u32 %v34, 4294901760
  %v244 = vsub.f32 %v34, %v243
  %v245 = vand.u32 %v244, 4294901760
  %v246 = vsub.f32 %v244, %v245
  %v247 = vand.u32 %v246, 4294901760
  %248 = vmatpush1.msra.mxu0 %v247
  %249 = vmatprep.subr.mxu0 0.0
  %v250 = vand.u32 %v33, 4294901760
  %v251 = vsub.f32 %v33, %v250
  %v252 = vand.u32 %v251, 4294901760
  %v253 = vsub.f32 %v251, %v252
  %v254 = vand.u32 %v253, 4294901760
  %255 = vmatpush1.msra.mxu0 %v254
  %256 = vmatprep.subr.mxu0 0.0
  %257 = vmatpush2.msra.mxu0 0.0
  %258 = vmatprep.subr.mxu0 0.0
  %259 = vmatpush2.msra.mxu0 0.0
  %260 = vmatprep.subr.mxu0 0.0
  %261 = vmatpush2.msra.mxu0 0.0
  %262 = vmatprep.subr.mxu0 0.0
  %263 = vmatpush2.msra.mxu0 0.0
  %264 = vmatprep.subr.mxu0 0.0
  %265 = vmatpush2.msra.mxu0 0.0
  %266 = vmatprep.subr.mxu0 0.0
  %267 = vmatpush2.msra.mxu0 0.0
  %268 = vmatprep.subr.mxu0 0.0
  %269 = vmatpush2.msra.mxu0 0.0
  %270 = vmatprep.subr.mxu0 0.0
  %271 = vmatpush2.msra.mxu0 0.0
  %272 = vmatprep.subr.mxu0 0.0
  %273 = vmatpush2.msra.mxu0 0.0
  %274 = vmatprep.subr.mxu0 0.0
  %275 = vmatpush2.msra.mxu0 0.0
  %276 = vmatprep.subr.mxu0 0.0
  %277 = vmatpush2.msra.mxu0 0.0
  %278 = vmatprep.subr.mxu0 0.0
  %279 = vmatpush2.msra.mxu0 0.0
  %280 = vmatprep.subr.mxu0 0.0
  %281 = vmatpush2.msra.mxu0 0.0
  %282 = vmatprep.subr.mxu0 0.0
  %283 = vmatpush2.msra.mxu0 0.0
  %284 = vmatprep.subr.mxu0 0.0
  %285 = vmatpush2.msra.mxu0 0.0
  %286 = vmatprep.subr.mxu0 0.0
  %287 = vmatpush2.msra.mxu0 0.0
  %288 = vmatprep.mubr.f32.mxu0 0.0
  %v289 = vand.u32 %v44, 4294901760
  %290 = vmatmul.mubr.f32.gmra.mxu0 %v289
  %v291 = vpop.f32.mrf.mxu0
  %v292 = vadd.f32 %v141, %v291
  %v293 = vpop.f32.mrf.mxu0
  %294 = vmatprep.mubr.f32.mxu0 0.0
  %v295 = vand.u32 %v47, 4294901760
  %296 = vmatmul.mubr.f32.gmra.mxu0 %v295
  %v297 = vpop.f32.mrf.mxu0
  %v298 = vadd.f32 %v151, %v297
  %v299 = vpop.f32.mrf.mxu0
  %300 = vmatprep.mubr.f32.mxu0 0.0
  %v301 = vand.u32 %v50, 4294901760
  %302 = vmatmul.mubr.f32.gmra.mxu0 %v301
  %v303 = vpop.f32.mrf.mxu0
  %v304 = vadd.f32 %v161, %v303
  %v305 = vpop.f32.mrf.mxu0
  %306 = vmatprep.mubr.f32.mxu0 0.0
  %v307 = vand.u32 %v53, 4294901760
  %308 = vmatmul.mubr.f32.gmra.mxu0 %v307
  %v309 = vpop.f32.mrf.mxu0
  %v310 = vadd.f32 %v171, %v309
  %v311 = vpop.f32.mrf.mxu0
  %312 = vmatprep.mubr.f32.mxu0 0.0
  %v313 = vand.u32 %v56, 4294901760
  %314 = vmatmul.mubr.f32.gmra.mxu0 %v313
  %v315 = vpop.f32.mrf.mxu0
  %v316 = vadd.f32 %v181, %v315
  %v317 = vpop.f32.mrf.mxu0
  %318 = vmatprep.mubr.f32.mxu0 0.0
  %v319 = vand.u32 %v59, 4294901760
  %320 = vmatmul.mubr.f32.gmra.mxu0 %v319
  %v321 = vpop.f32.mrf.mxu0
  %v322 = vadd.f32 %v191, %v321
  %v323 = vpop.f32.mrf.mxu0
  %324 = vmatprep.mubr.f32.mxu0 0.0
  %v325 = vand.u32 %v62, 4294901760
  %326 = vmatmul.mubr.f32.gmra.mxu0 %v325
  %v327 = vpop.f32.mrf.mxu0
  %v328 = vadd.f32 %v201, %v327
  %v329 = vpop.f32.mrf.mxu0
  %330 = vmatprep.mubr.f32.mxu0 0.0
  %v331 = vand.u32 %v65, 4294901760
  %332 = vmatmul.mubr.f32.gmra.mxu0 %v331
  %v333 = vpop.f32.mrf.mxu0
  %v334 = vadd.f32 %v211, %v333
  %v335 = vpop.f32.mrf.mxu0
  %336 = vdwg.mxu0
  %337 = vmatprep.subr.mxu0 0.0
  %338 = vmatpush1.msra.mxu0 0.0
  %339 = vmatprep.subr.mxu0 0.0
  %340 = vmatpush1.msra.mxu0 0.0
  %341 = vmatprep.subr.mxu0 0.0
  %342 = vmatpush1.msra.mxu0 0.0
  %343 = vmatprep.subr.mxu0 0.0
  %344 = vmatpush1.msra.mxu0 0.0
  %345 = vmatprep.subr.mxu0 0.0
  %346 = vmatpush1.msra.mxu0 0.0
  %347 = vmatprep.subr.mxu0 0.0
  %348 = vmatpush1.msra.mxu0 0.0
  %349 = vmatprep.subr.mxu0 0.0
  %350 = vmatpush1.msra.mxu0 0.0
  %351 = vmatprep.subr.mxu0 0.0
  %352 = vmatpush1.msra.mxu0 0.0
  %353 = vmatprep.subr.mxu0 0.0
  %354 = vmatpush1.msra.mxu0 0.0
  %355 = vmatprep.subr.mxu0 0.0
  %356 = vmatpush1.msra.mxu0 0.0
  %357 = vmatprep.subr.mxu0 0.0
  %358 = vmatpush1.msra.mxu0 0.0
  %359 = vmatprep.subr.mxu0 0.0
  %360 = vmatpush1.msra.mxu0 0.0
  %361 = vmatprep.subr.mxu0 0.0
  %362 = vmatpush1.msra.mxu0 0.0
  %363 = vmatprep.subr.mxu0 0.0
  %364 = vmatpush1.msra.mxu0 0.0
  %365 = vmatprep.subr.mxu0 0.0
  %v366 = vand.u32 %v34, 4294901760
  %v367 = vsub.f32 %v34, %v366
  %368 = vmatpush1.msra.mxu0 %v367
  %369 = vmatprep.subr.mxu0 0.0
  %v370 = vand.u32 %v33, 4294901760
  %v371 = vsub.f32 %v33, %v370
  %372 = vmatpush1.msra.mxu0 %v371
  %373 = vmatprep.subr.mxu0 0.0
  %374 = vmatpush2.msra.mxu0 0.0
  %375 = vmatprep.subr.mxu0 0.0
  %376 = vmatpush2.msra.mxu0 0.0
  %377 = vmatprep.subr.mxu0 0.0
  %378 = vmatpush2.msra.mxu0 0.0
  %379 = vmatprep.subr.mxu0 0.0
  %380 = vmatpush2.msra.mxu0 0.0
  %381 = vmatprep.subr.mxu0 0.0
  %382 = vmatpush2.msra.mxu0 0.0
  %383 = vmatprep.subr.mxu0 0.0
  %384 = vmatpush2.msra.mxu0 0.0
  %385 = vmatprep.subr.mxu0 0.0
  %386 = vmatpush2.msra.mxu0 0.0
  %387 = vmatprep.subr.mxu0 0.0
  %388 = vmatpush2.msra.mxu0 0.0
  %389 = vmatprep.subr.mxu0 0.0
  %390 = vmatpush2.msra.mxu0 0.0
  %391 = vmatprep.subr.mxu0 0.0
  %392 = vmatpush2.msra.mxu0 0.0
  %393 = vmatprep.subr.mxu0 0.0
  %394 = vmatpush2.msra.mxu0 0.0
  %395 = vmatprep.subr.mxu0 0.0
  %396 = vmatpush2.msra.mxu0 0.0
  %397 = vmatprep.subr.mxu0 0.0
  %398 = vmatpush2.msra.mxu0 0.0
  %399 = vmatprep.subr.mxu0 0.0
  %400 = vmatpush2.msra.mxu0 0.0
  %401 = vmatprep.subr.mxu0 0.0
  %402 = vmatpush2.msra.mxu0 0.0
  %403 = vmatprep.subr.mxu0 0.0
  %404 = vmatpush2.msra.mxu0 0.0
  %405 = vmatprep.mubr.f32.mxu0 0.0
  %v406 = vand.u32 %v44, 4294901760
  %v407 = vsub.f32 %v44, %v406
  %408 = vmatmul.mubr.f32.gmra.mxu0 %v407
  %v409 = vpop.f32.mrf.mxu0
  %v410 = vadd.f32 %v292, %v409
  %v411 = vpop.f32.mrf.mxu0
  %412 = vmatprep.mubr.f32.mxu0 0.0
  %v413 = vand.u32 %v47, 4294901760
  %v414 = vsub.f32 %v47, %v413
  %415 = vmatmul.mubr.f32.gmra.mxu0 %v414
  %v416 = vpop.f32.mrf.mxu0
  %v417 = vadd.f32 %v298, %v416
  %v418 = vpop.f32.mrf.mxu0
  %419 = vmatprep.mubr.f32.mxu0 0.0
  %v420 = vand.u32 %v50, 4294901760
  %v421 = vsub.f32 %v50, %v420
  %422 = vmatmul.mubr.f32.gmra.mxu0 %v421
  %v423 = vpop.f32.mrf.mxu0
  %v424 = vadd.f32 %v304, %v423
  %v425 = vpop.f32.mrf.mxu0
  %426 = vmatprep.mubr.f32.mxu0 0.0
  %v427 = vand.u32 %v53, 4294901760
  %v428 = vsub.f32 %v53, %v427
  %429 = vmatmul.mubr.f32.gmra.mxu0 %v428
  %v430 = vpop.f32.mrf.mxu0
  %v431 = vadd.f32 %v310, %v430
  %v432 = vpop.f32.mrf.mxu0
  %433 = vmatprep.mubr.f32.mxu0 0.0
  %v434 = vand.u32 %v56, 4294901760
  %v435 = vsub.f32 %v56, %v434
  %436 = vmatmul.mubr.f32.gmra.mxu0 %v435
  %v437 = vpop.f32.mrf.mxu0
  %v438 = vadd.f32 %v316, %v437
  %v439 = vpop.f32.mrf.mxu0
  %440 = vmatprep.mubr.f32.mxu0 0.0
  %v441 = vand.u32 %v59, 4294901760
  %v442 = vsub.f32 %v59, %v441
  %443 = vmatmul.mubr.f32.gmra.mxu0 %v442
  %v444 = vpop.f32.mrf.mxu0
  %v445 = vadd.f32 %v322, %v444
  %v446 = vpop.f32.mrf.mxu0
  %447 = vmatprep.mubr.f32.mxu0 0.0
  %v448 = vand.u32 %v62, 4294901760
  %v449 = vsub.f32 %v62, %v448
  %450 = vmatmul.mubr.f32.gmra.mxu0 %v449
  %v451 = vpop.f32.mrf.mxu0
  %v452 = vadd.f32 %v328, %v451
  %v453 = vpop.f32.mrf.mxu0
  %454 = vmatprep.mubr.f32.mxu0 0.0
  %v455 = vand.u32 %v65, 4294901760
  %v456 = vsub.f32 %v65, %v455
  %457 = vmatmul.mubr.f32.gmra.mxu0 %v456
  %v458 = vpop.f32.mrf.mxu0
  %v459 = vadd.f32 %v334, %v458
  %v460 = vpop.f32.mrf.mxu0
  %461 = vdwg.mxu0
  %462 = vmatprep.subr.mxu0 0.0
  %463 = vmatpush1.msra.mxu0 0.0
  %464 = vmatprep.subr.mxu0 0.0
  %465 = vmatpush1.msra.mxu0 0.0
  %466 = vmatprep.subr.mxu0 0.0
  %467 = vmatpush1.msra.mxu0 0.0
  %468 = vmatprep.subr.mxu0 0.0
  %469 = vmatpush1.msra.mxu0 0.0
  %470 = vmatprep.subr.mxu0 0.0
  %471 = vmatpush1.msra.mxu0 0.0
  %472 = vmatprep.subr.mxu0 0.0
  %473 = vmatpush1.msra.mxu0 0.0
  %474 = vmatprep.subr.mxu0 0.0
  %475 = vmatpush1.msra.mxu0 0.0
  %476 = vmatprep.subr.mxu0 0.0
  %477 = vmatpush1.msra.mxu0 0.0
  %478 = vmatprep.subr.mxu0 0.0
  %479 = vmatpush1.msra.mxu0 0.0
  %480 = vmatprep.subr.mxu0 0.0
  %481 = vmatpush1.msra.mxu0 0.0
  %482 = vmatprep.subr.mxu0 0.0
  %483 = vmatpush1.msra.mxu0 0.0
  %484 = vmatprep.subr.mxu0 0.0
  %485 = vmatpush1.msra.mxu0 0.0
  %486 = vmatprep.subr.mxu0 0.0
  %487 = vmatpush1.msra.mxu0 0.0
  %488 = vmatprep.subr.mxu0 0.0
  %489 = vmatpush1.msra.mxu0 0.0
  %490 = vmatprep.subr.mxu0 0.0
  %v491 = vand.u32 %v34, 4294901760
  %492 = vmatpush1.msra.mxu0 %v491
  %493 = vmatprep.subr.mxu0 0.0
  %v494 = vand.u32 %v33, 4294901760
  %495 = vmatpush1.msra.mxu0 %v494
  %496 = vmatprep.subr.mxu0 0.0
  %497 = vmatpush2.msra.mxu0 0.0
  %498 = vmatprep.subr.mxu0 0.0
  %499 = vmatpush2.msra.mxu0 0.0
  %500 = vmatprep.subr.mxu0 0.0
  %501 = vmatpush2.msra.mxu0 0.0
  %502 = vmatprep.subr.mxu0 0.0
  %503 = vmatpush2.msra.mxu0 0.0
  %504 = vmatprep.subr.mxu0 0.0
  %505 = vmatpush2.msra.mxu0 0.0
  %506 = vmatprep.subr.mxu0 0.0
  %507 = vmatpush2.msra.mxu0 0.0
  %508 = vmatprep.subr.mxu0 0.0
  %509 = vmatpush2.msra.mxu0 0.0
  %510 = vmatprep.subr.mxu0 0.0
  %511 = vmatpush2.msra.mxu0 0.0
  %512 = vmatprep.subr.mxu0 0.0
  %513 = vmatpush2.msra.mxu0 0.0
  %514 = vmatprep.subr.mxu0 0.0
  %515 = vmatpush2.msra.mxu0 0.0
  %516 = vmatprep.subr.mxu0 0.0
  %517 = vmatpush2.msra.mxu0 0.0
  %518 = vmatprep.subr.mxu0 0.0
  %519 = vmatpush2.msra.mxu0 0.0
  %520 = vmatprep.subr.mxu0 0.0
  %521 = vmatpush2.msra.mxu0 0.0
  %522 = vmatprep.subr.mxu0 0.0
  %523 = vmatpush2.msra.mxu0 0.0
  %524 = vmatprep.subr.mxu0 0.0
  %525 = vmatpush2.msra.mxu0 0.0
  %526 = vmatprep.subr.mxu0 0.0
  %527 = vmatpush2.msra.mxu0 0.0
  %528 = vmatprep.mubr.f32.mxu0 0.0
  %v529 = vand.u32 %v44, 4294901760
  %v530 = vsub.f32 %v44, %v529
  %v531 = vand.u32 %v530, 4294901760
  %532 = vmatmul.mubr.f32.gmra.mxu0 %v531
  %v533 = vpop.f32.mrf.mxu0
  %v534 = vadd.f32 %v410, %v533
  %v535 = vpop.f32.mrf.mxu0
  %536 = vmatprep.mubr.f32.mxu0 0.0
  %v537 = vand.u32 %v47, 4294901760
  %v538 = vsub.f32 %v47, %v537
  %v539 = vand.u32 %v538, 4294901760
  %540 = vmatmul.mubr.f32.gmra.mxu0 %v539
  %v541 = vpop.f32.mrf.mxu0
  %v542 = vadd.f32 %v417, %v541
  %v543 = vpop.f32.mrf.mxu0
  %544 = vmatprep.mubr.f32.mxu0 0.0
  %v545 = vand.u32 %v50, 4294901760
  %v546 = vsub.f32 %v50, %v545
  %v547 = vand.u32 %v546, 4294901760
  %548 = vmatmul.mubr.f32.gmra.mxu0 %v547
  %v549 = vpop.f32.mrf.mxu0
  %v550 = vadd.f32 %v424, %v549
  %v551 = vpop.f32.mrf.mxu0
  %552 = vmatprep.mubr.f32.mxu0 0.0
  %v553 = vand.u32 %v53, 4294901760
  %v554 = vsub.f32 %v53, %v553
  %v555 = vand.u32 %v554, 4294901760
  %556 = vmatmul.mubr.f32.gmra.mxu0 %v555
  %v557 = vpop.f32.mrf.mxu0
  %v558 = vadd.f32 %v431, %v557
  %v559 = vpop.f32.mrf.mxu0
  %560 = vmatprep.mubr.f32.mxu0 0.0
  %v561 = vand.u32 %v56, 4294901760
  %v562 = vsub.f32 %v56, %v561
  %v563 = vand.u32 %v562, 4294901760
  %564 = vmatmul.mubr.f32.gmra.mxu0 %v563
  %v565 = vpop.f32.mrf.mxu0
  %v566 = vadd.f32 %v438, %v565
  %v567 = vpop.f32.mrf.mxu0
  %568 = vmatprep.mubr.f32.mxu0 0.0
  %v569 = vand.u32 %v59, 4294901760
  %v570 = vsub.f32 %v59, %v569
  %v571 = vand.u32 %v570, 4294901760
  %572 = vmatmul.mubr.f32.gmra.mxu0 %v571
  %v573 = vpop.f32.mrf.mxu0
  %v574 = vadd.f32 %v445, %v573
  %v575 = vpop.f32.mrf.mxu0
  %576 = vmatprep.mubr.f32.mxu0 0.0
  %v577 = vand.u32 %v62, 4294901760
  %v578 = vsub.f32 %v62, %v577
  %v579 = vand.u32 %v578, 4294901760
  %580 = vmatmul.mubr.f32.gmra.mxu0 %v579
  %v581 = vpop.f32.mrf.mxu0
  %v582 = vadd.f32 %v452, %v581
  %v583 = vpop.f32.mrf.mxu0
  %584 = vmatprep.mubr.f32.mxu0 0.0
  %v585 = vand.u32 %v65, 4294901760
  %v586 = vsub.f32 %v65, %v585
  %v587 = vand.u32 %v586, 4294901760
  %588 = vmatmul.mubr.f32.gmra.mxu0 %v587
  %v589 = vpop.f32.mrf.mxu0
  %v590 = vadd.f32 %v459, %v589
  %v591 = vpop.f32.mrf.mxu0
  %592 = vdwg.mxu0
  %593 = vmatprep.subr.mxu0 0.0
  %594 = vmatpush1.msra.mxu0 0.0
  %595 = vmatprep.subr.mxu0 0.0
  %596 = vmatpush1.msra.mxu0 0.0
  %597 = vmatprep.subr.mxu0 0.0
  %598 = vmatpush1.msra.mxu0 0.0
  %599 = vmatprep.subr.mxu0 0.0
  %600 = vmatpush1.msra.mxu0 0.0
  %601 = vmatprep.subr.mxu0 0.0
  %602 = vmatpush1.msra.mxu0 0.0
  %603 = vmatprep.subr.mxu0 0.0
  %604 = vmatpush1.msra.mxu0 0.0
  %605 = vmatprep.subr.mxu0 0.0
  %606 = vmatpush1.msra.mxu0 0.0
  %607 = vmatprep.subr.mxu0 0.0
  %608 = vmatpush1.msra.mxu0 0.0
  %609 = vmatprep.subr.mxu0 0.0
  %610 = vmatpush1.msra.mxu0 0.0
  %611 = vmatprep.subr.mxu0 0.0
  %612 = vmatpush1.msra.mxu0 0.0
  %613 = vmatprep.subr.mxu0 0.0
  %614 = vmatpush1.msra.mxu0 0.0
  %615 = vmatprep.subr.mxu0 0.0
  %616 = vmatpush1.msra.mxu0 0.0
  %617 = vmatprep.subr.mxu0 0.0
  %618 = vmatpush1.msra.mxu0 0.0
  %619 = vmatprep.subr.mxu0 0.0
  %620 = vmatpush1.msra.mxu0 0.0
  %621 = vmatprep.subr.mxu0 0.0
  %v622 = vand.u32 %v34, 4294901760
  %v623 = vsub.f32 %v34, %v622
  %v624 = vand.u32 %v623, 4294901760
  %625 = vmatpush1.msra.mxu0 %v624
  %626 = vmatprep.subr.mxu0 0.0
  %v627 = vand.u32 %v33, 4294901760
  %v628 = vsub.f32 %v33, %v627
  %v629 = vand.u32 %v628, 4294901760
  %630 = vmatpush1.msra.mxu0 %v629
  %631 = vmatprep.subr.mxu0 0.0
  %632 = vmatpush2.msra.mxu0 0.0
  %633 = vmatprep.subr.mxu0 0.0
  %634 = vmatpush2.msra.mxu0 0.0
  %635 = vmatprep.subr.mxu0 0.0
  %636 = vmatpush2.msra.mxu0 0.0
  %637 = vmatprep.subr.mxu0 0.0
  %638 = vmatpush2.msra.mxu0 0.0
  %639 = vmatprep.subr.mxu0 0.0
  %640 = vmatpush2.msra.mxu0 0.0
  %641 = vmatprep.subr.mxu0 0.0
  %642 = vmatpush2.msra.mxu0 0.0
  %643 = vmatprep.subr.mxu0 0.0
  %644 = vmatpush2.msra.mxu0 0.0
  %645 = vmatprep.subr.mxu0 0.0
  %646 = vmatpush2.msra.mxu0 0.0
  %647 = vmatprep.subr.mxu0 0.0
  %648 = vmatpush2.msra.mxu0 0.0
  %649 = vmatprep.subr.mxu0 0.0
  %650 = vmatpush2.msra.mxu0 0.0
  %651 = vmatprep.subr.mxu0 0.0
  %652 = vmatpush2.msra.mxu0 0.0
  %653 = vmatprep.subr.mxu0 0.0
  %654 = vmatpush2.msra.mxu0 0.0
  %655 = vmatprep.subr.mxu0 0.0
  %656 = vmatpush2.msra.mxu0 0.0
  %657 = vmatprep.subr.mxu0 0.0
  %658 = vmatpush2.msra.mxu0 0.0
  %659 = vmatprep.subr.mxu0 0.0
  %660 = vmatpush2.msra.mxu0 0.0
  %661 = vmatprep.subr.mxu0 0.0
  %662 = vmatpush2.msra.mxu0 0.0
  %663 = vmatprep.mubr.f32.mxu0 0.0
  %v664 = vand.u32 %v44, 4294901760
  %665 = vmatmul.mubr.f32.gmra.mxu0 %v664
  %v666 = vpop.f32.mrf.mxu0
  %v667 = vadd.f32 %v534, %v666
  %v668 = vpop.f32.mrf.mxu0
  %669 = vmatprep.mubr.f32.mxu0 0.0
  %v670 = vand.u32 %v47, 4294901760
  %671 = vmatmul.mubr.f32.gmra.mxu0 %v670
  %v672 = vpop.f32.mrf.mxu0
  %v673 = vadd.f32 %v542, %v672
  %v674 = vpop.f32.mrf.mxu0
  %675 = vmatprep.mubr.f32.mxu0 0.0
  %v676 = vand.u32 %v50, 4294901760
  %677 = vmatmul.mubr.f32.gmra.mxu0 %v676
  %v678 = vpop.f32.mrf.mxu0
  %v679 = vadd.f32 %v550, %v678
  %v680 = vpop.f32.mrf.mxu0
  %681 = vmatprep.mubr.f32.mxu0 0.0
  %v682 = vand.u32 %v53, 4294901760
  %683 = vmatmul.mubr.f32.gmra.mxu0 %v682
  %v684 = vpop.f32.mrf.mxu0
  %v685 = vadd.f32 %v558, %v684
  %v686 = vpop.f32.mrf.mxu0
  %687 = vmatprep.mubr.f32.mxu0 0.0
  %v688 = vand.u32 %v56, 4294901760
  %689 = vmatmul.mubr.f32.gmra.mxu0 %v688
  %v690 = vpop.f32.mrf.mxu0
  %v691 = vadd.f32 %v566, %v690
  %v692 = vpop.f32.mrf.mxu0
  %693 = vmatprep.mubr.f32.mxu0 0.0
  %v694 = vand.u32 %v59, 4294901760
  %695 = vmatmul.mubr.f32.gmra.mxu0 %v694
  %v696 = vpop.f32.mrf.mxu0
  %v697 = vadd.f32 %v574, %v696
  %v698 = vpop.f32.mrf.mxu0
  %699 = vmatprep.mubr.f32.mxu0 0.0
  %v700 = vand.u32 %v62, 4294901760
  %701 = vmatmul.mubr.f32.gmra.mxu0 %v700
  %v702 = vpop.f32.mrf.mxu0
  %v703 = vadd.f32 %v582, %v702
  %v704 = vpop.f32.mrf.mxu0
  %705 = vmatprep.mubr.f32.mxu0 0.0
  %v706 = vand.u32 %v65, 4294901760
  %707 = vmatmul.mubr.f32.gmra.mxu0 %v706
  %v708 = vpop.f32.mrf.mxu0
  %v709 = vadd.f32 %v590, %v708
  %v710 = vpop.f32.mrf.mxu0
  %711 = vdwg.mxu0
  %712 = vmatprep.subr.mxu0 0.0
  %713 = vmatpush1.msra.mxu0 0.0
  %714 = vmatprep.subr.mxu0 0.0
  %715 = vmatpush1.msra.mxu0 0.0
  %716 = vmatprep.subr.mxu0 0.0
  %717 = vmatpush1.msra.mxu0 0.0
  %718 = vmatprep.subr.mxu0 0.0
  %719 = vmatpush1.msra.mxu0 0.0
  %720 = vmatprep.subr.mxu0 0.0
  %721 = vmatpush1.msra.mxu0 0.0
  %722 = vmatprep.subr.mxu0 0.0
  %723 = vmatpush1.msra.mxu0 0.0
  %724 = vmatprep.subr.mxu0 0.0
  %725 = vmatpush1.msra.mxu0 0.0
  %726 = vmatprep.subr.mxu0 0.0
  %727 = vmatpush1.msra.mxu0 0.0
  %728 = vmatprep.subr.mxu0 0.0
  %729 = vmatpush1.msra.mxu0 0.0
  %730 = vmatprep.subr.mxu0 0.0
  %731 = vmatpush1.msra.mxu0 0.0
  %732 = vmatprep.subr.mxu0 0.0
  %733 = vmatpush1.msra.mxu0 0.0
  %734 = vmatprep.subr.mxu0 0.0
  %735 = vmatpush1.msra.mxu0 0.0
  %736 = vmatprep.subr.mxu0 0.0
  %737 = vmatpush1.msra.mxu0 0.0
  %738 = vmatprep.subr.mxu0 0.0
  %739 = vmatpush1.msra.mxu0 0.0
  %740 = vmatprep.subr.mxu0 0.0
  %v741 = vand.u32 %v34, 4294901760
  %742 = vmatpush1.msra.mxu0 %v741
  %743 = vmatprep.subr.mxu0 0.0
  %v744 = vand.u32 %v33, 4294901760
  %745 = vmatpush1.msra.mxu0 %v744
  %746 = vmatprep.subr.mxu0 0.0
  %747 = vmatpush2.msra.mxu0 0.0
  %748 = vmatprep.subr.mxu0 0.0
  %749 = vmatpush2.msra.mxu0 0.0
  %750 = vmatprep.subr.mxu0 0.0
  %751 = vmatpush2.msra.mxu0 0.0
  %752 = vmatprep.subr.mxu0 0.0
  %753 = vmatpush2.msra.mxu0 0.0
  %754 = vmatprep.subr.mxu0 0.0
  %755 = vmatpush2.msra.mxu0 0.0
  %756 = vmatprep.subr.mxu0 0.0
  %757 = vmatpush2.msra.mxu0 0.0
  %758 = vmatprep.subr.mxu0 0.0
  %759 = vmatpush2.msra.mxu0 0.0
  %760 = vmatprep.subr.mxu0 0.0
  %761 = vmatpush2.msra.mxu0 0.0
  %762 = vmatprep.subr.mxu0 0.0
  %763 = vmatpush2.msra.mxu0 0.0
  %764 = vmatprep.subr.mxu0 0.0
  %765 = vmatpush2.msra.mxu0 0.0
  %766 = vmatprep.subr.mxu0 0.0
  %767 = vmatpush2.msra.mxu0 0.0
  %768 = vmatprep.subr.mxu0 0.0
  %769 = vmatpush2.msra.mxu0 0.0
  %770 = vmatprep.subr.mxu0 0.0
  %771 = vmatpush2.msra.mxu0 0.0
  %772 = vmatprep.subr.mxu0 0.0
  %773 = vmatpush2.msra.mxu0 0.0
  %774 = vmatprep.subr.mxu0 0.0
  %775 = vmatpush2.msra.mxu0 0.0
  %776 = vmatprep.subr.mxu0 0.0
  %777 = vmatpush2.msra.mxu0 0.0
  %778 = vmatprep.mubr.f32.mxu0 0.0
  %v779 = vand.u32 %v44, 4294901760
  %780 = vmatmul.mubr.f32.gmra.mxu0 %v779
  %v781 = vpop.f32.mrf.mxu0
  %v782 = vadd.f32 %v667, %v781
  %v783 = vpop.f32.mrf.mxu0
  %784 = vmatprep.mubr.f32.mxu0 0.0
  %v785 = vand.u32 %v47, 4294901760
  %786 = vmatmul.mubr.f32.gmra.mxu0 %v785
  %v787 = vpop.f32.mrf.mxu0
  %v788 = vadd.f32 %v673, %v787
  %v789 = vpop.f32.mrf.mxu0
  %790 = vmatprep.mubr.f32.mxu0 0.0
  %v791 = vand.u32 %v50, 4294901760
  %792 = vmatmul.mubr.f32.gmra.mxu0 %v791
  %v793 = vpop.f32.mrf.mxu0
  %v794 = vadd.f32 %v679, %v793
  %v795 = vpop.f32.mrf.mxu0
  %796 = vmatprep.mubr.f32.mxu0 0.0
  %v797 = vand.u32 %v53, 4294901760
  %798 = vmatmul.mubr.f32.gmra.mxu0 %v797
  %v799 = vpop.f32.mrf.mxu0
  %v800 = vadd.f32 %v685, %v799
  %v801 = vpop.f32.mrf.mxu0
  %802 = vmatprep.mubr.f32.mxu0 0.0
  %v803 = vand.u32 %v56, 4294901760
  %804 = vmatmul.mubr.f32.gmra.mxu0 %v803
  %v805 = vpop.f32.mrf.mxu0
  %v806 = vadd.f32 %v691, %v805
  %v807 = vpop.f32.mrf.mxu0
  %808 = vmatprep.mubr.f32.mxu0 0.0
  %v809 = vand.u32 %v59, 4294901760
  %810 = vmatmul.mubr.f32.gmra.mxu0 %v809
  %v811 = vpop.f32.mrf.mxu0
  %v812 = vadd.f32 %v697, %v811
  %v813 = vpop.f32.mrf.mxu0
  %814 = vmatprep.mubr.f32.mxu0 0.0
  %v815 = vand.u32 %v62, 4294901760
  %816 = vmatmul.mubr.f32.gmra.mxu0 %v815
  %v817 = vpop.f32.mrf.mxu0
  %v818 = vadd.f32 %v703, %v817
  %v819 = vpop.f32.mrf.mxu0
  %820 = vmatprep.mubr.f32.mxu0 0.0
  %v821 = vand.u32 %v65, 4294901760
  %822 = vmatmul.mubr.f32.gmra.mxu0 %v821
  %v823 = vpop.f32.mrf.mxu0
  %v824 = vadd.f32 %v709, %v823
  %v825 = vpop.f32.mrf.mxu0
  %826 = vdwg.mxu0
  %v827 = vld [vmem:[%s2] sm:$0xff]
  %v828 = vld [vmem:[%s2 + $0x8] sm:$0xff]
  %v829 = vld [vmem:[%s2 + $0x10] sm:$0xff]
  %v830 = vld [vmem:[%s2 + $0x18] sm:$0xff]
  %v831 = vtanh.pop %v782
  %833 = vset.pattern.permute.xlu0 0
  %834 = vperm.xlu0 %833, %v831
  %v835 = vpop.permute.xlu0 %834
  %v837 = vlaneseq
  %v838 = vshrl.u32 %v837, 7
  %v839 = vsub.s32 0, %v838
  %v840 = vrot.slane %v827, %v839
  %v841 = vmul.f32 %v835, %v840
  %842 = vset.pattern.permute.xlu0 1
  %843 = vperm.xlu0 %842, %v831
  %v844 = vpop.permute.xlu0 %843
  %v846 = vlaneseq
  %v847 = vshrl.u32 %v846, 7
  %v848 = vsub.s32 1, %v847
  %v849 = vrot.slane %v827, %v848
  %v850 = vmul.f32 %v844, %v849
  %v851 = vadd.f32 %v841, %v850
  %852 = vset.pattern.permute.xlu0 2
  %853 = vperm.xlu0 %852, %v831
  %v854 = vpop.permute.xlu0 %853
  %v856 = vlaneseq
  %v857 = vshrl.u32 %v856, 7
  %v858 = vsub.s32 2, %v857
  %v859 = vrot.slane %v827, %v858
  %v860 = vmul.f32 %v854, %v859
  %v861 = vadd.f32 %v851, %v860
  %862 = vset.pattern.permute.xlu0 3
  %863 = vperm.xlu0 %862, %v831
  %v864 = vpop.permute.xlu0 %863
  %v866 = vlaneseq
  %v867 = vshrl.u32 %v866, 7
  %v868 = vsub.s32 3, %v867
  %v869 = vrot.slane %v827, %v868
  %v870 = vmul.f32 %v864, %v869
  %v871 = vadd.f32 %v861, %v870
  %872 = vset.pattern.permute.xlu0 4
  %873 = vperm.xlu0 %872, %v831
  %v874 = vpop.permute.xlu0 %873
  %v876 = vlaneseq
  %v877 = vshrl.u32 %v876, 7
  %v878 = vsub.s32 4, %v877
  %v879 = vrot.slane %v827, %v878
  %v880 = vmul.f32 %v874, %v879
  %v881 = vadd.f32 %v871, %v880
  %882 = vset.pattern.permute.xlu0 5
  %883 = vperm.xlu0 %882, %v831
  %v884 = vpop.permute.xlu0 %883
  %v886 = vlaneseq
  %v887 = vshrl.u32 %v886, 7
  %v888 = vsub.s32 5, %v887
  %v889 = vrot.slane %v827, %v888
  %v890 = vmul.f32 %v884, %v889
  %v891 = vadd.f32 %v881, %v890
  %892 = vset.pattern.permute.xlu0 6
  %893 = vperm.xlu0 %892, %v831
  %v894 = vpop.permute.xlu0 %893
  %v896 = vlaneseq
  %v897 = vshrl.u32 %v896, 7
  %v898 = vsub.s32 6, %v897
  %v899 = vrot.slane %v827, %v898
  %v900 = vmul.f32 %v894, %v899
  %v901 = vadd.f32 %v891, %v900
  %902 = vset.pattern.permute.xlu0 7
  %903 = vperm.xlu0 %902, %v831
  %v904 = vpop.permute.xlu0 %903
  %v906 = vlaneseq
  %v907 = vshrl.u32 %v906, 7
  %v908 = vsub.s32 7, %v907
  %v909 = vrot.slane %v827, %v908
  %v910 = vmul.f32 %v904, %v909
  %v911 = vadd.f32 %v901, %v910
  %912 = vset.pattern.permute.xlu0 8
  %913 = vperm.xlu0 %912, %v831
  %v914 = vpop.permute.xlu0 %913
  %v916 = vlaneseq
  %v917 = vshrl.u32 %v916, 7
  %v918 = vsub.s32 0, %v917
  %v919 = vrot.slane %v828, %v918
  %v920 = vmul.f32 %v914, %v919
  %921 = vset.pattern.permute.xlu0 9
  %922 = vperm.xlu0 %921, %v831
  %v923 = vpop.permute.xlu0 %922
  %v925 = vlaneseq
  %v926 = vshrl.u32 %v925, 7
  %v927 = vsub.s32 1, %v926
  %v928 = vrot.slane %v828, %v927
  %v929 = vmul.f32 %v923, %v928
  %v930 = vadd.f32 %v920, %v929
  %931 = vset.pattern.permute.xlu0 10
  %932 = vperm.xlu0 %931, %v831
  %v933 = vpop.permute.xlu0 %932
  %v935 = vlaneseq
  %v936 = vshrl.u32 %v935, 7
  %v937 = vsub.s32 2, %v936
  %v938 = vrot.slane %v828, %v937
  %v939 = vmul.f32 %v933, %v938
  %v940 = vadd.f32 %v930, %v939
  %941 = vset.pattern.permute.xlu0 11
  %942 = vperm.xlu0 %941, %v831
  %v943 = vpop.permute.xlu0 %942
  %v945 = vlaneseq
  %v946 = vshrl.u32 %v945, 7
  %v947 = vsub.s32 3, %v946
  %v948 = vrot.slane %v828, %v947
  %v949 = vmul.f32 %v943, %v948
  %v950 = vadd.f32 %v940, %v949
  %951 = vset.pattern.permute.xlu0 12
  %952 = vperm.xlu0 %951, %v831
  %v953 = vpop.permute.xlu0 %952
  %v955 = vlaneseq
  %v956 = vshrl.u32 %v955, 7
  %v957 = vsub.s32 4, %v956
  %v958 = vrot.slane %v828, %v957
  %v959 = vmul.f32 %v953, %v958
  %v960 = vadd.f32 %v950, %v959
  %961 = vset.pattern.permute.xlu0 13
  %962 = vperm.xlu0 %961, %v831
  %v963 = vpop.permute.xlu0 %962
  %v965 = vlaneseq
  %v966 = vshrl.u32 %v965, 7
  %v967 = vsub.s32 5, %v966
  %v968 = vrot.slane %v828, %v967
  %v969 = vmul.f32 %v963, %v968
  %v970 = vadd.f32 %v960, %v969
  %971 = vset.pattern.permute.xlu0 14
  %972 = vperm.xlu0 %971, %v831
  %v973 = vpop.permute.xlu0 %972
  %v975 = vlaneseq
  %v976 = vshrl.u32 %v975, 7
  %v977 = vsub.s32 6, %v976
  %v978 = vrot.slane %v828, %v977
  %v979 = vmul.f32 %v973, %v978
  %v980 = vadd.f32 %v970, %v979
  %981 = vset.pattern.permute.xlu0 15
  %982 = vperm.xlu0 %981, %v831
  %v983 = vpop.permute.xlu0 %982
  %v985 = vlaneseq
  %v986 = vshrl.u32 %v985, 7
  %v987 = vsub.s32 7, %v986
  %v988 = vrot.slane %v828, %v987
  %v989 = vmul.f32 %v983, %v988
  %v990 = vadd.f32 %v980, %v989
  %991 = vset.pattern.permute.xlu0 16
  %992 = vperm.xlu0 %991, %v831
  %v993 = vpop.permute.xlu0 %992
  %v995 = vlaneseq
  %v996 = vshrl.u32 %v995, 7
  %v997 = vsub.s32 0, %v996
  %v998 = vrot.slane %v829, %v997
  %v999 = vmul.f32 %v993, %v998
  %1000 = vset.pattern.permute.xlu0 17
  %1001 = vperm.xlu0 %1000, %v831
  %v1002 = vpop.permute.xlu0 %1001
  %v1004 = vlaneseq
  %v1005 = vshrl.u32 %v1004, 7
  %v1006 = vsub.s32 1, %v1005
  %v1007 = vrot.slane %v829, %v1006
  %v1008 = vmul.f32 %v1002, %v1007
  %v1009 = vadd.f32 %v999, %v1008
  %1010 = vset.pattern.permute.xlu0 18
  %1011 = vperm.xlu0 %1010, %v831
  %v1012 = vpop.permute.xlu0 %1011
  %v1014 = vlaneseq
  %v1015 = vshrl.u32 %v1014, 7
  %v1016 = vsub.s32 2, %v1015
  %v1017 = vrot.slane %v829, %v1016
  %v1018 = vmul.f32 %v1012, %v1017
  %v1019 = vadd.f32 %v1009, %v1018
  %1020 = vset.pattern.permute.xlu0 19
  %1021 = vperm.xlu0 %1020, %v831
  %v1022 = vpop.permute.xlu0 %1021
  %v1024 = vlaneseq
  %v1025 = vshrl.u32 %v1024, 7
  %v1026 = vsub.s32 3, %v1025
  %v1027 = vrot.slane %v829, %v1026
  %v1028 = vmul.f32 %v1022, %v1027
  %v1029 = vadd.f32 %v1019, %v1028
  %1030 = vset.pattern.permute.xlu0 20
  %1031 = vperm.xlu0 %1030, %v831
  %v1032 = vpop.permute.xlu0 %1031
  %v1034 = vlaneseq
  %v1035 = vshrl.u32 %v1034, 7
  %v1036 = vsub.s32 4, %v1035
  %v1037 = vrot.slane %v829, %v1036
  %v1038 = vmul.f32 %v1032, %v1037
  %v1039 = vadd.f32 %v1029, %v1038
  %1040 = vset.pattern.permute.xlu0 21
  %1041 = vperm.xlu0 %1040, %v831
  %v1042 = vpop.permute.xlu0 %1041
  %v1044 = vlaneseq
  %v1045 = vshrl.u32 %v1044, 7
  %v1046 = vsub.s32 5, %v1045
  %v1047 = vrot.slane %v829, %v1046
  %v1048 = vmul.f32 %v1042, %v1047
  %v1049 = vadd.f32 %v1039, %v1048
  %1050 = vset.pattern.permute.xlu0 22
  %1051 = vperm.xlu0 %1050, %v831
  %v1052 = vpop.permute.xlu0 %1051
  %v1054 = vlaneseq
  %v1055 = vshrl.u32 %v1054, 7
  %v1056 = vsub.s32 6, %v1055
  %v1057 = vrot.slane %v829, %v1056
  %v1058 = vmul.f32 %v1052, %v1057
  %v1059 = vadd.f32 %v1049, %v1058
  %1060 = vset.pattern.permute.xlu0 23
  %1061 = vperm.xlu0 %1060, %v831
  %v1062 = vpop.permute.xlu0 %1061
  %v1064 = vlaneseq
  %v1065 = vshrl.u32 %v1064, 7
  %v1066 = vsub.s32 7, %v1065
  %v1067 = vrot.slane %v829, %v1066
  %v1068 = vmul.f32 %v1062, %v1067
  %v1069 = vadd.f32 %v1059, %v1068
  %1070 = vset.pattern.permute.xlu0 24
  %1071 = vperm.xlu0 %1070, %v831
  %v1072 = vpop.permute.xlu0 %1071
  %v1074 = vlaneseq
  %v1075 = vshrl.u32 %v1074, 7
  %v1076 = vsub.s32 0, %v1075
  %v1077 = vrot.slane %v830, %v1076
  %v1078 = vmul.f32 %v1072, %v1077
  %1079 = vset.pattern.permute.xlu0 25
  %1080 = vperm.xlu0 %1079, %v831
  %v1081 = vpop.permute.xlu0 %1080
  %v1083 = vlaneseq
  %v1084 = vshrl.u32 %v1083, 7
  %v1085 = vsub.s32 1, %v1084
  %v1086 = vrot.slane %v830, %v1085
  %v1087 = vmul.f32 %v1081, %v1086
  %v1088 = vadd.f32 %v1078, %v1087
  %1089 = vset.pattern.permute.xlu0 26
  %1090 = vperm.xlu0 %1089, %v831
  %v1091 = vpop.permute.xlu0 %1090
  %v1093 = vlaneseq
  %v1094 = vshrl.u32 %v1093, 7
  %v1095 = vsub.s32 2, %v1094
  %v1096 = vrot.slane %v830, %v1095
  %v1097 = vmul.f32 %v1091, %v1096
  %v1098 = vadd.f32 %v1088, %v1097
  %1099 = vset.pattern.permute.xlu0 27
  %1100 = vperm.xlu0 %1099, %v831
  %v1101 = vpop.permute.xlu0 %1100
  %v1103 = vlaneseq
  %v1104 = vshrl.u32 %v1103, 7
  %v1105 = vsub.s32 3, %v1104
  %v1106 = vrot.slane %v830, %v1105
  %v1107 = vmul.f32 %v1101, %v1106
  %v1108 = vadd.f32 %v1098, %v1107
  %1109 = vset.pattern.permute.xlu0 28
  %1110 = vperm.xlu0 %1109, %v831
  %v1111 = vpop.permute.xlu0 %1110
  %v1113 = vlaneseq
  %v1114 = vshrl.u32 %v1113, 7
  %v1115 = vsub.s32 4, %v1114
  %v1116 = vrot.slane %v830, %v1115
  %v1117 = vmul.f32 %v1111, %v1116
  %v1118 = vadd.f32 %v1108, %v1117
  %1119 = vset.pattern.permute.xlu0 29
  %1120 = vperm.xlu0 %1119, %v831
  %v1121 = vpop.permute.xlu0 %1120
  %v1123 = vlaneseq
  %v1124 = vshrl.u32 %v1123, 7
  %v1125 = vsub.s32 5, %v1124
  %v1126 = vrot.slane %v830, %v1125
  %v1127 = vmul.f32 %v1121, %v1126
  %v1128 = vadd.f32 %v1118, %v1127
  %1129 = vset.pattern.permute.xlu0 30
  %1130 = vperm.xlu0 %1129, %v831
  %v1131 = vpop.permute.xlu0 %1130
  %v1133 = vlaneseq
  %v1134 = vshrl.u32 %v1133, 7
  %v1135 = vsub.s32 6, %v1134
  %v1136 = vrot.slane %v830, %v1135
  %v1137 = vmul.f32 %v1131, %v1136
  %v1138 = vadd.f32 %v1128, %v1137
  %1139 = vset.pattern.permute.xlu0 31
  %1140 = vperm.xlu0 %1139, %v831
  %v1141 = vpop.permute.xlu0 %1140
  %v1143 = vlaneseq
  %v1144 = vshrl.u32 %v1143, 7
  %v1145 = vsub.s32 7, %v1144
  %v1146 = vrot.slane %v830, %v1145
  %v1147 = vmul.f32 %v1141, %v1146
  %v1148 = vadd.f32 %v1138, %v1147
  %v1149 = vadd.f32 %v911, %v990
  %v1150 = vadd.f32 %v1069, %v1148
  %v1151 = vadd.f32 %v1149, %v1150
  %v1152 = vadd.f32 %v788, %v1151
  %v1153 = vtanh.pop %v1152
  %1155 = vset.pattern.permute.xlu0 0
  %1156 = vperm.xlu0 %1155, %v1153
  %v1157 = vpop.permute.xlu0 %1156
  %v1159 = vmul.f32 %v1157, %v840
  %1160 = vset.pattern.permute.xlu0 1
  %1161 = vperm.xlu0 %1160, %v1153
  %v1162 = vpop.permute.xlu0 %1161
  %v1164 = vmul.f32 %v1162, %v849
  %v1165 = vadd.f32 %v1159, %v1164
  %1166 = vset.pattern.permute.xlu0 2
  %1167 = vperm.xlu0 %1166, %v1153
  %v1168 = vpop.permute.xlu0 %1167
  %v1170 = vmul.f32 %v1168, %v859
  %v1171 = vadd.f32 %v1165, %v1170
  %1172 = vset.pattern.permute.xlu0 3
  %1173 = vperm.xlu0 %1172, %v1153
  %v1174 = vpop.permute.xlu0 %1173
  %v1176 = vmul.f32 %v1174, %v869
  %v1177 = vadd.f32 %v1171, %v1176
  %1178 = vset.pattern.permute.xlu0 4
  %1179 = vperm.xlu0 %1178, %v1153
  %v1180 = vpop.permute.xlu0 %1179
  %v1182 = vmul.f32 %v1180, %v879
  %v1183 = vadd.f32 %v1177, %v1182
  %1184 = vset.pattern.permute.xlu0 5
  %1185 = vperm.xlu0 %1184, %v1153
  %v1186 = vpop.permute.xlu0 %1185
  %v1188 = vmul.f32 %v1186, %v889
  %v1189 = vadd.f32 %v1183, %v1188
  %1190 = vset.pattern.permute.xlu0 6
  %1191 = vperm.xlu0 %1190, %v1153
  %v1192 = vpop.permute.xlu0 %1191
  %v1194 = vmul.f32 %v1192, %v899
  %v1195 = vadd.f32 %v1189, %v1194
  %1196 = vset.pattern.permute.xlu0 7
  %1197 = vperm.xlu0 %1196, %v1153
  %v1198 = vpop.permute.xlu0 %1197
  %v1200 = vmul.f32 %v1198, %v909
  %v1201 = vadd.f32 %v1195, %v1200
  %1202 = vset.pattern.permute.xlu0 8
  %1203 = vperm.xlu0 %1202, %v1153
  %v1204 = vpop.permute.xlu0 %1203
  %v1206 = vmul.f32 %v1204, %v919
  %1207 = vset.pattern.permute.xlu0 9
  %1208 = vperm.xlu0 %1207, %v1153
  %v1209 = vpop.permute.xlu0 %1208
  %v1211 = vmul.f32 %v1209, %v928
  %v1212 = vadd.f32 %v1206, %v1211
  %1213 = vset.pattern.permute.xlu0 10
  %1214 = vperm.xlu0 %1213, %v1153
  %v1215 = vpop.permute.xlu0 %1214
  %v1217 = vmul.f32 %v1215, %v938
  %v1218 = vadd.f32 %v1212, %v1217
  %1219 = vset.pattern.permute.xlu0 11
  %1220 = vperm.xlu0 %1219, %v1153
  %v1221 = vpop.permute.xlu0 %1220
  %v1223 = vmul.f32 %v1221, %v948
  %v1224 = vadd.f32 %v1218, %v1223
  %1225 = vset.pattern.permute.xlu0 12
  %1226 = vperm.xlu0 %1225, %v1153
  %v1227 = vpop.permute.xlu0 %1226
  %v1229 = vmul.f32 %v1227, %v958
  %v1230 = vadd.f32 %v1224, %v1229
  %1231 = vset.pattern.permute.xlu0 13
  %1232 = vperm.xlu0 %1231, %v1153
  %v1233 = vpop.permute.xlu0 %1232
  %v1235 = vmul.f32 %v1233, %v968
  %v1236 = vadd.f32 %v1230, %v1235
  %1237 = vset.pattern.permute.xlu0 14
  %1238 = vperm.xlu0 %1237, %v1153
  %v1239 = vpop.permute.xlu0 %1238
  %v1241 = vmul.f32 %v1239, %v978
  %v1242 = vadd.f32 %v1236, %v1241
  %1243 = vset.pattern.permute.xlu0 15
  %1244 = vperm.xlu0 %1243, %v1153
  %v1245 = vpop.permute.xlu0 %1244
  %v1247 = vmul.f32 %v1245, %v988
  %v1248 = vadd.f32 %v1242, %v1247
  %1249 = vset.pattern.permute.xlu0 16
  %1250 = vperm.xlu0 %1249, %v1153
  %v1251 = vpop.permute.xlu0 %1250
  %v1253 = vmul.f32 %v1251, %v998
  %1254 = vset.pattern.permute.xlu0 17
  %1255 = vperm.xlu0 %1254, %v1153
  %v1256 = vpop.permute.xlu0 %1255
  %v1258 = vmul.f32 %v1256, %v1007
  %v1259 = vadd.f32 %v1253, %v1258
  %1260 = vset.pattern.permute.xlu0 18
  %1261 = vperm.xlu0 %1260, %v1153
  %v1262 = vpop.permute.xlu0 %1261
  %v1264 = vmul.f32 %v1262, %v1017
  %v1265 = vadd.f32 %v1259, %v1264
  %1266 = vset.pattern.permute.xlu0 19
  %1267 = vperm.xlu0 %1266, %v1153
  %v1268 = vpop.permute.xlu0 %1267
  %v1270 = vmul.f32 %v1268, %v1027
  %v1271 = vadd.f32 %v1265, %v1270
  %1272 = vset.pattern.permute.xlu0 20
  %1273 = vperm.xlu0 %1272, %v1153
  %v1274 = vpop.permute.xlu0 %1273
  %v1276 = vmul.f32 %v1274, %v1037
  %v1277 = vadd.f32 %v1271, %v1276
  %1278 = vset.pattern.permute.xlu0 21
  %1279 = vperm.xlu0 %1278, %v1153
  %v1280 = vpop.permute.xlu0 %1279
  %v1282 = vmul.f32 %v1280, %v1047
  %v1283 = vadd.f32 %v1277, %v1282
  %1284 = vset.pattern.permute.xlu0 22
  %1285 = vperm.xlu0 %1284, %v1153
  %v1286 = vpop.permute.xlu0 %1285
  %v1288 = vmul.f32 %v1286, %v1057
  %v1289 = vadd.f32 %v1283, %v1288
  %1290 = vset.pattern.permute.xlu0 23
  %1291 = vperm.xlu0 %1290, %v1153
  %v1292 = vpop.permute.xlu0 %1291
  %v1294 = vmul.f32 %v1292, %v1067
  %v1295 = vadd.f32 %v1289, %v1294
  %1296 = vset.pattern.permute.xlu0 24
  %1297 = vperm.xlu0 %1296, %v1153
  %v1298 = vpop.permute.xlu0 %1297
  %v1300 = vmul.f32 %v1298, %v1077
  %1301 = vset.pattern.permute.xlu0 25
  %1302 = vperm.xlu0 %1301, %v1153
  %v1303 = vpop.permute.xlu0 %1302
  %v1305 = vmul.f32 %v1303, %v1086
  %v1306 = vadd.f32 %v1300, %v1305
  %1307 = vset.pattern.permute.xlu0 26
  %1308 = vperm.xlu0 %1307, %v1153
  %v1309 = vpop.permute.xlu0 %1308
  %v1311 = vmul.f32 %v1309, %v1096
  %v1312 = vadd.f32 %v1306, %v1311
  %1313 = vset.pattern.permute.xlu0 27
  %1314 = vperm.xlu0 %1313, %v1153
  %v1315 = vpop.permute.xlu0 %1314
  %v1317 = vmul.f32 %v1315, %v1106
  %v1318 = vadd.f32 %v1312, %v1317
  %1319 = vset.pattern.permute.xlu0 28
  %1320 = vperm.xlu0 %1319, %v1153
  %v1321 = vpop.permute.xlu0 %1320
  %v1323 = vmul.f32 %v1321, %v1116
  %v1324 = vadd.f32 %v1318, %v1323
  %1325 = vset.pattern.permute.xlu0 29
  %1326 = vperm.xlu0 %1325, %v1153
  %v1327 = vpop.permute.xlu0 %1326
  %v1329 = vmul.f32 %v1327, %v1126
  %v1330 = vadd.f32 %v1324, %v1329
  %1331 = vset.pattern.permute.xlu0 30
  %1332 = vperm.xlu0 %1331, %v1153
  %v1333 = vpop.permute.xlu0 %1332
  %v1335 = vmul.f32 %v1333, %v1136
  %v1336 = vadd.f32 %v1330, %v1335
  %1337 = vset.pattern.permute.xlu0 31
  %1338 = vperm.xlu0 %1337, %v1153
  %v1339 = vpop.permute.xlu0 %1338
  %v1341 = vmul.f32 %v1339, %v1146
  %v1342 = vadd.f32 %v1336, %v1341
  %v1343 = vadd.f32 %v1201, %v1248
  %v1344 = vadd.f32 %v1295, %v1342
  %v1345 = vadd.f32 %v1343, %v1344
  %v1346 = vadd.f32 %v794, %v1345
  %v1347 = vtanh.pop %v1346
  %1349 = vset.pattern.permute.xlu0 0
  %1350 = vperm.xlu0 %1349, %v1347
  %v1351 = vpop.permute.xlu0 %1350
  %v1353 = vmul.f32 %v1351, %v840
  %1354 = vset.pattern.permute.xlu0 1
  %1355 = vperm.xlu0 %1354, %v1347
  %v1356 = vpop.permute.xlu0 %1355
  %v1358 = vmul.f32 %v1356, %v849
  %v1359 = vadd.f32 %v1353, %v1358
  %1360 = vset.pattern.permute.xlu0 2
  %1361 = vperm.xlu0 %1360, %v1347
  %v1362 = vpop.permute.xlu0 %1361
  %v1364 = vmul.f32 %v1362, %v859
  %v1365 = vadd.f32 %v1359, %v1364
  %1366 = vset.pattern.permute.xlu0 3
  %1367 = vperm.xlu0 %1366, %v1347
  %v1368 = vpop.permute.xlu0 %1367
  %v1370 = vmul.f32 %v1368, %v869
  %v1371 = vadd.f32 %v1365, %v1370
  %1372 = vset.pattern.permute.xlu0 4
  %1373 = vperm.xlu0 %1372, %v1347
  %v1374 = vpop.permute.xlu0 %1373
  %v1376 = vmul.f32 %v1374, %v879
  %v1377 = vadd.f32 %v1371, %v1376
  %1378 = vset.pattern.permute.xlu0 5
  %1379 = vperm.xlu0 %1378, %v1347
  %v1380 = vpop.permute.xlu0 %1379
  %v1382 = vmul.f32 %v1380, %v889
  %v1383 = vadd.f32 %v1377, %v1382
  %1384 = vset.pattern.permute.xlu0 6
  %1385 = vperm.xlu0 %1384, %v1347
  %v1386 = vpop.permute.xlu0 %1385
  %v1388 = vmul.f32 %v1386, %v899
  %v1389 = vadd.f32 %v1383, %v1388
  %1390 = vset.pattern.permute.xlu0 7
  %1391 = vperm.xlu0 %1390, %v1347
  %v1392 = vpop.permute.xlu0 %1391
  %v1394 = vmul.f32 %v1392, %v909
  %v1395 = vadd.f32 %v1389, %v1394
  %1396 = vset.pattern.permute.xlu0 8
  %1397 = vperm.xlu0 %1396, %v1347
  %v1398 = vpop.permute.xlu0 %1397
  %v1400 = vmul.f32 %v1398, %v919
  %1401 = vset.pattern.permute.xlu0 9
  %1402 = vperm.xlu0 %1401, %v1347
  %v1403 = vpop.permute.xlu0 %1402
  %v1405 = vmul.f32 %v1403, %v928
  %v1406 = vadd.f32 %v1400, %v1405
  %1407 = vset.pattern.permute.xlu0 10
  %1408 = vperm.xlu0 %1407, %v1347
  %v1409 = vpop.permute.xlu0 %1408
  %v1411 = vmul.f32 %v1409, %v938
  %v1412 = vadd.f32 %v1406, %v1411
  %1413 = vset.pattern.permute.xlu0 11
  %1414 = vperm.xlu0 %1413, %v1347
  %v1415 = vpop.permute.xlu0 %1414
  %v1417 = vmul.f32 %v1415, %v948
  %v1418 = vadd.f32 %v1412, %v1417
  %1419 = vset.pattern.permute.xlu0 12
  %1420 = vperm.xlu0 %1419, %v1347
  %v1421 = vpop.permute.xlu0 %1420
  %v1423 = vmul.f32 %v1421, %v958
  %v1424 = vadd.f32 %v1418, %v1423
  %1425 = vset.pattern.permute.xlu0 13
  %1426 = vperm.xlu0 %1425, %v1347
  %v1427 = vpop.permute.xlu0 %1426
  %v1429 = vmul.f32 %v1427, %v968
  %v1430 = vadd.f32 %v1424, %v1429
  %1431 = vset.pattern.permute.xlu0 14
  %1432 = vperm.xlu0 %1431, %v1347
  %v1433 = vpop.permute.xlu0 %1432
  %v1435 = vmul.f32 %v1433, %v978
  %v1436 = vadd.f32 %v1430, %v1435
  %1437 = vset.pattern.permute.xlu0 15
  %1438 = vperm.xlu0 %1437, %v1347
  %v1439 = vpop.permute.xlu0 %1438
  %v1441 = vmul.f32 %v1439, %v988
  %v1442 = vadd.f32 %v1436, %v1441
  %1443 = vset.pattern.permute.xlu0 16
  %1444 = vperm.xlu0 %1443, %v1347
  %v1445 = vpop.permute.xlu0 %1444
  %v1447 = vmul.f32 %v1445, %v998
  %1448 = vset.pattern.permute.xlu0 17
  %1449 = vperm.xlu0 %1448, %v1347
  %v1450 = vpop.permute.xlu0 %1449
  %v1452 = vmul.f32 %v1450, %v1007
  %v1453 = vadd.f32 %v1447, %v1452
  %1454 = vset.pattern.permute.xlu0 18
  %1455 = vperm.xlu0 %1454, %v1347
  %v1456 = vpop.permute.xlu0 %1455
  %v1458 = vmul.f32 %v1456, %v1017
  %v1459 = vadd.f32 %v1453, %v1458
  %1460 = vset.pattern.permute.xlu0 19
  %1461 = vperm.xlu0 %1460, %v1347
  %v1462 = vpop.permute.xlu0 %1461
  %v1464 = vmul.f32 %v1462, %v1027
  %v1465 = vadd.f32 %v1459, %v1464
  %1466 = vset.pattern.permute.xlu0 20
  %1467 = vperm.xlu0 %1466, %v1347
  %v1468 = vpop.permute.xlu0 %1467
  %v1470 = vmul.f32 %v1468, %v1037
  %v1471 = vadd.f32 %v1465, %v1470
  %1472 = vset.pattern.permute.xlu0 21
  %1473 = vperm.xlu0 %1472, %v1347
  %v1474 = vpop.permute.xlu0 %1473
  %v1476 = vmul.f32 %v1474, %v1047
  %v1477 = vadd.f32 %v1471, %v1476
  %1478 = vset.pattern.permute.xlu0 22
  %1479 = vperm.xlu0 %1478, %v1347
  %v1480 = vpop.permute.xlu0 %1479
  %v1482 = vmul.f32 %v1480, %v1057
  %v1483 = vadd.f32 %v1477, %v1482
  %1484 = vset.pattern.permute.xlu0 23
  %1485 = vperm.xlu0 %1484, %v1347
  %v1486 = vpop.permute.xlu0 %1485
  %v1488 = vmul.f32 %v1486, %v1067
  %v1489 = vadd.f32 %v1483, %v1488
  %1490 = vset.pattern.permute.xlu0 24
  %1491 = vperm.xlu0 %1490, %v1347
  %v1492 = vpop.permute.xlu0 %1491
  %v1494 = vmul.f32 %v1492, %v1077
  %1495 = vset.pattern.permute.xlu0 25
  %1496 = vperm.xlu0 %1495, %v1347
  %v1497 = vpop.permute.xlu0 %1496
  %v1499 = vmul.f32 %v1497, %v1086
  %v1500 = vadd.f32 %v1494, %v1499
  %1501 = vset.pattern.permute.xlu0 26
  %1502 = vperm.xlu0 %1501, %v1347
  %v1503 = vpop.permute.xlu0 %1502
  %v1505 = vmul.f32 %v1503, %v1096
  %v1506 = vadd.f32 %v1500, %v1505
  %1507 = vset.pattern.permute.xlu0 27
  %1508 = vperm.xlu0 %1507, %v1347
  %v1509 = vpop.permute.xlu0 %1508
  %v1511 = vmul.f32 %v1509, %v1106
  %v1512 = vadd.f32 %v1506, %v1511
  %1513 = vset.pattern.permute.xlu0 28
  %1514 = vperm.xlu0 %1513, %v1347
  %v1515 = vpop.permute.xlu0 %1514
  %v1517 = vmul.f32 %v1515, %v1116
  %v1518 = vadd.f32 %v1512, %v1517
  %1519 = vset.pattern.permute.xlu0 29
  %1520 = vperm.xlu0 %1519, %v1347
  %v1521 = vpop.permute.xlu0 %1520
  %v1523 = vmul.f32 %v1521, %v1126
  %v1524 = vadd.f32 %v1518, %v1523
  %1525 = vset.pattern.permute.xlu0 30
  %1526 = vperm.xlu0 %1525, %v1347
  %v1527 = vpop.permute.xlu0 %1526
  %v1529 = vmul.f32 %v1527, %v1136
  %v1530 = vadd.f32 %v1524, %v1529
  %1531 = vset.pattern.permute.xlu0 31
  %1532 = vperm.xlu0 %1531, %v1347
  %v1533 = vpop.permute.xlu0 %1532
  %v1535 = vmul.f32 %v1533, %v1146
  %v1536 = vadd.f32 %v1530, %v1535
  %v1537 = vadd.f32 %v1395, %v1442
  %v1538 = vadd.f32 %v1489, %v1536
  %v1539 = vadd.f32 %v1537, %v1538
  %v1540 = vadd.f32 %v800, %v1539
  %v1541 = vtanh.pop %v1540
  %1543 = vset.pattern.permute.xlu0 0
  %1544 = vperm.xlu0 %1543, %v1541
  %v1545 = vpop.permute.xlu0 %1544
  %v1547 = vmul.f32 %v1545, %v840
  %1548 = vset.pattern.permute.xlu0 1
  %1549 = vperm.xlu0 %1548, %v1541
  %v1550 = vpop.permute.xlu0 %1549
  %v1552 = vmul.f32 %v1550, %v849
  %v1553 = vadd.f32 %v1547, %v1552
  %1554 = vset.pattern.permute.xlu0 2
  %1555 = vperm.xlu0 %1554, %v1541
  %v1556 = vpop.permute.xlu0 %1555
  %v1558 = vmul.f32 %v1556, %v859
  %v1559 = vadd.f32 %v1553, %v1558
  %1560 = vset.pattern.permute.xlu0 3
  %1561 = vperm.xlu0 %1560, %v1541
  %v1562 = vpop.permute.xlu0 %1561
  %v1564 = vmul.f32 %v1562, %v869
  %v1565 = vadd.f32 %v1559, %v1564
  %1566 = vset.pattern.permute.xlu0 4
  %1567 = vperm.xlu0 %1566, %v1541
  %v1568 = vpop.permute.xlu0 %1567
  %v1570 = vmul.f32 %v1568, %v879
  %v1571 = vadd.f32 %v1565, %v1570
  %1572 = vset.pattern.permute.xlu0 5
  %1573 = vperm.xlu0 %1572, %v1541
  %v1574 = vpop.permute.xlu0 %1573
  %v1576 = vmul.f32 %v1574, %v889
  %v1577 = vadd.f32 %v1571, %v1576
  %1578 = vset.pattern.permute.xlu0 6
  %1579 = vperm.xlu0 %1578, %v1541
  %v1580 = vpop.permute.xlu0 %1579
  %v1582 = vmul.f32 %v1580, %v899
  %v1583 = vadd.f32 %v1577, %v1582
  %1584 = vset.pattern.permute.xlu0 7
  %1585 = vperm.xlu0 %1584, %v1541
  %v1586 = vpop.permute.xlu0 %1585
  %v1588 = vmul.f32 %v1586, %v909
  %v1589 = vadd.f32 %v1583, %v1588
  %1590 = vset.pattern.permute.xlu0 8
  %1591 = vperm.xlu0 %1590, %v1541
  %v1592 = vpop.permute.xlu0 %1591
  %v1594 = vmul.f32 %v1592, %v919
  %1595 = vset.pattern.permute.xlu0 9
  %1596 = vperm.xlu0 %1595, %v1541
  %v1597 = vpop.permute.xlu0 %1596
  %v1599 = vmul.f32 %v1597, %v928
  %v1600 = vadd.f32 %v1594, %v1599
  %1601 = vset.pattern.permute.xlu0 10
  %1602 = vperm.xlu0 %1601, %v1541
  %v1603 = vpop.permute.xlu0 %1602
  %v1605 = vmul.f32 %v1603, %v938
  %v1606 = vadd.f32 %v1600, %v1605
  %1607 = vset.pattern.permute.xlu0 11
  %1608 = vperm.xlu0 %1607, %v1541
  %v1609 = vpop.permute.xlu0 %1608
  %v1611 = vmul.f32 %v1609, %v948
  %v1612 = vadd.f32 %v1606, %v1611
  %1613 = vset.pattern.permute.xlu0 12
  %1614 = vperm.xlu0 %1613, %v1541
  %v1615 = vpop.permute.xlu0 %1614
  %v1617 = vmul.f32 %v1615, %v958
  %v1618 = vadd.f32 %v1612, %v1617
  %1619 = vset.pattern.permute.xlu0 13
  %1620 = vperm.xlu0 %1619, %v1541
  %v1621 = vpop.permute.xlu0 %1620
  %v1623 = vmul.f32 %v1621, %v968
  %v1624 = vadd.f32 %v1618, %v1623
  %1625 = vset.pattern.permute.xlu0 14
  %1626 = vperm.xlu0 %1625, %v1541
  %v1627 = vpop.permute.xlu0 %1626
  %v1629 = vmul.f32 %v1627, %v978
  %v1630 = vadd.f32 %v1624, %v1629
  %1631 = vset.pattern.permute.xlu0 15
  %1632 = vperm.xlu0 %1631, %v1541
  %v1633 = vpop.permute.xlu0 %1632
  %v1635 = vmul.f32 %v1633, %v988
  %v1636 = vadd.f32 %v1630, %v1635
  %1637 = vset.pattern.permute.xlu0 16
  %1638 = vperm.xlu0 %1637, %v1541
  %v1639 = vpop.permute.xlu0 %1638
  %v1641 = vmul.f32 %v1639, %v998
  %1642 = vset.pattern.permute.xlu0 17
  %1643 = vperm.xlu0 %1642, %v1541
  %v1644 = vpop.permute.xlu0 %1643
  %v1646 = vmul.f32 %v1644, %v1007
  %v1647 = vadd.f32 %v1641, %v1646
  %1648 = vset.pattern.permute.xlu0 18
  %1649 = vperm.xlu0 %1648, %v1541
  %v1650 = vpop.permute.xlu0 %1649
  %v1652 = vmul.f32 %v1650, %v1017
  %v1653 = vadd.f32 %v1647, %v1652
  %1654 = vset.pattern.permute.xlu0 19
  %1655 = vperm.xlu0 %1654, %v1541
  %v1656 = vpop.permute.xlu0 %1655
  %v1658 = vmul.f32 %v1656, %v1027
  %v1659 = vadd.f32 %v1653, %v1658
  %1660 = vset.pattern.permute.xlu0 20
  %1661 = vperm.xlu0 %1660, %v1541
  %v1662 = vpop.permute.xlu0 %1661
  %v1664 = vmul.f32 %v1662, %v1037
  %v1665 = vadd.f32 %v1659, %v1664
  %1666 = vset.pattern.permute.xlu0 21
  %1667 = vperm.xlu0 %1666, %v1541
  %v1668 = vpop.permute.xlu0 %1667
  %v1670 = vmul.f32 %v1668, %v1047
  %v1671 = vadd.f32 %v1665, %v1670
  %1672 = vset.pattern.permute.xlu0 22
  %1673 = vperm.xlu0 %1672, %v1541
  %v1674 = vpop.permute.xlu0 %1673
  %v1676 = vmul.f32 %v1674, %v1057
  %v1677 = vadd.f32 %v1671, %v1676
  %1678 = vset.pattern.permute.xlu0 23
  %1679 = vperm.xlu0 %1678, %v1541
  %v1680 = vpop.permute.xlu0 %1679
  %v1682 = vmul.f32 %v1680, %v1067
  %v1683 = vadd.f32 %v1677, %v1682
  %1684 = vset.pattern.permute.xlu0 24
  %1685 = vperm.xlu0 %1684, %v1541
  %v1686 = vpop.permute.xlu0 %1685
  %v1688 = vmul.f32 %v1686, %v1077
  %1689 = vset.pattern.permute.xlu0 25
  %1690 = vperm.xlu0 %1689, %v1541
  %v1691 = vpop.permute.xlu0 %1690
  %v1693 = vmul.f32 %v1691, %v1086
  %v1694 = vadd.f32 %v1688, %v1693
  %1695 = vset.pattern.permute.xlu0 26
  %1696 = vperm.xlu0 %1695, %v1541
  %v1697 = vpop.permute.xlu0 %1696
  %v1699 = vmul.f32 %v1697, %v1096
  %v1700 = vadd.f32 %v1694, %v1699
  %1701 = vset.pattern.permute.xlu0 27
  %1702 = vperm.xlu0 %1701, %v1541
  %v1703 = vpop.permute.xlu0 %1702
  %v1705 = vmul.f32 %v1703, %v1106
  %v1706 = vadd.f32 %v1700, %v1705
  %1707 = vset.pattern.permute.xlu0 28
  %1708 = vperm.xlu0 %1707, %v1541
  %v1709 = vpop.permute.xlu0 %1708
  %v1711 = vmul.f32 %v1709, %v1116
  %v1712 = vadd.f32 %v1706, %v1711
  %1713 = vset.pattern.permute.xlu0 29
  %1714 = vperm.xlu0 %1713, %v1541
  %v1715 = vpop.permute.xlu0 %1714
  %v1717 = vmul.f32 %v1715, %v1126
  %v1718 = vadd.f32 %v1712, %v1717
  %1719 = vset.pattern.permute.xlu0 30
  %1720 = vperm.xlu0 %1719, %v1541
  %v1721 = vpop.permute.xlu0 %1720
  %v1723 = vmul.f32 %v1721, %v1136
  %v1724 = vadd.f32 %v1718, %v1723
  %1725 = vset.pattern.permute.xlu0 31
  %1726 = vperm.xlu0 %1725, %v1541
  %v1727 = vpop.permute.xlu0 %1726
  %v1729 = vmul.f32 %v1727, %v1146
  %v1730 = vadd.f32 %v1724, %v1729
  %v1731 = vadd.f32 %v1589, %v1636
  %v1732 = vadd.f32 %v1683, %v1730
  %v1733 = vadd.f32 %v1731, %v1732
  %v1734 = vadd.f32 %v806, %v1733
  %v1735 = vtanh.pop %v1734
  %1737 = vset.pattern.permute.xlu0 0
  %1738 = vperm.xlu0 %1737, %v1735
  %v1739 = vpop.permute.xlu0 %1738
  %v1741 = vmul.f32 %v1739, %v840
  %1742 = vset.pattern.permute.xlu0 1
  %1743 = vperm.xlu0 %1742, %v1735
  %v1744 = vpop.permute.xlu0 %1743
  %v1746 = vmul.f32 %v1744, %v849
  %v1747 = vadd.f32 %v1741, %v1746
  %1748 = vset.pattern.permute.xlu0 2
  %1749 = vperm.xlu0 %1748, %v1735
  %v1750 = vpop.permute.xlu0 %1749
  %v1752 = vmul.f32 %v1750, %v859
  %v1753 = vadd.f32 %v1747, %v1752
  %1754 = vset.pattern.permute.xlu0 3
  %1755 = vperm.xlu0 %1754, %v1735
  %v1756 = vpop.permute.xlu0 %1755
  %v1758 = vmul.f32 %v1756, %v869
  %v1759 = vadd.f32 %v1753, %v1758
  %1760 = vset.pattern.permute.xlu0 4
  %1761 = vperm.xlu0 %1760, %v1735
  %v1762 = vpop.permute.xlu0 %1761
  %v1764 = vmul.f32 %v1762, %v879
  %v1765 = vadd.f32 %v1759, %v1764
  %1766 = vset.pattern.permute.xlu0 5
  %1767 = vperm.xlu0 %1766, %v1735
  %v1768 = vpop.permute.xlu0 %1767
  %v1770 = vmul.f32 %v1768, %v889
  %v1771 = vadd.f32 %v1765, %v1770
  %1772 = vset.pattern.permute.xlu0 6
  %1773 = vperm.xlu0 %1772, %v1735
  %v1774 = vpop.permute.xlu0 %1773
  %v1776 = vmul.f32 %v1774, %v899
  %v1777 = vadd.f32 %v1771, %v1776
  %1778 = vset.pattern.permute.xlu0 7
  %1779 = vperm.xlu0 %1778, %v1735
  %v1780 = vpop.permute.xlu0 %1779
  %v1782 = vmul.f32 %v1780, %v909
  %v1783 = vadd.f32 %v1777, %v1782
  %1784 = vset.pattern.permute.xlu0 8
  %1785 = vperm.xlu0 %1784, %v1735
  %v1786 = vpop.permute.xlu0 %1785
  %v1788 = vmul.f32 %v1786, %v919
  %1789 = vset.pattern.permute.xlu0 9
  %1790 = vperm.xlu0 %1789, %v1735
  %v1791 = vpop.permute.xlu0 %1790
  %v1793 = vmul.f32 %v1791, %v928
  %v1794 = vadd.f32 %v1788, %v1793
  %1795 = vset.pattern.permute.xlu0 10
  %1796 = vperm.xlu0 %1795, %v1735
  %v1797 = vpop.permute.xlu0 %1796
  %v1799 = vmul.f32 %v1797, %v938
  %v1800 = vadd.f32 %v1794, %v1799
  %1801 = vset.pattern.permute.xlu0 11
  %1802 = vperm.xlu0 %1801, %v1735
  %v1803 = vpop.permute.xlu0 %1802
  %v1805 = vmul.f32 %v1803, %v948
  %v1806 = vadd.f32 %v1800, %v1805
  %1807 = vset.pattern.permute.xlu0 12
  %1808 = vperm.xlu0 %1807, %v1735
  %v1809 = vpop.permute.xlu0 %1808
  %v1811 = vmul.f32 %v1809, %v958
  %v1812 = vadd.f32 %v1806, %v1811
  %1813 = vset.pattern.permute.xlu0 13
  %1814 = vperm.xlu0 %1813, %v1735
  %v1815 = vpop.permute.xlu0 %1814
  %v1817 = vmul.f32 %v1815, %v968
  %v1818 = vadd.f32 %v1812, %v1817
  %1819 = vset.pattern.permute.xlu0 14
  %1820 = vperm.xlu0 %1819, %v1735
  %v1821 = vpop.permute.xlu0 %1820
  %v1823 = vmul.f32 %v1821, %v978
  %v1824 = vadd.f32 %v1818, %v1823
  %1825 = vset.pattern.permute.xlu0 15
  %1826 = vperm.xlu0 %1825, %v1735
  %v1827 = vpop.permute.xlu0 %1826
  %v1829 = vmul.f32 %v1827, %v988
  %v1830 = vadd.f32 %v1824, %v1829
  %1831 = vset.pattern.permute.xlu0 16
  %1832 = vperm.xlu0 %1831, %v1735
  %v1833 = vpop.permute.xlu0 %1832
  %v1835 = vmul.f32 %v1833, %v998
  %1836 = vset.pattern.permute.xlu0 17
  %1837 = vperm.xlu0 %1836, %v1735
  %v1838 = vpop.permute.xlu0 %1837
  %v1840 = vmul.f32 %v1838, %v1007
  %v1841 = vadd.f32 %v1835, %v1840
  %1842 = vset.pattern.permute.xlu0 18
  %1843 = vperm.xlu0 %1842, %v1735
  %v1844 = vpop.permute.xlu0 %1843
  %v1846 = vmul.f32 %v1844, %v1017
  %v1847 = vadd.f32 %v1841, %v1846
  %1848 = vset.pattern.permute.xlu0 19
  %1849 = vperm.xlu0 %1848, %v1735
  %v1850 = vpop.permute.xlu0 %1849
  %v1852 = vmul.f32 %v1850, %v1027
  %v1853 = vadd.f32 %v1847, %v1852
  %1854 = vset.pattern.permute.xlu0 20
  %1855 = vperm.xlu0 %1854, %v1735
  %v1856 = vpop.permute.xlu0 %1855
  %v1858 = vmul.f32 %v1856, %v1037
  %v1859 = vadd.f32 %v1853, %v1858
  %1860 = vset.pattern.permute.xlu0 21
  %1861 = vperm.xlu0 %1860, %v1735
  %v1862 = vpop.permute.xlu0 %1861
  %v1864 = vmul.f32 %v1862, %v1047
  %v1865 = vadd.f32 %v1859, %v1864
  %1866 = vset.pattern.permute.xlu0 22
  %1867 = vperm.xlu0 %1866, %v1735
  %v1868 = vpop.permute.xlu0 %1867
  %v1870 = vmul.f32 %v1868, %v1057
  %v1871 = vadd.f32 %v1865, %v1870
  %1872 = vset.pattern.permute.xlu0 23
  %1873 = vperm.xlu0 %1872, %v1735
  %v1874 = vpop.permute.xlu0 %1873
  %v1876 = vmul.f32 %v1874, %v1067
  %v1877 = vadd.f32 %v1871, %v1876
  %1878 = vset.pattern.permute.xlu0 24
  %1879 = vperm.xlu0 %1878, %v1735
  %v1880 = vpop.permute.xlu0 %1879
  %v1882 = vmul.f32 %v1880, %v1077
  %1883 = vset.pattern.permute.xlu0 25
  %1884 = vperm.xlu0 %1883, %v1735
  %v1885 = vpop.permute.xlu0 %1884
  %v1887 = vmul.f32 %v1885, %v1086
  %v1888 = vadd.f32 %v1882, %v1887
  %1889 = vset.pattern.permute.xlu0 26
  %1890 = vperm.xlu0 %1889, %v1735
  %v1891 = vpop.permute.xlu0 %1890
  %v1893 = vmul.f32 %v1891, %v1096
  %v1894 = vadd.f32 %v1888, %v1893
  %1895 = vset.pattern.permute.xlu0 27
  %1896 = vperm.xlu0 %1895, %v1735
  %v1897 = vpop.permute.xlu0 %1896
  %v1899 = vmul.f32 %v1897, %v1106
  %v1900 = vadd.f32 %v1894, %v1899
  %1901 = vset.pattern.permute.xlu0 28
  %1902 = vperm.xlu0 %1901, %v1735
  %v1903 = vpop.permute.xlu0 %1902
  %v1905 = vmul.f32 %v1903, %v1116
  %v1906 = vadd.f32 %v1900, %v1905
  %1907 = vset.pattern.permute.xlu0 29
  %1908 = vperm.xlu0 %1907, %v1735
  %v1909 = vpop.permute.xlu0 %1908
  %v1911 = vmul.f32 %v1909, %v1126
  %v1912 = vadd.f32 %v1906, %v1911
  %1913 = vset.pattern.permute.xlu0 30
  %1914 = vperm.xlu0 %1913, %v1735
  %v1915 = vpop.permute.xlu0 %1914
  %v1917 = vmul.f32 %v1915, %v1136
  %v1918 = vadd.f32 %v1912, %v1917
  %1919 = vset.pattern.permute.xlu0 31
  %1920 = vperm.xlu0 %1919, %v1735
  %v1921 = vpop.permute.xlu0 %1920
  %v1923 = vmul.f32 %v1921, %v1146
  %v1924 = vadd.f32 %v1918, %v1923
  %v1925 = vadd.f32 %v1783, %v1830
  %v1926 = vadd.f32 %v1877, %v1924
  %v1927 = vadd.f32 %v1925, %v1926
  %v1928 = vadd.f32 %v812, %v1927
  %v1929 = vtanh.pop %v1928
  %1931 = vset.pattern.permute.xlu0 0
  %1932 = vperm.xlu0 %1931, %v1929
  %v1933 = vpop.permute.xlu0 %1932
  %v1935 = vmul.f32 %v1933, %v840
  %1936 = vset.pattern.permute.xlu0 1
  %1937 = vperm.xlu0 %1936, %v1929
  %v1938 = vpop.permute.xlu0 %1937
  %v1940 = vmul.f32 %v1938, %v849
  %v1941 = vadd.f32 %v1935, %v1940
  %1942 = vset.pattern.permute.xlu0 2
  %1943 = vperm.xlu0 %1942, %v1929
  %v1944 = vpop.permute.xlu0 %1943
  %v1946 = vmul.f32 %v1944, %v859
  %v1947 = vadd.f32 %v1941, %v1946
  %1948 = vset.pattern.permute.xlu0 3
  %1949 = vperm.xlu0 %1948, %v1929
  %v1950 = vpop.permute.xlu0 %1949
  %v1952 = vmul.f32 %v1950, %v869
  %v1953 = vadd.f32 %v1947, %v1952
  %1954 = vset.pattern.permute.xlu0 4
  %1955 = vperm.xlu0 %1954, %v1929
  %v1956 = vpop.permute.xlu0 %1955
  %v1958 = vmul.f32 %v1956, %v879
  %v1959 = vadd.f32 %v1953, %v1958
  %1960 = vset.pattern.permute.xlu0 5
  %1961 = vperm.xlu0 %1960, %v1929
  %v1962 = vpop.permute.xlu0 %1961
  %v1964 = vmul.f32 %v1962, %v889
  %v1965 = vadd.f32 %v1959, %v1964
  %1966 = vset.pattern.permute.xlu0 6
  %1967 = vperm.xlu0 %1966, %v1929
  %v1968 = vpop.permute.xlu0 %1967
  %v1970 = vmul.f32 %v1968, %v899
  %v1971 = vadd.f32 %v1965, %v1970
  %1972 = vset.pattern.permute.xlu0 7
  %1973 = vperm.xlu0 %1972, %v1929
  %v1974 = vpop.permute.xlu0 %1973
  %v1976 = vmul.f32 %v1974, %v909
  %v1977 = vadd.f32 %v1971, %v1976
  %1978 = vset.pattern.permute.xlu0 8
  %1979 = vperm.xlu0 %1978, %v1929
  %v1980 = vpop.permute.xlu0 %1979
  %v1982 = vmul.f32 %v1980, %v919
  %1983 = vset.pattern.permute.xlu0 9
  %1984 = vperm.xlu0 %1983, %v1929
  %v1985 = vpop.permute.xlu0 %1984
  %v1987 = vmul.f32 %v1985, %v928
  %v1988 = vadd.f32 %v1982, %v1987
  %1989 = vset.pattern.permute.xlu0 10
  %1990 = vperm.xlu0 %1989, %v1929
  %v1991 = vpop.permute.xlu0 %1990
  %v1993 = vmul.f32 %v1991, %v938
  %v1994 = vadd.f32 %v1988, %v1993
  %1995 = vset.pattern.permute.xlu0 11
  %1996 = vperm.xlu0 %1995, %v1929
  %v1997 = vpop.permute.xlu0 %1996
  %v1999 = vmul.f32 %v1997, %v948
  %v2000 = vadd.f32 %v1994, %v1999
  %2001 = vset.pattern.permute.xlu0 12
  %2002 = vperm.xlu0 %2001, %v1929
  %v2003 = vpop.permute.xlu0 %2002
  %v2005 = vmul.f32 %v2003, %v958
  %v2006 = vadd.f32 %v2000, %v2005
  %2007 = vset.pattern.permute.xlu0 13
  %2008 = vperm.xlu0 %2007, %v1929
  %v2009 = vpop.permute.xlu0 %2008
  %v2011 = vmul.f32 %v2009, %v968
  %v2012 = vadd.f32 %v2006, %v2011
  %2013 = vset.pattern.permute.xlu0 14
  %2014 = vperm.xlu0 %2013, %v1929
  %v2015 = vpop.permute.xlu0 %2014
  %v2017 = vmul.f32 %v2015, %v978
  %v2018 = vadd.f32 %v2012, %v2017
  %2019 = vset.pattern.permute.xlu0 15
  %2020 = vperm.xlu0 %2019, %v1929
  %v2021 = vpop.permute.xlu0 %2020
  %v2023 = vmul.f32 %v2021, %v988
  %v2024 = vadd.f32 %v2018, %v2023
  %2025 = vset.pattern.permute.xlu0 16
  %2026 = vperm.xlu0 %2025, %v1929
  %v2027 = vpop.permute.xlu0 %2026
  %v2029 = vmul.f32 %v2027, %v998
  %2030 = vset.pattern.permute.xlu0 17
  %2031 = vperm.xlu0 %2030, %v1929
  %v2032 = vpop.permute.xlu0 %2031
  %v2034 = vmul.f32 %v2032, %v1007
  %v2035 = vadd.f32 %v2029, %v2034
  %2036 = vset.pattern.permute.xlu0 18
  %2037 = vperm.xlu0 %2036, %v1929
  %v2038 = vpop.permute.xlu0 %2037
  %v2040 = vmul.f32 %v2038, %v1017
  %v2041 = vadd.f32 %v2035, %v2040
  %2042 = vset.pattern.permute.xlu0 19
  %2043 = vperm.xlu0 %2042, %v1929
  %v2044 = vpop.permute.xlu0 %2043
  %v2046 = vmul.f32 %v2044, %v1027
  %v2047 = vadd.f32 %v2041, %v2046
  %2048 = vset.pattern.permute.xlu0 20
  %2049 = vperm.xlu0 %2048, %v1929
  %v2050 = vpop.permute.xlu0 %2049
  %v2052 = vmul.f32 %v2050, %v1037
  %v2053 = vadd.f32 %v2047, %v2052
  %2054 = vset.pattern.permute.xlu0 21
  %2055 = vperm.xlu0 %2054, %v1929
  %v2056 = vpop.permute.xlu0 %2055
  %v2058 = vmul.f32 %v2056, %v1047
  %v2059 = vadd.f32 %v2053, %v2058
  %2060 = vset.pattern.permute.xlu0 22
  %2061 = vperm.xlu0 %2060, %v1929
  %v2062 = vpop.permute.xlu0 %2061
  %v2064 = vmul.f32 %v2062, %v1057
  %v2065 = vadd.f32 %v2059, %v2064
  %2066 = vset.pattern.permute.xlu0 23
  %2067 = vperm.xlu0 %2066, %v1929
  %v2068 = vpop.permute.xlu0 %2067
  %v2070 = vmul.f32 %v2068, %v1067
  %v2071 = vadd.f32 %v2065, %v2070
  %2072 = vset.pattern.permute.xlu0 24
  %2073 = vperm.xlu0 %2072, %v1929
  %v2074 = vpop.permute.xlu0 %2073
  %v2076 = vmul.f32 %v2074, %v1077
  %2077 = vset.pattern.permute.xlu0 25
  %2078 = vperm.xlu0 %2077, %v1929
  %v2079 = vpop.permute.xlu0 %2078
  %v2081 = vmul.f32 %v2079, %v1086
  %v2082 = vadd.f32 %v2076, %v2081
  %2083 = vset.pattern.permute.xlu0 26
  %2084 = vperm.xlu0 %2083, %v1929
  %v2085 = vpop.permute.xlu0 %2084
  %v2087 = vmul.f32 %v2085, %v1096
  %v2088 = vadd.f32 %v2082, %v2087
  %2089 = vset.pattern.permute.xlu0 27
  %2090 = vperm.xlu0 %2089, %v1929
  %v2091 = vpop.permute.xlu0 %2090
  %v2093 = vmul.f32 %v2091, %v1106
  %v2094 = vadd.f32 %v2088, %v2093
  %2095 = vset.pattern.permute.xlu0 28
  %2096 = vperm.xlu0 %2095, %v1929
  %v2097 = vpop.permute.xlu0 %2096
  %v2099 = vmul.f32 %v2097, %v1116
  %v2100 = vadd.f32 %v2094, %v2099
  %2101 = vset.pattern.permute.xlu0 29
  %2102 = vperm.xlu0 %2101, %v1929
  %v2103 = vpop.permute.xlu0 %2102
  %v2105 = vmul.f32 %v2103, %v1126
  %v2106 = vadd.f32 %v2100, %v2105
  %2107 = vset.pattern.permute.xlu0 30
  %2108 = vperm.xlu0 %2107, %v1929
  %v2109 = vpop.permute.xlu0 %2108
  %v2111 = vmul.f32 %v2109, %v1136
  %v2112 = vadd.f32 %v2106, %v2111
  %2113 = vset.pattern.permute.xlu0 31
  %2114 = vperm.xlu0 %2113, %v1929
  %v2115 = vpop.permute.xlu0 %2114
  %v2117 = vmul.f32 %v2115, %v1146
  %v2118 = vadd.f32 %v2112, %v2117
  %v2119 = vadd.f32 %v1977, %v2024
  %v2120 = vadd.f32 %v2071, %v2118
  %v2121 = vadd.f32 %v2119, %v2120
  %v2122 = vadd.f32 %v818, %v2121
  %v2123 = vtanh.pop %v2122
  %2125 = vset.pattern.permute.xlu0 0
  %2126 = vperm.xlu0 %2125, %v2123
  %v2127 = vpop.permute.xlu0 %2126
  %v2129 = vmul.f32 %v2127, %v840
  %2130 = vset.pattern.permute.xlu0 1
  %2131 = vperm.xlu0 %2130, %v2123
  %v2132 = vpop.permute.xlu0 %2131
  %v2134 = vmul.f32 %v2132, %v849
  %v2135 = vadd.f32 %v2129, %v2134
  %2136 = vset.pattern.permute.xlu0 2
  %2137 = vperm.xlu0 %2136, %v2123
  %v2138 = vpop.permute.xlu0 %2137
  %v2140 = vmul.f32 %v2138, %v859
  %v2141 = vadd.f32 %v2135, %v2140
  %2142 = vset.pattern.permute.xlu0 3
  %2143 = vperm.xlu0 %2142, %v2123
  %v2144 = vpop.permute.xlu0 %2143
  %v2146 = vmul.f32 %v2144, %v869
  %v2147 = vadd.f32 %v2141, %v2146
  %2148 = vset.pattern.permute.xlu0 4
  %2149 = vperm.xlu0 %2148, %v2123
  %v2150 = vpop.permute.xlu0 %2149
  %v2152 = vmul.f32 %v2150, %v879
  %v2153 = vadd.f32 %v2147, %v2152
  %2154 = vset.pattern.permute.xlu0 5
  %2155 = vperm.xlu0 %2154, %v2123
  %v2156 = vpop.permute.xlu0 %2155
  %v2158 = vmul.f32 %v2156, %v889
  %v2159 = vadd.f32 %v2153, %v2158
  %2160 = vset.pattern.permute.xlu0 6
  %2161 = vperm.xlu0 %2160, %v2123
  %v2162 = vpop.permute.xlu0 %2161
  %v2164 = vmul.f32 %v2162, %v899
  %v2165 = vadd.f32 %v2159, %v2164
  %2166 = vset.pattern.permute.xlu0 7
  %2167 = vperm.xlu0 %2166, %v2123
  %v2168 = vpop.permute.xlu0 %2167
  %v2170 = vmul.f32 %v2168, %v909
  %v2171 = vadd.f32 %v2165, %v2170
  %2172 = vset.pattern.permute.xlu0 8
  %2173 = vperm.xlu0 %2172, %v2123
  %v2174 = vpop.permute.xlu0 %2173
  %v2176 = vmul.f32 %v2174, %v919
  %2177 = vset.pattern.permute.xlu0 9
  %2178 = vperm.xlu0 %2177, %v2123
  %v2179 = vpop.permute.xlu0 %2178
  %v2181 = vmul.f32 %v2179, %v928
  %v2182 = vadd.f32 %v2176, %v2181
  %2183 = vset.pattern.permute.xlu0 10
  %2184 = vperm.xlu0 %2183, %v2123
  %v2185 = vpop.permute.xlu0 %2184
  %v2187 = vmul.f32 %v2185, %v938
  %v2188 = vadd.f32 %v2182, %v2187
  %2189 = vset.pattern.permute.xlu0 11
  %2190 = vperm.xlu0 %2189, %v2123
  %v2191 = vpop.permute.xlu0 %2190
  %v2193 = vmul.f32 %v2191, %v948
  %v2194 = vadd.f32 %v2188, %v2193
  %2195 = vset.pattern.permute.xlu0 12
  %2196 = vperm.xlu0 %2195, %v2123
  %v2197 = vpop.permute.xlu0 %2196
  %v2199 = vmul.f32 %v2197, %v958
  %v2200 = vadd.f32 %v2194, %v2199
  %2201 = vset.pattern.permute.xlu0 13
  %2202 = vperm.xlu0 %2201, %v2123
  %v2203 = vpop.permute.xlu0 %2202
  %v2205 = vmul.f32 %v2203, %v968
  %v2206 = vadd.f32 %v2200, %v2205
  %2207 = vset.pattern.permute.xlu0 14
  %2208 = vperm.xlu0 %2207, %v2123
  %v2209 = vpop.permute.xlu0 %2208
  %v2211 = vmul.f32 %v2209, %v978
  %v2212 = vadd.f32 %v2206, %v2211
  %2213 = vset.pattern.permute.xlu0 15
  %2214 = vperm.xlu0 %2213, %v2123
  %v2215 = vpop.permute.xlu0 %2214
  %v2217 = vmul.f32 %v2215, %v988
  %v2218 = vadd.f32 %v2212, %v2217
  %2219 = vset.pattern.permute.xlu0 16
  %2220 = vperm.xlu0 %2219, %v2123
  %v2221 = vpop.permute.xlu0 %2220
  %v2223 = vmul.f32 %v2221, %v998
  %2224 = vset.pattern.permute.xlu0 17
  %2225 = vperm.xlu0 %2224, %v2123
  %v2226 = vpop.permute.xlu0 %2225
  %v2228 = vmul.f32 %v2226, %v1007
  %v2229 = vadd.f32 %v2223, %v2228
  %2230 = vset.pattern.permute.xlu0 18
  %2231 = vperm.xlu0 %2230, %v2123
  %v2232 = vpop.permute.xlu0 %2231
  %v2234 = vmul.f32 %v2232, %v1017
  %v2235 = vadd.f32 %v2229, %v2234
  %2236 = vset.pattern.permute.xlu0 19
  %2237 = vperm.xlu0 %2236, %v2123
  %v2238 = vpop.permute.xlu0 %2237
  %v2240 = vmul.f32 %v2238, %v1027
  %v2241 = vadd.f32 %v2235, %v2240
  %2242 = vset.pattern.permute.xlu0 20
  %2243 = vperm.xlu0 %2242, %v2123
  %v2244 = vpop.permute.xlu0 %2243
  %v2246 = vmul.f32 %v2244, %v1037
  %v2247 = vadd.f32 %v2241, %v2246
  %2248 = vset.pattern.permute.xlu0 21
  %2249 = vperm.xlu0 %2248, %v2123
  %v2250 = vpop.permute.xlu0 %2249
  %v2252 = vmul.f32 %v2250, %v1047
  %v2253 = vadd.f32 %v2247, %v2252
  %2254 = vset.pattern.permute.xlu0 22
  %2255 = vperm.xlu0 %2254, %v2123
  %v2256 = vpop.permute.xlu0 %2255
  %v2258 = vmul.f32 %v2256, %v1057
  %v2259 = vadd.f32 %v2253, %v2258
  %2260 = vset.pattern.permute.xlu0 23
  %2261 = vperm.xlu0 %2260, %v2123
  %v2262 = vpop.permute.xlu0 %2261
  %v2264 = vmul.f32 %v2262, %v1067
  %v2265 = vadd.f32 %v2259, %v2264
  %2266 = vset.pattern.permute.xlu0 24
  %2267 = vperm.xlu0 %2266, %v2123
  %v2268 = vpop.permute.xlu0 %2267
  %v2270 = vmul.f32 %v2268, %v1077
  %2271 = vset.pattern.permute.xlu0 25
  %2272 = vperm.xlu0 %2271, %v2123
  %v2273 = vpop.permute.xlu0 %2272
  %v2275 = vmul.f32 %v2273, %v1086
  %v2276 = vadd.f32 %v2270, %v2275
  %2277 = vset.pattern.permute.xlu0 26
  %2278 = vperm.xlu0 %2277, %v2123
  %v2279 = vpop.permute.xlu0 %2278
  %v2281 = vmul.f32 %v2279, %v1096
  %v2282 = vadd.f32 %v2276, %v2281
  %2283 = vset.pattern.permute.xlu0 27
  %2284 = vperm.xlu0 %2283, %v2123
  %v2285 = vpop.permute.xlu0 %2284
  %v2287 = vmul.f32 %v2285, %v1106
  %v2288 = vadd.f32 %v2282, %v2287
  %2289 = vset.pattern.permute.xlu0 28
  %2290 = vperm.xlu0 %2289, %v2123
  %v2291 = vpop.permute.xlu0 %2290
  %v2293 = vmul.f32 %v2291, %v1116
  %v2294 = vadd.f32 %v2288, %v2293
  %2295 = vset.pattern.permute.xlu0 29
  %2296 = vperm.xlu0 %2295, %v2123
  %v2297 = vpop.permute.xlu0 %2296
  %v2299 = vmul.f32 %v2297, %v1126
  %v2300 = vadd.f32 %v2294, %v2299
  %2301 = vset.pattern.permute.xlu0 30
  %2302 = vperm.xlu0 %2301, %v2123
  %v2303 = vpop.permute.xlu0 %2302
  %v2305 = vmul.f32 %v2303, %v1136
  %v2306 = vadd.f32 %v2300, %v2305
  %2307 = vset.pattern.permute.xlu0 31
  %2308 = vperm.xlu0 %2307, %v2123
  %v2309 = vpop.permute.xlu0 %2308
  %v2311 = vmul.f32 %v2309, %v1146
  %v2312 = vadd.f32 %v2306, %v2311
  %v2313 = vadd.f32 %v2171, %v2218
  %v2314 = vadd.f32 %v2265, %v2312
  %v2315 = vadd.f32 %v2313, %v2314
  %v2316 = vadd.f32 %v824, %v2315
  %v2317 = vtanh.pop %v2316
  %v2318 = vld [vmem:[%s4] sm:$0x1]
  %v2320 = vlaneseq
  %v2321 = vshrl.u32 %v2320, 7
  %v2322 = vsub.s32 0, %v2321
  %v2323 = vrot.slane %v2318, %v2322
  %v2325 = vmul.f32 %v2317, %v2323
  %vm2326 = vcmask 261120
  %v2327 = vsel %vm2326, %v2325, 0.0
  %2328 = vadd.xlane.f32.xlu0 %v2327
  %v2329 = vpop.xlane.xlu0 %2328
  %v2330 = vld [vmem:[#allocation2] sm:$0x1]
  %v2332 = vlaneseq
  %v2333 = vshrl.u32 %v2332, 7
  %v2334 = vsub.s32 0, %v2333
  %v2335 = vrot.slane %v2330, %v2334
  %v2337 = vadd.f32 %v2329, %v2335
  %vm2338 = vcmask 1024
  %2339 = vst.msk [vmem:[%s6] sm:$0x3] %vm2338, %v2337
  // Predicated region
  $region26: #{rnn_forward_prepared.1} parent=0 // pred_check
    _
  $region27: #{rnn_forward_prepared.1} parent=0 // pred_check_branch
    %2341 = sbr.rel (0) target = $region29
  $region28: #{rnn_forward_prepared.1} parent=0 // pred_region
    _
  $region29: #{rnn_forward_prepared.1} parent=0 // pred_fallthru
    _
  // Predicated region
  $region30: #{rnn_forward_prepared.1} parent=0 // pred_check
    _
  $region31: #{rnn_forward_prepared.1} parent=0 // pred_check_branch
    %2343 = sbr.rel (0) target = $region33
  $region32: #{rnn_forward_prepared.1} parent=0 // pred_region
    _
  $region33: #{rnn_forward_prepared.1} parent=0 // pred_fallthru
    _

</llo_original>
